<compile_context>
chip_gen: v7x
topology: tpu7x:2x2x1
jax: 0.10.0
libtpu: 0.0.40
codegen_flags: <defaults>
</compile_context>

<pallas_src>
import functools

import jax
import jax.numpy as jnp
from jax.experimental import pallas as pl
from jax.experimental.pallas import tpu as pltpu

_LANE = 128


def _round_up(x, m):
    return ((x + m - 1) // m) * m


def _pad_axis(a, axis, size):
    pad = size - a.shape[axis]
    if pad <= 0:
        return a
    widths = [(0, 0)] * a.ndim
    widths[axis] = (0, pad)
    return jnp.pad(a, widths)


def _apply_act(y, activation):
    if activation == "relu":
        return jnp.maximum(y, 0.0)
    elif activation == "elu":
        return jnp.where(y > 0, y, jnp.expm1(y))
    elif activation == "swish":
        return y * jax.nn.sigmoid(y)
    elif activation == "leaky_relu":
        return jnp.where(y > 0, y, 0.01 * y)
    elif activation == "softplus":
        return jax.nn.softplus(y)
    else:
        raise ValueError(f"unknown activation {activation}")


def skip_dnn_kernel(*refs, activation, use_reshape, n_layers, n_core):
    """One batch tile of the full skip_dnn forward.

    All weights are grid-invariant VMEM blocks (fetched once; Pallas skips the
    re-DMA when the block index does not change across grid steps); only the
    x / out tiles stream per grid step.  Matmuls are bf16 x bf16 -> f32 on the
    MXU; bias / residual / activation math stays in f32.
    """
    it = iter(refs)
    x_ref = next(it)
    w0_in_ref = next(it)
    b0_in_ref = next(it)
    w0_h_ref = next(it)
    b0_h_ref = next(it)
    w0_rs_ref = next(it) if use_reshape else None
    core_w_ref = next(it) if n_core > 0 else None
    core_b_ref = next(it) if n_core > 0 else None
    w_out_ref = next(it)
    b_out_ref = next(it)
    o_ref = next(it)

    f32 = jnp.float32
    bf16 = jnp.bfloat16
    act = functools.partial(_apply_act, activation=activation)

    x = x_ref[...]                                             # (tb, in) bf16

    # ---- block 0 (input skip block) -------------------------------------
    # Residual matmul first so x's live range ends early and the independent
    # matmul can interleave with the activation work of the main chain.
    if use_reshape:
        residual = jnp.dot(x, w0_rs_ref[...], preferred_element_type=f32)
    else:
        residual = x.astype(f32)

    y = jnp.dot(x, w0_in_ref[...], preferred_element_type=f32) + b0_in_ref[...]
    y = act(y)
    for l in range(n_layers):
        y = act(jnp.dot(y.astype(bf16), w0_h_ref[l], preferred_element_type=f32)
                + b0_h_ref[pl.ds(l, 1), :])
    y = (jnp.dot(y.astype(bf16), w0_h_ref[n_layers], preferred_element_type=f32)
         + b0_h_ref[pl.ds(n_layers, 1), :])
    y = act(y + residual)

    # ---- core skip blocks (identity residual, in == width) --------------
    stride = n_layers + 2
    for b in range(n_core):
        base = b * stride
        r = y
        z = act(jnp.dot(y.astype(bf16), core_w_ref[base],
                        preferred_element_type=f32)
                + core_b_ref[pl.ds(base, 1), :])
        for l in range(n_layers):
            z = act(jnp.dot(z.astype(bf16), core_w_ref[base + 1 + l],
                            preferred_element_type=f32)
                    + core_b_ref[pl.ds(base + 1 + l, 1), :])
        z = (jnp.dot(z.astype(bf16), core_w_ref[base + 1 + n_layers],
                     preferred_element_type=f32)
             + core_b_ref[pl.ds(base + 1 + n_layers, 1), :])
        y = act(z + r)

    # ---- output head: Linear(width, 1) as a lane reduction --------------
    out = jnp.sum(y * w_out_ref[...], axis=-1, keepdims=True) + b_out_ref[...]
    o_ref[...] = out.astype(o_ref.dtype)


def skip_dnn_forward(x, params, *, activation="relu", block_b=None):
    """x: (B, input_shape) f32.  Returns (B, 1) f32."""
    B, in_dim = x.shape
    blk0 = params["blk0"]
    width = blk0["w_in"].shape[1]
    n_layers = blk0["w_h"].shape[0] - 1
    use_reshape = "w_rs" in blk0
    core_w = params.get("core_w")
    core_b = params.get("core_b")
    n_core = 0 if core_w is None else core_w.shape[0]

    w0_in, b0_in = blk0["w_in"], blk0["b_in"]
    w0_h, b0_h = blk0["w_h"], blk0["b_h"]
    w0_rs = blk0.get("w_rs")
    w_out, b_out = params["w_out"], params["b_out"]

    # ---- pad hidden width to a lane-dense multiple of 128 ----------------
    wp = _round_up(width, _LANE)
    if wp != width:
        w0_in = _pad_axis(w0_in, 1, wp)
        b0_in = _pad_axis(b0_in, 1, wp)
        w0_h = _pad_axis(_pad_axis(w0_h, 1, wp), 2, wp)
        b0_h = _pad_axis(b0_h, 1, wp)
        w_out = _pad_axis(w_out, 1, wp)
        if use_reshape:
            w0_rs = _pad_axis(w0_rs, 1, wp)
        else:
            # identity residual needs matching feature dims: pad x too
            x = _pad_axis(x, 1, wp)
            w0_in = _pad_axis(w0_in, 0, wp)
            in_dim = wp
        if n_core:
            core_w = _pad_axis(_pad_axis(core_w, 2, wp), 3, wp)
            core_b = _pad_axis(core_b, 2, wp)

    # flatten stacked core weights for simple static indexing inside the kernel
    if n_core:
        core_w = core_w.reshape(n_core * (n_layers + 2), wp, wp)
        core_b = core_b.reshape(n_core * (n_layers + 2), wp)

    # ---- bf16 weights / activations, f32 accumulation --------------------
    bf16, f32 = jnp.bfloat16, jnp.float32
    x_in = x.astype(bf16)
    w0_in = w0_in.astype(bf16)
    w0_h = w0_h.astype(bf16)
    if use_reshape:
        w0_rs = w0_rs.astype(bf16)
    if n_core:
        core_w = core_w.astype(bf16)
        core_b = core_b.astype(f32)
    b0_in = b0_in.astype(f32)
    b0_h = b0_h.astype(f32)
    w_out = w_out.astype(f32)
    b_out = b_out.astype(f32)

    # ---- batch tile: multiple of 8, sized for a v7x-safe VMEM budget ------
    weight_bytes = (
        2 * (w0_in.size + w0_h.size
             + (w0_rs.size if use_reshape else 0)
             + (core_w.size if n_core else 0))                  # bf16
        + 4 * (b0_in.size + b0_h.size
               + (core_b.size if n_core else 0)
               + w_out.size + b_out.size))                      # f32
    resident_bytes = 2 * weight_bytes                           # 2 pipeline buffers
    per_row_bytes = 2 * 2 * in_dim + 2 * 4                      # x + out, 2 bufs each
    per_row_bytes += 8 * 4 * wp                                 # f32 temporaries headroom

    budget = 40 << 20                                           # < v7x 64 MiB physical VMEM
    tb = 256 if block_b is None else int(block_b)
    while tb > 8 and resident_bytes + tb * per_row_bytes > budget:
        tb //= 2
    tb = min(tb, _round_up(B, 8))
    tb = max(8, (tb // 8) * 8)
    grid = (pl.cdiv(B, tb),)

    vmem_limit = int(min(max(resident_bytes + tb * per_row_bytes + (4 << 20),
                             32 << 20), 56 << 20))

    # ---- specs / args (w_rs and core weights only when actually used) ----
    in_specs = [
        pl.BlockSpec((tb, in_dim), lambda i: (i, 0)),               # x (streamed)
        pl.BlockSpec((in_dim, wp), lambda i: (0, 0)),               # w0_in (resident)
        pl.BlockSpec((1, wp), lambda i: (0, 0)),                    # b0_in
        pl.BlockSpec((n_layers + 1, wp, wp), lambda i: (0, 0, 0)),  # w0_h
        pl.BlockSpec((n_layers + 1, wp), lambda i: (0, 0)),         # b0_h
    ]
    args = [x_in, w0_in, b0_in, w0_h, b0_h]
    if use_reshape:
        in_specs.append(pl.BlockSpec((in_dim, wp), lambda i: (0, 0)))
        args.append(w0_rs)
    if n_core:
        in_specs += [
            pl.BlockSpec((n_core * (n_layers + 2), wp, wp), lambda i: (0, 0, 0)),
            pl.BlockSpec((n_core * (n_layers + 2), wp), lambda i: (0, 0)),
        ]
        args += [core_w, core_b]
    in_specs += [
        pl.BlockSpec((1, wp), lambda i: (0, 0)),                    # w_out (row vector)
        pl.BlockSpec((1, 1), lambda i: (0, 0)),                     # b_out
    ]
    args += [w_out, b_out]

    # ---- advisory cost estimate ------------------------------------------
    mm_terms = (in_dim * wp
                + (in_dim * wp if use_reshape else 0)
                + (n_layers + 1) * wp * wp
                + n_core * (n_layers + 2) * wp * wp
                + wp)
    n_act = (n_layers + 2) * (n_core + 1)
    transcendentals = 0 if activation in ("relu", "leaky_relu") else B * wp * n_act
    cost = pl.CostEstimate(
        flops=2 * B * mm_terms,
        transcendentals=int(transcendentals),
        bytes_accessed=int(x_in.size * 2 + weight_bytes + B * 4),
    )

    kernel = functools.partial(
        skip_dnn_kernel,
        activation=activation,
        use_reshape=use_reshape,
        n_layers=n_layers,
        n_core=n_core,
    )

    return pl.pallas_call(
        kernel,
        out_shape=jax.ShapeDtypeStruct((B, 1), jnp.float32),
        grid_spec=pltpu.PrefetchScalarGridSpec(
            num_scalar_prefetch=0,
            grid=grid,
            in_specs=in_specs,
            out_specs=pl.BlockSpec((tb, 1), lambda i: (i, 0)),
        ),
        compiler_params=pltpu.CompilerParams(
            dimension_semantics=("parallel",),
            vmem_limit_bytes=vmem_limit,
        ),
        cost_estimate=cost,
    )(*args)


def init_skip_dnn_params(key, input_shape, width, depth, n_layers=1):
    """torch.nn.Linear-style init: U(+-1/sqrt(fan_in)) for weights and biases.
    Weights stored pre-transposed as (in_features, out_features); the output
    head weight is stored as a (1, width) row (used as a lane reduction)."""
    n_core = depth - 1
    n_keys = (2 + 2 * (n_layers + 1) + (1 if input_shape != width else 0)
              + 2 * n_core * (n_layers + 2) + 2)
    keys = iter(jax.random.split(key, n_keys))

    def unif(shape, fan_in):
        bound = 1.0 / float(fan_in) ** 0.5
        return jax.random.uniform(next(keys), shape, jnp.float32, -bound, bound)

    blk0 = {
        "w_in": unif((input_shape, width), input_shape),
        "b_in": unif((1, width), input_shape),
        "w_h": jnp.stack([unif((width, width), width) for _ in range(n_layers + 1)]),
        "b_h": jnp.stack([unif((width,), width) for _ in range(n_layers + 1)]),
    }
    if input_shape != width:
        blk0["w_rs"] = unif((input_shape, width), input_shape)

    params = {"blk0": blk0, "core_w": None, "core_b": None}
    if n_core > 0:
        params["core_w"] = jnp.stack(
            [jnp.stack([unif((width, width), width) for _ in range(n_layers + 2)])
             for _ in range(n_core)])
        params["core_b"] = jnp.stack(
            [jnp.stack([unif((width,), width) for _ in range(n_layers + 2)])
             for _ in range(n_core)])
    params["w_out"] = unif((1, width), width)
    params["b_out"] = unif((1, 1), width)
    return params


def skip_dnn_ref(x, params, activation="relu"):
    """Pure-JAX reference using the same bf16-weight / f32-accumulation recipe."""
    bf16, f32 = jnp.bfloat16, jnp.float32
    act = lambda v: _apply_act(v, activation)

    def mm(a, w):
        return jnp.dot(a.astype(bf16), w.astype(bf16), preferred_element_type=f32)

    blk0 = params["blk0"]
    n_layers = blk0["w_h"].shape[0] - 1
    if "w_rs" in blk0:
        residual = mm(x, blk0["w_rs"])
    else:
        residual = x.astype(bf16).astype(f32)
    y = act(mm(x, blk0["w_in"]) + blk0["b_in"])
    for l in range(n_layers):
        y = act(mm(y, blk0["w_h"][l]) + blk0["b_h"][l])
    y = mm(y, blk0["w_h"][n_layers]) + blk0["b_h"][n_layers]
    y = act(y + residual)

    if params.get("core_w") is not None:
        cw, cb = params["core_w"], params["core_b"]
        for b in range(cw.shape[0]):
            r = y
            z = act(mm(y, cw[b, 0]) + cb[b, 0])
            for l in range(n_layers):
                z = act(mm(z, cw[b, 1 + l]) + cb[b, 1 + l])
            z = mm(z, cw[b, 1 + n_layers]) + cb[b, 1 + n_layers]
            y = act(z + r)

    return jnp.sum(y * params["w_out"], axis=-1, keepdims=True) + params["b_out"]


if __name__ == "__main__":
    key = jax.random.PRNGKey(0)
    k_x, k_p = jax.random.split(key)

    # skip_dnn config: lane-dense width (multiple of 128), depth=3 -> 2 core blocks.
    config = {"input_shape": 16, "width": 128, "depth": 3, "activation": "relu"}
    batch = 1024   # with tb=256 -> 4 pipelined grid steps (shards across v7x's 2 TCs)

    x = jax.random.normal(k_x, (batch, config["input_shape"]), jnp.float32)
    params = init_skip_dnn_params(k_p, config["input_shape"], config["width"],
                                  config["depth"], n_layers=1)

    out = skip_dnn_forward(x, params, activation=config["activation"])
    out = jax.block_until_ready(out)

    ref = skip_dnn_ref(x, params, activation=config["activation"])
    assert out.shape == (batch, 1)
    assert bool(jnp.all(jnp.isfinite(out)))
    max_err = float(jnp.max(jnp.abs(out - ref)))
    assert jnp.allclose(out, ref, atol=2e-3, rtol=2e-3), f"mismatch vs reference: {max_err}"

    print("KERNEL_OK")
</pallas_src>

<mosaic_0001>
module attributes {stable_mosaic.version = 11 : i64} {
  func.func @skip_dnn_kernel(%arg0: i32, %arg1: memref<256x16xbf16, #tpu.memory_space<vmem>>, %arg2: memref<16x128xbf16, #tpu.memory_space<vmem>>, %arg3: memref<1x128xf32, #tpu.memory_space<vmem>>, %arg4: memref<2x128x128xbf16, #tpu.memory_space<vmem>>, %arg5: memref<2x128xf32, #tpu.memory_space<vmem>>, %arg6: memref<16x128xbf16, #tpu.memory_space<vmem>>, %arg7: memref<6x128x128xbf16, #tpu.memory_space<vmem>>, %arg8: memref<6x128xf32, #tpu.memory_space<vmem>>, %arg9: memref<1x128xf32, #tpu.memory_space<vmem>>, %arg10: memref<1x1xf32, #tpu.memory_space<vmem>>, %arg11: memref<256x1xf32, #tpu.memory_space<vmem>>) attributes {dimension_semantics = [#tpu.dimension_semantics<parallel>], iteration_bounds = array<i64: 4>, scalar_prefetch = 0 : i64, scratch_operands = 0 : i64, tpu.core_type = #tpu.core_type<tc>, window_params = [{transform_indices = @transform_0, window_bounds = array<i64: 256, 16>}, {pipeline_mode = #tpu.pipeline_mode<synchronous>, transform_indices = @transform_1, window_bounds = array<i64: 16, 128>}, {pipeline_mode = #tpu.pipeline_mode<synchronous>, transform_indices = @transform_2, window_bounds = array<i64: 1, 128>}, {pipeline_mode = #tpu.pipeline_mode<synchronous>, transform_indices = @transform_3, window_bounds = array<i64: 2, 128, 128>}, {pipeline_mode = #tpu.pipeline_mode<synchronous>, transform_indices = @transform_4, window_bounds = array<i64: 2, 128>}, {pipeline_mode = #tpu.pipeline_mode<synchronous>, transform_indices = @transform_5, window_bounds = array<i64: 16, 128>}, {pipeline_mode = #tpu.pipeline_mode<synchronous>, transform_indices = @transform_6, window_bounds = array<i64: 6, 128, 128>}, {pipeline_mode = #tpu.pipeline_mode<synchronous>, transform_indices = @transform_7, window_bounds = array<i64: 6, 128>}, {pipeline_mode = #tpu.pipeline_mode<synchronous>, transform_indices = @transform_8, window_bounds = array<i64: 1, 128>}, {pipeline_mode = #tpu.pipeline_mode<synchronous>, transform_indices = @transform_9, window_bounds = array<i64: 1, 1>}, {transform_indices = @transform_10, window_bounds = array<i64: 256, 1>}]} {
    %c0 = arith.constant 0 : index
    %c0_0 = arith.constant 0 : index
    %0 = vector.load %arg1[%c0, %c0_0] : memref<256x16xbf16, #tpu.memory_space<vmem>>, vector<256x16xbf16>
    %c0_1 = arith.constant 0 : index
    %c0_2 = arith.constant 0 : index
    %1 = vector.load %arg6[%c0_1, %c0_2] : memref<16x128xbf16, #tpu.memory_space<vmem>>, vector<16x128xbf16>
    %cst = arith.constant dense<0.000000e+00> : vector<256x128xf32>
    %2 = tpu.matmul %0, %1, %cst {dimension_numbers = #tpu.dot_dimension_numbers<[1], [0], [0], [1], [0, 0, 1, 1], [], []>} : vector<256x16xbf16>, vector<16x128xbf16>, vector<256x128xf32> -> vector<256x128xf32>
    %c0_3 = arith.constant 0 : index
    %c0_4 = arith.constant 0 : index
    %3 = vector.load %arg2[%c0_3, %c0_4] : memref<16x128xbf16, #tpu.memory_space<vmem>>, vector<16x128xbf16>
    %cst_5 = arith.constant dense<0.000000e+00> : vector<256x128xf32>
    %4 = tpu.matmul %0, %3, %cst_5 {dimension_numbers = #tpu.dot_dimension_numbers<[1], [0], [0], [1], [0, 0, 1, 1], [], []>} : vector<256x16xbf16>, vector<16x128xbf16>, vector<256x128xf32> -> vector<256x128xf32>
    %c0_6 = arith.constant 0 : index
    %c0_7 = arith.constant 0 : index
    %5 = vector.load %arg3[%c0_6, %c0_7] : memref<1x128xf32, #tpu.memory_space<vmem>>, vector<1x128xf32>
    %6 = vector.broadcast %5 : vector<1x128xf32> to vector<256x128xf32>
    %7 = arith.addf %4, %6 : vector<256x128xf32>
    %cst_8 = arith.constant 0.000000e+00 : f32
    %8 = vector.broadcast %cst_8 : f32 to vector<256x128xf32>
    %9 = arith.maximumf %7, %8 : vector<256x128xf32>
    %10 = arith.truncf %9 : vector<256x128xf32> to vector<256x128xbf16>
    %c0_9 = arith.constant 0 : index
    %c0_10 = arith.constant 0 : index
    %c0_11 = arith.constant 0 : index
    %11 = vector.load %arg4[%c0_9, %c0_10, %c0_11] : memref<2x128x128xbf16, #tpu.memory_space<vmem>>, vector<1x128x128xbf16>
    %12 = vector.shape_cast %11 : vector<1x128x128xbf16> to vector<128x128xbf16>
    %cst_12 = arith.constant dense<0.000000e+00> : vector<256x128xf32>
    %13 = tpu.matmul %10, %12, %cst_12 {dimension_numbers = #tpu.dot_dimension_numbers<[1], [0], [0], [1], [0, 0, 1, 1], [], []>} : vector<256x128xbf16>, vector<128x128xbf16>, vector<256x128xf32> -> vector<256x128xf32>
    %c0_13 = arith.constant 0 : index
    %c0_14 = arith.constant 0 : index
    %14 = vector.load %arg5[%c0_13, %c0_14] : memref<2x128xf32, #tpu.memory_space<vmem>>, vector<1x128xf32>
    %15 = vector.broadcast %14 : vector<1x128xf32> to vector<256x128xf32>
    %16 = arith.addf %13, %15 : vector<256x128xf32>
    %cst_15 = arith.constant 0.000000e+00 : f32
    %17 = vector.broadcast %cst_15 : f32 to vector<256x128xf32>
    %18 = arith.maximumf %16, %17 : vector<256x128xf32>
    %19 = arith.truncf %18 : vector<256x128xf32> to vector<256x128xbf16>
    %c1 = arith.constant 1 : index
    %c0_16 = arith.constant 0 : index
    %c0_17 = arith.constant 0 : index
    %20 = vector.load %arg4[%c1, %c0_16, %c0_17] : memref<2x128x128xbf16, #tpu.memory_space<vmem>>, vector<1x128x128xbf16>
    %21 = vector.shape_cast %20 : vector<1x128x128xbf16> to vector<128x128xbf16>
    %cst_18 = arith.constant dense<0.000000e+00> : vector<256x128xf32>
    %22 = tpu.matmul %19, %21, %cst_18 {dimension_numbers = #tpu.dot_dimension_numbers<[1], [0], [0], [1], [0, 0, 1, 1], [], []>} : vector<256x128xbf16>, vector<128x128xbf16>, vector<256x128xf32> -> vector<256x128xf32>
    %c1_19 = arith.constant 1 : index
    %c0_20 = arith.constant 0 : index
    %23 = vector.load %arg5[%c1_19, %c0_20] : memref<2x128xf32, #tpu.memory_space<vmem>>, vector<1x128xf32>
    %24 = vector.broadcast %23 : vector<1x128xf32> to vector<256x128xf32>
    %25 = arith.addf %22, %24 : vector<256x128xf32>
    %26 = arith.addf %25, %2 : vector<256x128xf32>
    %cst_21 = arith.constant 0.000000e+00 : f32
    %27 = vector.broadcast %cst_21 : f32 to vector<256x128xf32>
    %28 = arith.maximumf %26, %27 : vector<256x128xf32>
    %29 = arith.truncf %28 : vector<256x128xf32> to vector<256x128xbf16>
    %c0_22 = arith.constant 0 : index
    %c0_23 = arith.constant 0 : index
    %c0_24 = arith.constant 0 : index
    %30 = vector.load %arg7[%c0_22, %c0_23, %c0_24] : memref<6x128x128xbf16, #tpu.memory_space<vmem>>, vector<1x128x128xbf16>
    %31 = vector.shape_cast %30 : vector<1x128x128xbf16> to vector<128x128xbf16>
    %cst_25 = arith.constant dense<0.000000e+00> : vector<256x128xf32>
    %32 = tpu.matmul %29, %31, %cst_25 {dimension_numbers = #tpu.dot_dimension_numbers<[1], [0], [0], [1], [0, 0, 1, 1], [], []>} : vector<256x128xbf16>, vector<128x128xbf16>, vector<256x128xf32> -> vector<256x128xf32>
    %c0_26 = arith.constant 0 : index
    %c0_27 = arith.constant 0 : index
    %33 = vector.load %arg8[%c0_26, %c0_27] : memref<6x128xf32, #tpu.memory_space<vmem>>, vector<1x128xf32>
    %34 = vector.broadcast %33 : vector<1x128xf32> to vector<256x128xf32>
    %35 = arith.addf %32, %34 : vector<256x128xf32>
    %cst_28 = arith.constant 0.000000e+00 : f32
    %36 = vector.broadcast %cst_28 : f32 to vector<256x128xf32>
    %37 = arith.maximumf %35, %36 : vector<256x128xf32>
    %38 = arith.truncf %37 : vector<256x128xf32> to vector<256x128xbf16>
    %c1_29 = arith.constant 1 : index
    %c0_30 = arith.constant 0 : index
    %c0_31 = arith.constant 0 : index
    %39 = vector.load %arg7[%c1_29, %c0_30, %c0_31] : memref<6x128x128xbf16, #tpu.memory_space<vmem>>, vector<1x128x128xbf16>
    %40 = vector.shape_cast %39 : vector<1x128x128xbf16> to vector<128x128xbf16>
    %cst_32 = arith.constant dense<0.000000e+00> : vector<256x128xf32>
    %41 = tpu.matmul %38, %40, %cst_32 {dimension_numbers = #tpu.dot_dimension_numbers<[1], [0], [0], [1], [0, 0, 1, 1], [], []>} : vector<256x128xbf16>, vector<128x128xbf16>, vector<256x128xf32> -> vector<256x128xf32>
    %c1_33 = arith.constant 1 : index
    %c0_34 = arith.constant 0 : index
    %42 = vector.load %arg8[%c1_33, %c0_34] : memref<6x128xf32, #tpu.memory_space<vmem>>, vector<1x128xf32>
    %43 = vector.broadcast %42 : vector<1x128xf32> to vector<256x128xf32>
    %44 = arith.addf %41, %43 : vector<256x128xf32>
    %cst_35 = arith.constant 0.000000e+00 : f32
    %45 = vector.broadcast %cst_35 : f32 to vector<256x128xf32>
    %46 = arith.maximumf %44, %45 : vector<256x128xf32>
    %47 = arith.truncf %46 : vector<256x128xf32> to vector<256x128xbf16>
    %c2 = arith.constant 2 : index
    %c0_36 = arith.constant 0 : index
    %c0_37 = arith.constant 0 : index
    %48 = vector.load %arg7[%c2, %c0_36, %c0_37] : memref<6x128x128xbf16, #tpu.memory_space<vmem>>, vector<1x128x128xbf16>
    %49 = vector.shape_cast %48 : vector<1x128x128xbf16> to vector<128x128xbf16>
    %cst_38 = arith.constant dense<0.000000e+00> : vector<256x128xf32>
    %50 = tpu.matmul %47, %49, %cst_38 {dimension_numbers = #tpu.dot_dimension_numbers<[1], [0], [0], [1], [0, 0, 1, 1], [], []>} : vector<256x128xbf16>, vector<128x128xbf16>, vector<256x128xf32> -> vector<256x128xf32>
    %c2_39 = arith.constant 2 : index
    %c0_40 = arith.constant 0 : index
    %51 = vector.load %arg8[%c2_39, %c0_40] : memref<6x128xf32, #tpu.memory_space<vmem>>, vector<1x128xf32>
    %52 = vector.broadcast %51 : vector<1x128xf32> to vector<256x128xf32>
    %53 = arith.addf %50, %52 : vector<256x128xf32>
    %54 = arith.addf %53, %28 : vector<256x128xf32>
    %cst_41 = arith.constant 0.000000e+00 : f32
    %55 = vector.broadcast %cst_41 : f32 to vector<256x128xf32>
    %56 = arith.maximumf %54, %55 : vector<256x128xf32>
    %57 = arith.truncf %56 : vector<256x128xf32> to vector<256x128xbf16>
    %c3 = arith.constant 3 : index
    %c0_42 = arith.constant 0 : index
    %c0_43 = arith.constant 0 : index
    %58 = vector.load %arg7[%c3, %c0_42, %c0_43] : memref<6x128x128xbf16, #tpu.memory_space<vmem>>, vector<1x128x128xbf16>
    %59 = vector.shape_cast %58 : vector<1x128x128xbf16> to vector<128x128xbf16>
    %cst_44 = arith.constant dense<0.000000e+00> : vector<256x128xf32>
    %60 = tpu.matmul %57, %59, %cst_44 {dimension_numbers = #tpu.dot_dimension_numbers<[1], [0], [0], [1], [0, 0, 1, 1], [], []>} : vector<256x128xbf16>, vector<128x128xbf16>, vector<256x128xf32> -> vector<256x128xf32>
    %c3_45 = arith.constant 3 : index
    %c0_46 = arith.constant 0 : index
    %61 = vector.load %arg8[%c3_45, %c0_46] : memref<6x128xf32, #tpu.memory_space<vmem>>, vector<1x128xf32>
    %62 = vector.broadcast %61 : vector<1x128xf32> to vector<256x128xf32>
    %63 = arith.addf %60, %62 : vector<256x128xf32>
    %cst_47 = arith.constant 0.000000e+00 : f32
    %64 = vector.broadcast %cst_47 : f32 to vector<256x128xf32>
    %65 = arith.maximumf %63, %64 : vector<256x128xf32>
    %66 = arith.truncf %65 : vector<256x128xf32> to vector<256x128xbf16>
    %c4 = arith.constant 4 : index
    %c0_48 = arith.constant 0 : index
    %c0_49 = arith.constant 0 : index
    %67 = vector.load %arg7[%c4, %c0_48, %c0_49] : memref<6x128x128xbf16, #tpu.memory_space<vmem>>, vector<1x128x128xbf16>
    %68 = vector.shape_cast %67 : vector<1x128x128xbf16> to vector<128x128xbf16>
    %cst_50 = arith.constant dense<0.000000e+00> : vector<256x128xf32>
    %69 = tpu.matmul %66, %68, %cst_50 {dimension_numbers = #tpu.dot_dimension_numbers<[1], [0], [0], [1], [0, 0, 1, 1], [], []>} : vector<256x128xbf16>, vector<128x128xbf16>, vector<256x128xf32> -> vector<256x128xf32>
    %c4_51 = arith.constant 4 : index
    %c0_52 = arith.constant 0 : index
    %70 = vector.load %arg8[%c4_51, %c0_52] : memref<6x128xf32, #tpu.memory_space<vmem>>, vector<1x128xf32>
    %71 = vector.broadcast %70 : vector<1x128xf32> to vector<256x128xf32>
    %72 = arith.addf %69, %71 : vector<256x128xf32>
    %cst_53 = arith.constant 0.000000e+00 : f32
    %73 = vector.broadcast %cst_53 : f32 to vector<256x128xf32>
    %74 = arith.maximumf %72, %73 : vector<256x128xf32>
    %75 = arith.truncf %74 : vector<256x128xf32> to vector<256x128xbf16>
    %c5 = arith.constant 5 : index
    %c0_54 = arith.constant 0 : index
    %c0_55 = arith.constant 0 : index
    %76 = vector.load %arg7[%c5, %c0_54, %c0_55] : memref<6x128x128xbf16, #tpu.memory_space<vmem>>, vector<1x128x128xbf16>
    %77 = vector.shape_cast %76 : vector<1x128x128xbf16> to vector<128x128xbf16>
    %cst_56 = arith.constant dense<0.000000e+00> : vector<256x128xf32>
    %78 = tpu.matmul %75, %77, %cst_56 {dimension_numbers = #tpu.dot_dimension_numbers<[1], [0], [0], [1], [0, 0, 1, 1], [], []>} : vector<256x128xbf16>, vector<128x128xbf16>, vector<256x128xf32> -> vector<256x128xf32>
    %c5_57 = arith.constant 5 : index
    %c0_58 = arith.constant 0 : index
    %79 = vector.load %arg8[%c5_57, %c0_58] : memref<6x128xf32, #tpu.memory_space<vmem>>, vector<1x128xf32>
    %80 = vector.broadcast %79 : vector<1x128xf32> to vector<256x128xf32>
    %81 = arith.addf %78, %80 : vector<256x128xf32>
    %82 = arith.addf %81, %56 : vector<256x128xf32>
    %cst_59 = arith.constant 0.000000e+00 : f32
    %83 = vector.broadcast %cst_59 : f32 to vector<256x128xf32>
    %84 = arith.maximumf %82, %83 : vector<256x128xf32>
    %c0_60 = arith.constant 0 : index
    %c0_61 = arith.constant 0 : index
    %85 = vector.load %arg9[%c0_60, %c0_61] : memref<1x128xf32, #tpu.memory_space<vmem>>, vector<1x128xf32>
    %86 = vector.broadcast %85 : vector<1x128xf32> to vector<256x128xf32>
    %87 = arith.mulf %84, %86 : vector<256x128xf32>
    %cst_62 = arith.constant dense<0.000000e+00> : vector<256xf32>
    %88 = vector.multi_reduction <add>, %87, %cst_62 [1] : vector<256x128xf32> to vector<256xf32>
    %89 = vector.shape_cast %88 : vector<256xf32> to vector<256x1xf32>
    %c0_63 = arith.constant 0 : index
    %c0_64 = arith.constant 0 : index
    %90 = vector.load %arg10[%c0_63, %c0_64] : memref<1x1xf32, #tpu.memory_space<vmem>>, vector<1x1xf32>
    %91 = vector.broadcast %90 : vector<1x1xf32> to vector<256x1xf32>
    %92 = arith.addf %89, %91 : vector<256x1xf32>
    %c0_65 = arith.constant 0 : index
    %c0_66 = arith.constant 0 : index
    %93 = vector.load %arg11[%c0_65, %c0_66] : memref<256x1xf32, #tpu.memory_space<vmem>>, vector<256x1xf32>
    tpu.vector_store %arg11[%c0_65, %c0_66], %92 {strides = array<i32>} : memref<256x1xf32, #tpu.memory_space<vmem>>, vector<256x1xf32>,
    return
  }
  func.func @transform_0(%arg0: i32) -> (i32, i32) {
    %c0_i32 = arith.constant 0 : i32
    %c0_i32_0 = arith.constant 0 : i32
    return %arg0, %c0_i32 : i32, i32
  }
  func.func @transform_1(%arg0: i32) -> (i32, i32) {
    %c0_i32 = arith.constant 0 : i32
    %c0_i32_0 = arith.constant 0 : i32
    %c0_i32_1 = arith.constant 0 : i32
    return %c0_i32, %c0_i32_0 : i32, i32
  }
  func.func @transform_2(%arg0: i32) -> (i32, i32) {
    %c0_i32 = arith.constant 0 : i32
    %c0_i32_0 = arith.constant 0 : i32
    %c0_i32_1 = arith.constant 0 : i32
    return %c0_i32, %c0_i32_0 : i32, i32
  }
  func.func @transform_3(%arg0: i32) -> (i32, i32, i32) {
    %c0_i32 = arith.constant 0 : i32
    %c0_i32_0 = arith.constant 0 : i32
    %c0_i32_1 = arith.constant 0 : i32
    %c0_i32_2 = arith.constant 0 : i32
    return %c0_i32, %c0_i32_0, %c0_i32_1 : i32, i32, i32
  }
  func.func @transform_4(%arg0: i32) -> (i32, i32) {
    %c0_i32 = arith.constant 0 : i32
    %c0_i32_0 = arith.constant 0 : i32
    %c0_i32_1 = arith.constant 0 : i32
    return %c0_i32, %c0_i32_0 : i32, i32
  }
  func.func @transform_5(%arg0: i32) -> (i32, i32) {
    %c0_i32 = arith.constant 0 : i32
    %c0_i32_0 = arith.constant 0 : i32
    %c0_i32_1 = arith.constant 0 : i32
    return %c0_i32, %c0_i32_0 : i32, i32
  }
  func.func @transform_6(%arg0: i32) -> (i32, i32, i32) {
    %c0_i32 = arith.constant 0 : i32
    %c0_i32_0 = arith.constant 0 : i32
    %c0_i32_1 = arith.constant 0 : i32
    %c0_i32_2 = arith.constant 0 : i32
    return %c0_i32, %c0_i32_0, %c0_i32_1 : i32, i32, i32
  }
  func.func @transform_7(%arg0: i32) -> (i32, i32) {
    %c0_i32 = arith.constant 0 : i32
    %c0_i32_0 = arith.constant 0 : i32
    %c0_i32_1 = arith.constant 0 : i32
    return %c0_i32, %c0_i32_0 : i32, i32
  }
  func.func @transform_8(%arg0: i32) -> (i32, i32) {
    %c0_i32 = arith.constant 0 : i32
    %c0_i32_0 = arith.constant 0 : i32
    %c0_i32_1 = arith.constant 0 : i32
    return %c0_i32, %c0_i32_0 : i32, i32
  }
  func.func @transform_9(%arg0: i32) -> (i32, i32) {
    %c0_i32 = arith.constant 0 : i32
    %c0_i32_0 = arith.constant 0 : i32
    %c0_i32_1 = arith.constant 0 : i32
    return %c0_i32, %c0_i32_0 : i32, i32
  }
  func.func @transform_10(%arg0: i32) -> (i32, i32) {
    %c0_i32 = arith.constant 0 : i32
    %c0_i32_0 = arith.constant 0 : i32
    return %arg0, %c0_i32 : i32, i32
  }
}

</mosaic_0001>

<llo_original>
// kernel: tpu_custom_call.1
$region0: #{tpu_custom_call.1}
  #allocation0 [shape = 'u32[]', space=smem, size = 0x4, offset = 0x4, fixed_abs, tag = 'smem constant byte address 0x4 - core index']
  #allocation1 [shape = 'u32[144,128]{1,0:T(1,128)}', space=vmem, size = 0x12000, scoped, tag = 'internal scratch']
  #allocation2 [shape = 'f32[1,1]{1,0:T(1,128)S(1)}', space=vmem, size = 0x200, scoped, tag = 'scoped memory for tpu_custom_call.1']
  %s0 = inlined_call_operand.vmem [shape: bf16[1024,16], index: 0, kind: input, shape index: {}]
  %s1 = inlined_call_operand.vmem [shape: bf16[16,128], index: 1, kind: input, shape index: {}]
  %s2 = inlined_call_operand.vmem [shape: f32[1,128], index: 2, kind: input, shape index: {}]
  %s3 = inlined_call_operand.vmem [shape: bf16[2,128,128], index: 3, kind: input, shape index: {}]
  %s4 = inlined_call_operand.vmem [shape: f32[2,128], index: 4, kind: input, shape index: {}]
  %s5 = inlined_call_operand.vmem [shape: bf16[16,128], index: 5, kind: input, shape index: {}]
  %s6 = inlined_call_operand.vmem [shape: bf16[6,128,128], index: 6, kind: input, shape index: {}]
  %s7 = inlined_call_operand.vmem [shape: f32[6,128], index: 7, kind: input, shape index: {}]
  %s8 = inlined_call_operand.vmem [shape: f32[1,128], index: 8, kind: input, shape index: {}]
  %s9 = inlined_call_operand.<no memory space> [shape: f32[1,1], index: 9, kind: input, shape index: {}]
  %s10 = inlined_call_operand.vmem [shape: f32[1024,1], index: 10, kind: output, shape index: {}]
  %s11 = sld [smem:[#allocation0]]
  $region73: #{tpu_custom_call.1} parent=0
    _
  %s13 = ssub.s32 1, %s11
  %s14 = scalar_select 0, %s13, %s11
  %v15 = vstv %s9
  %16 = vst [vmem:[#allocation2] sm:$0x1] %v15
  loop: start=0, step=1, limit=6
  $region2: #{tpu_custom_call.1} parent=0 // loop_pre_header
    _
  $region3: #{tpu_custom_call.1} parent=0 // loop_header
    %s18 = sphi 0, %s22
    %p19 = scmp.ge.s32.totalorder %s18, 6
    %s28 = sphi 0, %s30
    %s31 = sphi 0, %s28
    %s32 = sphi 0, %s31
    %s48 = sphi 0, %s32
    %s52 = sphi 0, %s52
    %s54 = sphi 0, %s52
    %s55 = sphi 0, %s54
    %s69 = sphi 0, %s55
    %s73 = sphi 0, %s73
    %s75 = sphi 0, %s73
    %s76 = sphi 0, %s75
    %s90 = sphi 0, %s76
    %s94 = sphi 0, %s94
    %s96 = sphi 0, %s94
    %s97 = sphi 0, %s96
    %s111 = sphi 0, %s97
    %s115 = sphi 0, %s115
    %s117 = sphi 0, %s115
    %s118 = sphi 0, %s117
    %s132 = sphi 0, %s118
    %s136 = sphi 0, %s136
    %s138 = sphi 0, %s136
    %s139 = sphi 0, %s138
    %s153 = sphi 0, %s139
    %s157 = sphi 0, %s157
    %s159 = sphi 0, %s157
    %s160 = sphi 0, %s159
    %s174 = sphi 0, %s160
    %s178 = sphi 0, %s178
    %s180 = sphi 0, %s178
    %s181 = sphi 0, %s180
    %s195 = sphi 0, %s181
    %s199 = sphi 0, %s199
    %s201 = sphi 0, %s199
    %s202 = sphi 0, %s201
    %s216 = sphi 0, %s202
    %s220 = sphi 0, %s220
    %s222 = sphi 0, %s220
    %s223 = sphi 0, %s222
    %s237 = sphi 0, %s223
    %s243 = sphi 0, %s245
    %s246 = sphi 0, %s243
    %s247 = sphi 0, %s246
    %s263 = sphi 0, %s247
  $region4: #{tpu_custom_call.1} parent=0 // loop_header_branch
    %21 = sbr.rel (%p19) target = $region8
  $region5: #{tpu_custom_call.1} parent=0 // loop_body
    %s23 = ssub.s32 %s18, 1
    %s24 = ssub.s32 %s18, 2
    %s25 = sadd.s32 %s18, 1
    %s26 = ssub.s32 %s18, %s25
    %p27 = scmp.eq.s32.totalorder %s26, 0
    %s29 = sadd.s32 %s28, 1
    %s30 = scalar_select %p27, %s28, %s29
    %p33 = pneg %p27
    %p34 = scmp.eq.s32.totalorder %s18, 3
    %p35 = por %p33, %p34
    %p36 = scmp.ne.s32.totalorder %s28, %s31
    %p37 = scmp.eq.s32.totalorder %s18, 0
    %p38 = por %p36, %p37
    %p39 = scmp.ne.s32.totalorder %s28, %s31
    %p40 = scmp.eq.s32.totalorder %s23, 3
    %p41 = por %p39, %p40
    %p42 = scmp.ne.s32.totalorder %s31, %s32
    %p43 = scmp.eq.s32.totalorder %s23, 0
    %p44 = por %p42, %p43
    %p45 = scmp.ne.s32.totalorder %s31, %s32
    %p46 = scmp.eq.s32.totalorder %s24, 3
    %p47 = por %p45, %p46
    %p49 = scmp.ne.s32.totalorder %s32, %s48
    %p50 = scmp.eq.s32.totalorder %s24, 0
    %p51 = por %p49, %p50
    %s53 = sadd.s32 %s52, 1
    %p56 = scmp.eq.s32.totalorder %s18, 3
    %p57 = scmp.ne.s32.totalorder %s52, %s54
    %p58 = scmp.eq.s32.totalorder %s18, 0
    %p59 = por %p57, %p58
    %p60 = scmp.ne.s32.totalorder %s52, %s54
    %p61 = scmp.eq.s32.totalorder %s23, 3
    %p62 = por %p60, %p61
    %p63 = scmp.ne.s32.totalorder %s54, %s55
    %p64 = scmp.eq.s32.totalorder %s23, 0
    %p65 = por %p63, %p64
    %p66 = scmp.ne.s32.totalorder %s54, %s55
    %p67 = scmp.eq.s32.totalorder %s24, 3
    %p68 = por %p66, %p67
    %p70 = scmp.ne.s32.totalorder %s55, %s69
    %p71 = scmp.eq.s32.totalorder %s24, 0
    %p72 = por %p70, %p71
    %s74 = sadd.s32 %s73, 1
    %p77 = scmp.eq.s32.totalorder %s18, 3
    %p78 = scmp.ne.s32.totalorder %s73, %s75
    %p79 = scmp.eq.s32.totalorder %s18, 0
    %p80 = por %p78, %p79
    %p81 = scmp.ne.s32.totalorder %s73, %s75
    %p82 = scmp.eq.s32.totalorder %s23, 3
    %p83 = por %p81, %p82
    %p84 = scmp.ne.s32.totalorder %s75, %s76
    %p85 = scmp.eq.s32.totalorder %s23, 0
    %p86 = por %p84, %p85
    %p87 = scmp.ne.s32.totalorder %s75, %s76
    %p88 = scmp.eq.s32.totalorder %s24, 3
    %p89 = por %p87, %p88
    %p91 = scmp.ne.s32.totalorder %s76, %s90
    %p92 = scmp.eq.s32.totalorder %s24, 0
    %p93 = por %p91, %p92
    %s95 = sadd.s32 %s94, 1
    %p98 = scmp.eq.s32.totalorder %s18, 3
    %p99 = scmp.ne.s32.totalorder %s94, %s96
    %p100 = scmp.eq.s32.totalorder %s18, 0
    %p101 = por %p99, %p100
    %p102 = scmp.ne.s32.totalorder %s94, %s96
    %p103 = scmp.eq.s32.totalorder %s23, 3
    %p104 = por %p102, %p103
    %p105 = scmp.ne.s32.totalorder %s96, %s97
    %p106 = scmp.eq.s32.totalorder %s23, 0
    %p107 = por %p105, %p106
    %p108 = scmp.ne.s32.totalorder %s96, %s97
    %p109 = scmp.eq.s32.totalorder %s24, 3
    %p110 = por %p108, %p109
    %p112 = scmp.ne.s32.totalorder %s97, %s111
    %p113 = scmp.eq.s32.totalorder %s24, 0
    %p114 = por %p112, %p113
    %s116 = sadd.s32 %s115, 1
    %p119 = scmp.eq.s32.totalorder %s18, 3
    %p120 = scmp.ne.s32.totalorder %s115, %s117
    %p121 = scmp.eq.s32.totalorder %s18, 0
    %p122 = por %p120, %p121
    %p123 = scmp.ne.s32.totalorder %s115, %s117
    %p124 = scmp.eq.s32.totalorder %s23, 3
    %p125 = por %p123, %p124
    %p126 = scmp.ne.s32.totalorder %s117, %s118
    %p127 = scmp.eq.s32.totalorder %s23, 0
    %p128 = por %p126, %p127
    %p129 = scmp.ne.s32.totalorder %s117, %s118
    %p130 = scmp.eq.s32.totalorder %s24, 3
    %p131 = por %p129, %p130
    %p133 = scmp.ne.s32.totalorder %s118, %s132
    %p134 = scmp.eq.s32.totalorder %s24, 0
    %p135 = por %p133, %p134
    %s137 = sadd.s32 %s136, 1
    %p140 = scmp.eq.s32.totalorder %s18, 3
    %p141 = scmp.ne.s32.totalorder %s136, %s138
    %p142 = scmp.eq.s32.totalorder %s18, 0
    %p143 = por %p141, %p142
    %p144 = scmp.ne.s32.totalorder %s136, %s138
    %p145 = scmp.eq.s32.totalorder %s23, 3
    %p146 = por %p144, %p145
    %p147 = scmp.ne.s32.totalorder %s138, %s139
    %p148 = scmp.eq.s32.totalorder %s23, 0
    %p149 = por %p147, %p148
    %p150 = scmp.ne.s32.totalorder %s138, %s139
    %p151 = scmp.eq.s32.totalorder %s24, 3
    %p152 = por %p150, %p151
    %p154 = scmp.ne.s32.totalorder %s139, %s153
    %p155 = scmp.eq.s32.totalorder %s24, 0
    %p156 = por %p154, %p155
    %s158 = sadd.s32 %s157, 1
    %p161 = scmp.eq.s32.totalorder %s18, 3
    %p162 = scmp.ne.s32.totalorder %s157, %s159
    %p163 = scmp.eq.s32.totalorder %s18, 0
    %p164 = por %p162, %p163
    %p165 = scmp.ne.s32.totalorder %s157, %s159
    %p166 = scmp.eq.s32.totalorder %s23, 3
    %p167 = por %p165, %p166
    %p168 = scmp.ne.s32.totalorder %s159, %s160
    %p169 = scmp.eq.s32.totalorder %s23, 0
    %p170 = por %p168, %p169
    %p171 = scmp.ne.s32.totalorder %s159, %s160
    %p172 = scmp.eq.s32.totalorder %s24, 3
    %p173 = por %p171, %p172
    %p175 = scmp.ne.s32.totalorder %s160, %s174
    %p176 = scmp.eq.s32.totalorder %s24, 0
    %p177 = por %p175, %p176
    %s179 = sadd.s32 %s178, 1
    %p182 = scmp.eq.s32.totalorder %s18, 3
    %p183 = scmp.ne.s32.totalorder %s178, %s180
    %p184 = scmp.eq.s32.totalorder %s18, 0
    %p185 = por %p183, %p184
    %p186 = scmp.ne.s32.totalorder %s178, %s180
    %p187 = scmp.eq.s32.totalorder %s23, 3
    %p188 = por %p186, %p187
    %p189 = scmp.ne.s32.totalorder %s180, %s181
    %p190 = scmp.eq.s32.totalorder %s23, 0
    %p191 = por %p189, %p190
    %p192 = scmp.ne.s32.totalorder %s180, %s181
    %p193 = scmp.eq.s32.totalorder %s24, 3
    %p194 = por %p192, %p193
    %p196 = scmp.ne.s32.totalorder %s181, %s195
    %p197 = scmp.eq.s32.totalorder %s24, 0
    %p198 = por %p196, %p197
    %s200 = sadd.s32 %s199, 1
    %p203 = scmp.eq.s32.totalorder %s18, 3
    %p204 = scmp.ne.s32.totalorder %s199, %s201
    %p205 = scmp.eq.s32.totalorder %s18, 0
    %p206 = por %p204, %p205
    %p207 = scmp.ne.s32.totalorder %s199, %s201
    %p208 = scmp.eq.s32.totalorder %s23, 3
    %p209 = por %p207, %p208
    %p210 = scmp.ne.s32.totalorder %s201, %s202
    %p211 = scmp.eq.s32.totalorder %s23, 0
    %p212 = por %p210, %p211
    %p213 = scmp.ne.s32.totalorder %s201, %s202
    %p214 = scmp.eq.s32.totalorder %s24, 3
    %p215 = por %p213, %p214
    %p217 = scmp.ne.s32.totalorder %s202, %s216
    %p218 = scmp.eq.s32.totalorder %s24, 0
    %p219 = por %p217, %p218
    %s221 = sadd.s32 %s220, 1
    %p224 = scmp.eq.s32.totalorder %s18, 3
    %p225 = scmp.ne.s32.totalorder %s220, %s222
    %p226 = scmp.eq.s32.totalorder %s18, 0
    %p227 = por %p225, %p226
    %p228 = scmp.ne.s32.totalorder %s220, %s222
    %p229 = scmp.eq.s32.totalorder %s23, 3
    %p230 = por %p228, %p229
    %p231 = scmp.ne.s32.totalorder %s222, %s223
    %p232 = scmp.eq.s32.totalorder %s23, 0
    %p233 = por %p231, %p232
    %p234 = scmp.ne.s32.totalorder %s222, %s223
    %p235 = scmp.eq.s32.totalorder %s24, 3
    %p236 = por %p234, %p235
    %p238 = scmp.ne.s32.totalorder %s223, %s237
    %p239 = scmp.eq.s32.totalorder %s24, 0
    %p240 = por %p238, %p239
    %s241 = ssub.s32 %s18, %s25
    %p242 = scmp.eq.s32.totalorder %s241, 0
    %s244 = sadd.s32 %s243, 1
    %s245 = scalar_select %p242, %s243, %s244
    %p248 = pneg %p242
    %p249 = scmp.eq.s32.totalorder %s18, 3
    %p250 = por %p248, %p249
    %p251 = scmp.ne.s32.totalorder %s243, %s246
    %p252 = scmp.eq.s32.totalorder %s18, 0
    %p253 = por %p251, %p252
    %p254 = scmp.ne.s32.totalorder %s243, %s246
    %p255 = scmp.eq.s32.totalorder %s23, 3
    %p256 = por %p254, %p255
    %p257 = scmp.ne.s32.totalorder %s246, %s247
    %p258 = scmp.eq.s32.totalorder %s23, 0
    %p259 = por %p257, %p258
    %p260 = scmp.ne.s32.totalorder %s246, %s247
    %p261 = scmp.eq.s32.totalorder %s24, 3
    %p262 = por %p260, %p261
    %p264 = scmp.ne.s32.totalorder %s247, %s263
    %p265 = scmp.eq.s32.totalorder %s24, 0
    %p266 = por %p264, %p265
    %p267 = scmp.le.s32.totalorder 1, %s18
    %p268 = scmp.lt.s32.totalorder %s18, 5
    %p269 = pnand %p267, %p268
    %p270 = pneg %p269
    // Predicated region
    $region9: #{tpu_custom_call.1} parent=5 // pred_check
      _
    $region10: #{tpu_custom_call.1} parent=5 // pred_check_branch
      %272 = sbr.rel (%p269) target = $region12
    $region11: #{tpu_custom_call.1} parent=5 // pred_region
      %s273 = ssub.s32 %s18, 1
      // Predicated region
      $region13: #{tpu_custom_call.1} parent=11 // pred_check
        %p274 = pneg %p65
      $region14: #{tpu_custom_call.1} parent=11 // pred_check_branch
        %276 = sbr.rel (%p274) target = $region16
      $region15: #{tpu_custom_call.1} parent=11 // pred_region
        _
      $region16: #{tpu_custom_call.1} parent=11 // pred_fallthru
        _
      // Predicated region
      $region17: #{tpu_custom_call.1} parent=11 // pred_check
        %p277 = pneg %p86
      $region18: #{tpu_custom_call.1} parent=11 // pred_check_branch
        %279 = sbr.rel (%p277) target = $region20
      $region19: #{tpu_custom_call.1} parent=11 // pred_region
        _
      $region20: #{tpu_custom_call.1} parent=11 // pred_fallthru
        _
      // Predicated region
      $region21: #{tpu_custom_call.1} parent=11 // pred_check
        %p280 = pneg %p107
      $region22: #{tpu_custom_call.1} parent=11 // pred_check_branch
        %282 = sbr.rel (%p280) target = $region24
      $region23: #{tpu_custom_call.1} parent=11 // pred_region
        _
      $region24: #{tpu_custom_call.1} parent=11 // pred_fallthru
        _
      // Predicated region
      $region25: #{tpu_custom_call.1} parent=11 // pred_check
        %p283 = pneg %p128
      $region26: #{tpu_custom_call.1} parent=11 // pred_check_branch
        %285 = sbr.rel (%p283) target = $region28
      $region27: #{tpu_custom_call.1} parent=11 // pred_region
        _
      $region28: #{tpu_custom_call.1} parent=11 // pred_fallthru
        _
      // Predicated region
      $region29: #{tpu_custom_call.1} parent=11 // pred_check
        %p286 = pneg %p149
      $region30: #{tpu_custom_call.1} parent=11 // pred_check_branch
        %288 = sbr.rel (%p286) target = $region32
      $region31: #{tpu_custom_call.1} parent=11 // pred_region
        _
      $region32: #{tpu_custom_call.1} parent=11 // pred_fallthru
        _
      // Predicated region
      $region33: #{tpu_custom_call.1} parent=11 // pred_check
        %p289 = pneg %p170
      $region34: #{tpu_custom_call.1} parent=11 // pred_check_branch
        %291 = sbr.rel (%p289) target = $region36
      $region35: #{tpu_custom_call.1} parent=11 // pred_region
        _
      $region36: #{tpu_custom_call.1} parent=11 // pred_fallthru
        _
      // Predicated region
      $region37: #{tpu_custom_call.1} parent=11 // pred_check
        %p292 = pneg %p191
      $region38: #{tpu_custom_call.1} parent=11 // pred_check_branch
        %294 = sbr.rel (%p292) target = $region40
      $region39: #{tpu_custom_call.1} parent=11 // pred_region
        _
      $region40: #{tpu_custom_call.1} parent=11 // pred_fallthru
        _
      // Predicated region
      $region41: #{tpu_custom_call.1} parent=11 // pred_check
        %p295 = pneg %p212
      $region42: #{tpu_custom_call.1} parent=11 // pred_check_branch
        %297 = sbr.rel (%p295) target = $region44
      $region43: #{tpu_custom_call.1} parent=11 // pred_region
        _
      $region44: #{tpu_custom_call.1} parent=11 // pred_fallthru
        _
      // Predicated region
      $region45: #{tpu_custom_call.1} parent=11 // pred_check
        %p298 = pneg %p233
      $region46: #{tpu_custom_call.1} parent=11 // pred_check_branch
        %300 = sbr.rel (%p298) target = $region48
      $region47: #{tpu_custom_call.1} parent=11 // pred_region
        _
      $region48: #{tpu_custom_call.1} parent=11 // pred_fallthru
        _
    $region12: #{tpu_custom_call.1} parent=5 // pred_fallthru
      _
    %p301 = scmp.lt.s32.totalorder %s18, 4
    // Predicated region
    $region49: #{tpu_custom_call.1} parent=5 // pred_check
      %p302 = pneg %p301
    $region50: #{tpu_custom_call.1} parent=5 // pred_check_branch
      %304 = sbr.rel (%p302) target = $region52
    $region51: #{tpu_custom_call.1} parent=5 // pred_region
      // Predicated region
      $region53: #{tpu_custom_call.1} parent=51 // pred_check
        %p305 = pneg %p38
      $region54: #{tpu_custom_call.1} parent=51 // pred_check_branch
        %307 = sbr.rel (%p305) target = $region56
      $region55: #{tpu_custom_call.1} parent=51 // pred_region
        %s308 = smul.u32 32, %s18
        %p309 = scmp.lt.s32.totalorder %s308, 127
        %s310 = scalar_select %p309, %s308, 127
        %s311 = smul.addr %s310, 4
        %s312 = scalar_lea.vmem %s0, %s311
        %s313 = smul.u32 32, %s18
      $region56: #{tpu_custom_call.1} parent=51 // pred_fallthru
        _
    $region52: #{tpu_custom_call.1} parent=5 // pred_fallthru
      _
    %p314 = scmp.le.s32.totalorder 1, %s18
    %p315 = scmp.lt.s32.totalorder %s18, 5
    %p316 = pnand %p314, %p315
    %p317 = pneg %p316
    // Predicated region
    $region57: #{tpu_custom_call.1} parent=5 // pred_check
      _
    $region58: #{tpu_custom_call.1} parent=5 // pred_check_branch
      %319 = sbr.rel (%p316) target = $region60
    $region59: #{tpu_custom_call.1} parent=5 // pred_region
      %s320 = ssub.s32 %s18, 1
      %s321 = smul.u32 32, %s23
      %p322 = scmp.lt.s32.totalorder %s321, 127
      %s323 = scalar_select %p322, %s321, 127
      %s324 = smul.addr %s323, 4
      %s325 = scalar_lea.vmem %s0, %s324
      %p326 = pneg %p44
      %p327 = pneg %p41
      %p328 = pneg %p65
      %p329 = pneg %p62
      %p330 = pneg %p86
      %p331 = pneg %p83
      %p332 = pneg %p107
      %p333 = pneg %p104
      %p334 = pneg %p128
      %p335 = pneg %p125
      %p336 = pneg %p149
      %p337 = pneg %p146
      %p338 = pneg %p170
      %p339 = pneg %p167
      %p340 = pneg %p191
      %p341 = pneg %p188
      %p342 = pneg %p212
      %p343 = pneg %p209
      %p344 = pneg %p233
      %p345 = pneg %p230
      %p346 = pneg %p259
      %p347 = pneg %p256
      %s348 = smul.u32 32, %s23
      %p349 = scmp.lt.s32.totalorder %s348, 127
      %s350 = scalar_select %p349, %s348, 127
      %s351 = smul.addr %s350, 8
      %s352 = scalar_lea.vmem %s10, %s351
      %s353 = smul.u32 32, %s23
      %p354 = scmp.lt.s32.totalorder %s353, 127
      %s355 = scalar_select %p354, %s353, 127
      %s356 = smul.addr %s355, 4
      %s357 = scalar_lea.vmem %s0, %s356
      %s358 = smul.u32 32, %s23
      %s359 = smul.u32 32, %s23
      %p360 = scmp.lt.s32.totalorder %s359, 127
      %s361 = scalar_select %p360, %s359, 127
      %s362 = smul.addr %s361, 8
      %s363 = scalar_lea.vmem %s10, %s362
      %s364 = smul.u32 32, %s23
      %v366 = vld [vmem:[%s357] sm:$0xf]
      %v367 = vld [vmem:[%s357 + $0x4] sm:$0xf]
      %v368 = vld [vmem:[%s357 + $0x8] sm:$0xf]
      %v369 = vld [vmem:[%s357 + $0xc] sm:$0xf]
      %v370 = vld [vmem:[%s357 + $0x10] sm:$0xf]
      %v371 = vld [vmem:[%s357 + $0x14] sm:$0xf]
      %v372 = vld [vmem:[%s357 + $0x18] sm:$0xf]
      %v373 = vld [vmem:[%s357 + $0x1c] sm:$0xf]
      %v374 = vld [vmem:[%s357 + $0x20] sm:$0xf]
      %v375 = vld [vmem:[%s357 + $0x24] sm:$0xf]
      %v376 = vld [vmem:[%s357 + $0x28] sm:$0xf]
      %v377 = vld [vmem:[%s357 + $0x2c] sm:$0xf]
      %v378 = vld [vmem:[%s357 + $0x30] sm:$0xf]
      %v379 = vld [vmem:[%s357 + $0x34] sm:$0xf]
      %v380 = vld [vmem:[%s357 + $0x38] sm:$0xf]
      %v381 = vld [vmem:[%s357 + $0x3c] sm:$0xf]
      %v382 = vld [vmem:[%s357 + $0x40] sm:$0xf]
      %v383 = vld [vmem:[%s357 + $0x44] sm:$0xf]
      %v384 = vld [vmem:[%s357 + $0x48] sm:$0xf]
      %v385 = vld [vmem:[%s357 + $0x4c] sm:$0xf]
      %v386 = vld [vmem:[%s357 + $0x50] sm:$0xf]
      %v387 = vld [vmem:[%s357 + $0x54] sm:$0xf]
      %v388 = vld [vmem:[%s357 + $0x58] sm:$0xf]
      %v389 = vld [vmem:[%s357 + $0x5c] sm:$0xf]
      %v390 = vld [vmem:[%s357 + $0x60] sm:$0xf]
      %v391 = vld [vmem:[%s357 + $0x64] sm:$0xf]
      %v392 = vld [vmem:[%s357 + $0x68] sm:$0xf]
      %v393 = vld [vmem:[%s357 + $0x6c] sm:$0xf]
      %v394 = vld [vmem:[%s357 + $0x70] sm:$0xf]
      %v395 = vld [vmem:[%s357 + $0x74] sm:$0xf]
      %v396 = vld [vmem:[%s357 + $0x78] sm:$0xf]
      %v397 = vld [vmem:[%s357 + $0x7c] sm:$0xf]
      %v398 = vld [vmem:[%s5] sm:$0xf]
      %v399 = vld [vmem:[%s5 + $0x4] sm:$0xf]
      %v432 = vunpack.c.l.b16 %v366
      %v433 = vunpack.c.l.b16 %v367
      %v434 = vunpack.c.l.b16 %v368
      %v435 = vunpack.c.l.b16 %v369
      %v436 = vunpack.c.l.b16 %v370
      %v437 = vunpack.c.l.b16 %v371
      %v438 = vunpack.c.l.b16 %v372
      %v439 = vunpack.c.l.b16 %v373
      %v440 = vunpack.c.l.b16 %v374
      %v441 = vunpack.c.l.b16 %v375
      %v442 = vunpack.c.l.b16 %v376
      %v443 = vunpack.c.l.b16 %v377
      %v444 = vunpack.c.l.b16 %v378
      %v445 = vunpack.c.l.b16 %v379
      %v446 = vunpack.c.l.b16 %v380
      %v447 = vunpack.c.l.b16 %v381
      %v448 = vunpack.c.l.b16 %v382
      %v449 = vunpack.c.l.b16 %v383
      %v450 = vunpack.c.l.b16 %v384
      %v451 = vunpack.c.l.b16 %v385
      %v452 = vunpack.c.l.b16 %v386
      %v453 = vunpack.c.l.b16 %v387
      %v454 = vunpack.c.l.b16 %v388
      %v455 = vunpack.c.l.b16 %v389
      %v456 = vunpack.c.l.b16 %v390
      %v457 = vunpack.c.l.b16 %v391
      %v458 = vunpack.c.l.b16 %v392
      %v459 = vunpack.c.l.b16 %v393
      %v460 = vunpack.c.l.b16 %v394
      %v461 = vunpack.c.l.b16 %v395
      %v462 = vunpack.c.l.b16 %v396
      %v463 = vunpack.c.l.b16 %v397
      %v464 = vpack.c.b16 %v433, %v432
      %v465 = vpack.c.b16 %v435, %v434
      %v466 = vpack.c.b16 %v437, %v436
      %v467 = vpack.c.b16 %v439, %v438
      %v468 = vpack.c.b16 %v441, %v440
      %v469 = vpack.c.b16 %v443, %v442
      %v470 = vpack.c.b16 %v445, %v444
      %v471 = vpack.c.b16 %v447, %v446
      %v472 = vpack.c.b16 %v449, %v448
      %v473 = vpack.c.b16 %v451, %v450
      %v474 = vpack.c.b16 %v453, %v452
      %v475 = vpack.c.b16 %v455, %v454
      %v476 = vpack.c.b16 %v457, %v456
      %v477 = vpack.c.b16 %v459, %v458
      %v478 = vpack.c.b16 %v461, %v460
      %v479 = vpack.c.b16 %v463, %v462
      %v482 = vunpack.c.l.b16 %v398
      %v483 = vunpack.c.l.b16 %v399
      %v484 = vpack.c.b16 %v483, %v482
      %vm486 = vcmask 130048
      %v488 = vsel %vm486, %v464, 0
      %v491 = vsel %vm486, %v465, 0
      %v494 = vsel %vm486, %v466, 0
      %v497 = vsel %vm486, %v467, 0
      %v500 = vsel %vm486, %v468, 0
      %v503 = vsel %vm486, %v469, 0
      %v506 = vsel %vm486, %v470, 0
      %v509 = vsel %vm486, %v471, 0
      %v512 = vsel %vm486, %v472, 0
      %v515 = vsel %vm486, %v473, 0
      %v518 = vsel %vm486, %v474, 0
      %v521 = vsel %vm486, %v475, 0
      %v524 = vsel %vm486, %v476, 0
      %v527 = vsel %vm486, %v477, 0
      %v530 = vsel %vm486, %v478, 0
      %v533 = vsel %vm486, %v479, 0
      %535 = vmatprep.subr.bf16.mxu0 0
      %536 = vmatpush1.bf16.msra.mxu0 %v484
      %537 = vmatprep.subr.bf16.mxu0 0
      %538 = vmatpush1.bf16.msra.mxu0 0
      %539 = vmatprep.subr.bf16.mxu0 0
      %540 = vmatpush1.bf16.msra.mxu0 0
      %541 = vmatprep.subr.bf16.mxu0 0
      %542 = vmatpush1.bf16.msra.mxu0 0
      %543 = vmatprep.subr.bf16.mxu0 0
      %544 = vmatpush1.bf16.msra.mxu0 0
      %545 = vmatprep.subr.bf16.mxu0 0
      %546 = vmatpush1.bf16.msra.mxu0 0
      %547 = vmatprep.subr.bf16.mxu0 0
      %548 = vmatpush1.bf16.msra.mxu0 0
      %549 = vmatprep.subr.bf16.mxu0 0
      %550 = vmatpush1.bf16.msra.mxu0 0
      %551 = vmatprep.subr.bf16.mxu0 0
      %552 = vmatpush1.bf16.msra.mxu0 0
      %553 = vmatprep.subr.bf16.mxu0 0
      %554 = vmatpush1.bf16.msra.mxu0 0
      %555 = vmatprep.subr.bf16.mxu0 0
      %556 = vmatpush1.bf16.msra.mxu0 0
      %557 = vmatprep.subr.bf16.mxu0 0
      %558 = vmatpush1.bf16.msra.mxu0 0
      %559 = vmatprep.subr.bf16.mxu0 0
      %560 = vmatpush1.bf16.msra.mxu0 0
      %561 = vmatprep.subr.bf16.mxu0 0
      %562 = vmatpush1.bf16.msra.mxu0 0
      %563 = vmatprep.subr.bf16.mxu0 0
      %564 = vmatpush1.bf16.msra.mxu0 0
      %565 = vmatprep.subr.bf16.mxu0 0
      %566 = vmatpush1.bf16.msra.mxu0 0
      %567 = vmatprep.mubr.bf16.mxu0 0
      %568 = vmatmul.mubr.bf16.gmra.mrb[0].mxu0 %v488
      %v569 = vpop.f32.mrb[0].mxu0
      %v570 = vadd.f32 0.0, %v569
      %v571 = vpop.f32.mrb[0].mxu0
      %v572 = vpop.f32.mrb[0].mxu0
      %v573 = vadd.f32 0.0, %v572
      %v574 = vpop.f32.mrb[0].mxu0
      %575 = vmatprep.mubr.bf16.mxu0 0
      %576 = vmatmul.mubr.bf16.gmra.mrb[0].mxu0 %v491
      %v577 = vpop.f32.mrb[0].mxu0
      %v578 = vadd.f32 0.0, %v577
      %v579 = vpop.f32.mrb[0].mxu0
      %v580 = vpop.f32.mrb[0].mxu0
      %v581 = vadd.f32 0.0, %v580
      %v582 = vpop.f32.mrb[0].mxu0
      %583 = vmatprep.mubr.bf16.mxu0 0
      %584 = vmatmul.mubr.bf16.gmra.mrb[0].mxu0 %v494
      %v585 = vpop.f32.mrb[0].mxu0
      %v586 = vadd.f32 0.0, %v585
      %v587 = vpop.f32.mrb[0].mxu0
      %v588 = vpop.f32.mrb[0].mxu0
      %v589 = vadd.f32 0.0, %v588
      %v590 = vpop.f32.mrb[0].mxu0
      %591 = vmatprep.mubr.bf16.mxu0 0
      %592 = vmatmul.mubr.bf16.gmra.mrb[0].mxu0 %v497
      %v593 = vpop.f32.mrb[0].mxu0
      %v594 = vadd.f32 0.0, %v593
      %v595 = vpop.f32.mrb[0].mxu0
      %v596 = vpop.f32.mrb[0].mxu0
      %v597 = vadd.f32 0.0, %v596
      %v598 = vpop.f32.mrb[0].mxu0
      %599 = vmatprep.mubr.bf16.mxu0 0
      %600 = vmatmul.mubr.bf16.gmra.mrb[0].mxu0 %v500
      %v601 = vpop.f32.mrb[0].mxu0
      %v602 = vadd.f32 0.0, %v601
      %v603 = vpop.f32.mrb[0].mxu0
      %v604 = vpop.f32.mrb[0].mxu0
      %v605 = vadd.f32 0.0, %v604
      %v606 = vpop.f32.mrb[0].mxu0
      %607 = vmatprep.mubr.bf16.mxu0 0
      %608 = vmatmul.mubr.bf16.gmra.mrb[0].mxu0 %v503
      %v609 = vpop.f32.mrb[0].mxu0
      %v610 = vadd.f32 0.0, %v609
      %v611 = vpop.f32.mrb[0].mxu0
      %v612 = vpop.f32.mrb[0].mxu0
      %v613 = vadd.f32 0.0, %v612
      %v614 = vpop.f32.mrb[0].mxu0
      %615 = vmatprep.mubr.bf16.mxu0 0
      %616 = vmatmul.mubr.bf16.gmra.mrb[0].mxu0 %v506
      %v617 = vpop.f32.mrb[0].mxu0
      %v618 = vadd.f32 0.0, %v617
      %v619 = vpop.f32.mrb[0].mxu0
      %v620 = vpop.f32.mrb[0].mxu0
      %v621 = vadd.f32 0.0, %v620
      %v622 = vpop.f32.mrb[0].mxu0
      %623 = vmatprep.mubr.bf16.mxu0 0
      %624 = vmatmul.mubr.bf16.gmra.mrb[0].mxu0 %v509
      %v625 = vpop.f32.mrb[0].mxu0
      %v626 = vadd.f32 0.0, %v625
      %v627 = vpop.f32.mrb[0].mxu0
      %v628 = vpop.f32.mrb[0].mxu0
      %v629 = vadd.f32 0.0, %v628
      %v630 = vpop.f32.mrb[0].mxu0
      %631 = vmatprep.mubr.bf16.mxu0 0
      %632 = vmatmul.mubr.bf16.gmra.mrb[0].mxu0 %v512
      %v633 = vpop.f32.mrb[0].mxu0
      %v634 = vadd.f32 0.0, %v633
      %v635 = vpop.f32.mrb[0].mxu0
      %v636 = vpop.f32.mrb[0].mxu0
      %v637 = vadd.f32 0.0, %v636
      %v638 = vpop.f32.mrb[0].mxu0
      %639 = vmatprep.mubr.bf16.mxu0 0
      %640 = vmatmul.mubr.bf16.gmra.mrb[0].mxu0 %v515
      %v641 = vpop.f32.mrb[0].mxu0
      %v642 = vadd.f32 0.0, %v641
      %v643 = vpop.f32.mrb[0].mxu0
      %v644 = vpop.f32.mrb[0].mxu0
      %v645 = vadd.f32 0.0, %v644
      %v646 = vpop.f32.mrb[0].mxu0
      %647 = vmatprep.mubr.bf16.mxu0 0
      %648 = vmatmul.mubr.bf16.gmra.mrb[0].mxu0 %v518
      %v649 = vpop.f32.mrb[0].mxu0
      %v650 = vadd.f32 0.0, %v649
      %v651 = vpop.f32.mrb[0].mxu0
      %v652 = vpop.f32.mrb[0].mxu0
      %v653 = vadd.f32 0.0, %v652
      %v654 = vpop.f32.mrb[0].mxu0
      %655 = vmatprep.mubr.bf16.mxu0 0
      %656 = vmatmul.mubr.bf16.gmra.mrb[0].mxu0 %v521
      %v657 = vpop.f32.mrb[0].mxu0
      %v658 = vadd.f32 0.0, %v657
      %v659 = vpop.f32.mrb[0].mxu0
      %v660 = vpop.f32.mrb[0].mxu0
      %v661 = vadd.f32 0.0, %v660
      %v662 = vpop.f32.mrb[0].mxu0
      %663 = vmatprep.mubr.bf16.mxu0 0
      %664 = vmatmul.mubr.bf16.gmra.mrb[0].mxu0 %v524
      %v665 = vpop.f32.mrb[0].mxu0
      %v666 = vadd.f32 0.0, %v665
      %v667 = vpop.f32.mrb[0].mxu0
      %v668 = vpop.f32.mrb[0].mxu0
      %v669 = vadd.f32 0.0, %v668
      %v670 = vpop.f32.mrb[0].mxu0
      %671 = vmatprep.mubr.bf16.mxu0 0
      %672 = vmatmul.mubr.bf16.gmra.mrb[0].mxu0 %v527
      %v673 = vpop.f32.mrb[0].mxu0
      %v674 = vadd.f32 0.0, %v673
      %v675 = vpop.f32.mrb[0].mxu0
      %v676 = vpop.f32.mrb[0].mxu0
      %v677 = vadd.f32 0.0, %v676
      %v678 = vpop.f32.mrb[0].mxu0
      %679 = vmatprep.mubr.bf16.mxu0 0
      %680 = vmatmul.mubr.bf16.gmra.mrb[0].mxu0 %v530
      %v681 = vpop.f32.mrb[0].mxu0
      %v682 = vadd.f32 0.0, %v681
      %v683 = vpop.f32.mrb[0].mxu0
      %v684 = vpop.f32.mrb[0].mxu0
      %v685 = vadd.f32 0.0, %v684
      %v686 = vpop.f32.mrb[0].mxu0
      %687 = vmatprep.mubr.bf16.mxu0 0
      %688 = vmatmul.mubr.bf16.gmra.mrb[0].mxu0 %v533
      %v689 = vpop.f32.mrb[0].mxu0
      %v690 = vadd.f32 0.0, %v689
      %v691 = vpop.f32.mrb[0].mxu0
      %v692 = vpop.f32.mrb[0].mxu0
      %v693 = vadd.f32 0.0, %v692
      %v694 = vpop.f32.mrb[0].mxu0
      %695 = vdwg.mxu0
      %v696 = vld [vmem:[%s1] sm:$0xf]
      %v697 = vld [vmem:[%s1 + $0x4] sm:$0xf]
      %v698 = vld [vmem:[%s2] sm:$0x1]
      %v700 = vlaneseq
      %v701 = vshrl.u32 %v700, 7
      %v702 = vsub.s32 0, %v701
      %v703 = vrot.slane %v698, %v702
      %v707 = vunpack.c.l.b16 %v696
      %v708 = vunpack.c.l.b16 %v697
      %v709 = vpack.c.b16 %v708, %v707
      %711 = vmatprep.subr.bf16.mxu0 0
      %712 = vmatpush1.bf16.msra.mxu0 %v709
      %713 = vmatprep.subr.bf16.mxu0 0
      %714 = vmatpush1.bf16.msra.mxu0 0
      %715 = vmatprep.subr.bf16.mxu0 0
      %716 = vmatpush1.bf16.msra.mxu0 0
      %717 = vmatprep.subr.bf16.mxu0 0
      %718 = vmatpush1.bf16.msra.mxu0 0
      %719 = vmatprep.subr.bf16.mxu0 0
      %720 = vmatpush1.bf16.msra.mxu0 0
      %721 = vmatprep.subr.bf16.mxu0 0
      %722 = vmatpush1.bf16.msra.mxu0 0
      %723 = vmatprep.subr.bf16.mxu0 0
      %724 = vmatpush1.bf16.msra.mxu0 0
      %725 = vmatprep.subr.bf16.mxu0 0
      %726 = vmatpush1.bf16.msra.mxu0 0
      %727 = vmatprep.subr.bf16.mxu0 0
      %728 = vmatpush1.bf16.msra.mxu0 0
      %729 = vmatprep.subr.bf16.mxu0 0
      %730 = vmatpush1.bf16.msra.mxu0 0
      %731 = vmatprep.subr.bf16.mxu0 0
      %732 = vmatpush1.bf16.msra.mxu0 0
      %733 = vmatprep.subr.bf16.mxu0 0
      %734 = vmatpush1.bf16.msra.mxu0 0
      %735 = vmatprep.subr.bf16.mxu0 0
      %736 = vmatpush1.bf16.msra.mxu0 0
      %737 = vmatprep.subr.bf16.mxu0 0
      %738 = vmatpush1.bf16.msra.mxu0 0
      %739 = vmatprep.subr.bf16.mxu0 0
      %740 = vmatpush1.bf16.msra.mxu0 0
      %741 = vmatprep.subr.bf16.mxu0 0
      %742 = vmatpush1.bf16.msra.mxu0 0
      %743 = vmatprep.mubr.bf16.mxu0 0
      %744 = vmatmul.mubr.bf16.gmra.mrb[0].mxu0 %v488
      %v745 = vpop.f32.mrb[0].mxu0
      %v746 = vadd.f32 %v703, %v745
      %v747 = vpop.f32.mrb[0].mxu0
      %v748 = vpop.f32.mrb[0].mxu0
      %v749 = vadd.f32 %v703, %v748
      %v750 = vpop.f32.mrb[0].mxu0
      %751 = vmatprep.mubr.bf16.mxu0 0
      %752 = vmatmul.mubr.bf16.gmra.mrb[0].mxu0 %v491
      %v753 = vpop.f32.mrb[0].mxu0
      %v754 = vadd.f32 %v703, %v753
      %v755 = vpop.f32.mrb[0].mxu0
      %v756 = vpop.f32.mrb[0].mxu0
      %v757 = vadd.f32 %v703, %v756
      %v758 = vpop.f32.mrb[0].mxu0
      %759 = vmatprep.mubr.bf16.mxu0 0
      %760 = vmatmul.mubr.bf16.gmra.mrb[0].mxu0 %v494
      %v761 = vpop.f32.mrb[0].mxu0
      %v762 = vadd.f32 %v703, %v761
      %v763 = vpop.f32.mrb[0].mxu0
      %v764 = vpop.f32.mrb[0].mxu0
      %v765 = vadd.f32 %v703, %v764
      %v766 = vpop.f32.mrb[0].mxu0
      %767 = vmatprep.mubr.bf16.mxu0 0
      %768 = vmatmul.mubr.bf16.gmra.mrb[0].mxu0 %v497
      %v769 = vpop.f32.mrb[0].mxu0
      %v770 = vadd.f32 %v703, %v769
      %v771 = vpop.f32.mrb[0].mxu0
      %v772 = vpop.f32.mrb[0].mxu0
      %v773 = vadd.f32 %v703, %v772
      %v774 = vpop.f32.mrb[0].mxu0
      %775 = vmatprep.mubr.bf16.mxu0 0
      %776 = vmatmul.mubr.bf16.gmra.mrb[0].mxu0 %v500
      %v777 = vpop.f32.mrb[0].mxu0
      %v778 = vadd.f32 %v703, %v777
      %v779 = vpop.f32.mrb[0].mxu0
      %v780 = vpop.f32.mrb[0].mxu0
      %v781 = vadd.f32 %v703, %v780
      %v782 = vpop.f32.mrb[0].mxu0
      %783 = vmatprep.mubr.bf16.mxu0 0
      %784 = vmatmul.mubr.bf16.gmra.mrb[0].mxu0 %v503
      %v785 = vpop.f32.mrb[0].mxu0
      %v786 = vadd.f32 %v703, %v785
      %v787 = vpop.f32.mrb[0].mxu0
      %v788 = vpop.f32.mrb[0].mxu0
      %v789 = vadd.f32 %v703, %v788
      %v790 = vpop.f32.mrb[0].mxu0
      %791 = vmatprep.mubr.bf16.mxu0 0
      %792 = vmatmul.mubr.bf16.gmra.mrb[0].mxu0 %v506
      %v793 = vpop.f32.mrb[0].mxu0
      %v794 = vadd.f32 %v703, %v793
      %v795 = vpop.f32.mrb[0].mxu0
      %v796 = vpop.f32.mrb[0].mxu0
      %v797 = vadd.f32 %v703, %v796
      %v798 = vpop.f32.mrb[0].mxu0
      %799 = vmatprep.mubr.bf16.mxu0 0
      %800 = vmatmul.mubr.bf16.gmra.mrb[0].mxu0 %v509
      %v801 = vpop.f32.mrb[0].mxu0
      %v802 = vadd.f32 %v703, %v801
      %v803 = vpop.f32.mrb[0].mxu0
      %v804 = vpop.f32.mrb[0].mxu0
      %v805 = vadd.f32 %v703, %v804
      %v806 = vpop.f32.mrb[0].mxu0
      %807 = vmatprep.mubr.bf16.mxu0 0
      %808 = vmatmul.mubr.bf16.gmra.mrb[0].mxu0 %v512
      %v809 = vpop.f32.mrb[0].mxu0
      %v810 = vadd.f32 %v703, %v809
      %v811 = vpop.f32.mrb[0].mxu0
      %v812 = vpop.f32.mrb[0].mxu0
      %v813 = vadd.f32 %v703, %v812
      %v814 = vpop.f32.mrb[0].mxu0
      %815 = vmatprep.mubr.bf16.mxu0 0
      %816 = vmatmul.mubr.bf16.gmra.mrb[0].mxu0 %v515
      %v817 = vpop.f32.mrb[0].mxu0
      %v818 = vadd.f32 %v703, %v817
      %v819 = vpop.f32.mrb[0].mxu0
      %v820 = vpop.f32.mrb[0].mxu0
      %v821 = vadd.f32 %v703, %v820
      %v822 = vpop.f32.mrb[0].mxu0
      %823 = vmatprep.mubr.bf16.mxu0 0
      %824 = vmatmul.mubr.bf16.gmra.mrb[0].mxu0 %v518
      %v825 = vpop.f32.mrb[0].mxu0
      %v826 = vadd.f32 %v703, %v825
      %v827 = vpop.f32.mrb[0].mxu0
      %v828 = vpop.f32.mrb[0].mxu0
      %v829 = vadd.f32 %v703, %v828
      %v830 = vpop.f32.mrb[0].mxu0
      %831 = vmatprep.mubr.bf16.mxu0 0
      %832 = vmatmul.mubr.bf16.gmra.mrb[0].mxu0 %v521
      %v833 = vpop.f32.mrb[0].mxu0
      %v834 = vadd.f32 %v703, %v833
      %v835 = vpop.f32.mrb[0].mxu0
      %v836 = vpop.f32.mrb[0].mxu0
      %v837 = vadd.f32 %v703, %v836
      %v838 = vpop.f32.mrb[0].mxu0
      %839 = vmatprep.mubr.bf16.mxu0 0
      %840 = vmatmul.mubr.bf16.gmra.mrb[0].mxu0 %v524
      %v841 = vpop.f32.mrb[0].mxu0
      %v842 = vadd.f32 %v703, %v841
      %v843 = vpop.f32.mrb[0].mxu0
      %v844 = vpop.f32.mrb[0].mxu0
      %v845 = vadd.f32 %v703, %v844
      %v846 = vpop.f32.mrb[0].mxu0
      %847 = vmatprep.mubr.bf16.mxu0 0
      %848 = vmatmul.mubr.bf16.gmra.mrb[0].mxu0 %v527
      %v849 = vpop.f32.mrb[0].mxu0
      %v850 = vadd.f32 %v703, %v849
      %v851 = vpop.f32.mrb[0].mxu0
      %v852 = vpop.f32.mrb[0].mxu0
      %v853 = vadd.f32 %v703, %v852
      %v854 = vpop.f32.mrb[0].mxu0
      %855 = vmatprep.mubr.bf16.mxu0 0
      %856 = vmatmul.mubr.bf16.gmra.mrb[0].mxu0 %v530
      %v857 = vpop.f32.mrb[0].mxu0
      %v858 = vadd.f32 %v703, %v857
      %v859 = vpop.f32.mrb[0].mxu0
      %v860 = vpop.f32.mrb[0].mxu0
      %v861 = vadd.f32 %v703, %v860
      %v862 = vpop.f32.mrb[0].mxu0
      %863 = vmatprep.mubr.bf16.mxu0 0
      %864 = vmatmul.mubr.bf16.gmra.mrb[0].mxu0 %v533
      %v865 = vpop.f32.mrb[0].mxu0
      %v866 = vadd.f32 %v703, %v865
      %v867 = vpop.f32.mrb[0].mxu0
      %v868 = vpop.f32.mrb[0].mxu0
      %v869 = vadd.f32 %v703, %v868
      %v870 = vpop.f32.mrb[0].mxu0
      %871 = vdwg.mxu0
      %v872 = vmax.f32 %v746, 0.0
      %v873 = vmax.f32 %v749, 0.0
      %v874 = vmax.f32 %v754, 0.0
      %v875 = vmax.f32 %v757, 0.0
      %v876 = vmax.f32 %v762, 0.0
      %v877 = vmax.f32 %v765, 0.0
      %v878 = vmax.f32 %v770, 0.0
      %v879 = vmax.f32 %v773, 0.0
      %v880 = vmax.f32 %v778, 0.0
      %v881 = vmax.f32 %v781, 0.0
      %v882 = vmax.f32 %v786, 0.0
      %v883 = vmax.f32 %v789, 0.0
      %v884 = vmax.f32 %v794, 0.0
      %v885 = vmax.f32 %v797, 0.0
      %v886 = vmax.f32 %v802, 0.0
      %v887 = vmax.f32 %v805, 0.0
      %v888 = vmax.f32 %v810, 0.0
      %v889 = vmax.f32 %v813, 0.0
      %v890 = vmax.f32 %v818, 0.0
      %v891 = vmax.f32 %v821, 0.0
      %v892 = vmax.f32 %v826, 0.0
      %v893 = vmax.f32 %v829, 0.0
      %v894 = vmax.f32 %v834, 0.0
      %v895 = vmax.f32 %v837, 0.0
      %v896 = vmax.f32 %v842, 0.0
      %v897 = vmax.f32 %v845, 0.0
      %v898 = vmax.f32 %v850, 0.0
      %v899 = vmax.f32 %v853, 0.0
      %v900 = vmax.f32 %v858, 0.0
      %v901 = vmax.f32 %v861, 0.0
      %v902 = vmax.f32 %v866, 0.0
      %v903 = vmax.f32 %v869, 0.0
      %v904 = vpack.c.bf16 %v873, %v872
      %v905 = vpack.c.bf16 %v875, %v874
      %v906 = vpack.c.bf16 %v877, %v876
      %v907 = vpack.c.bf16 %v879, %v878
      %v908 = vpack.c.bf16 %v881, %v880
      %v909 = vpack.c.bf16 %v883, %v882
      %v910 = vpack.c.bf16 %v885, %v884
      %v911 = vpack.c.bf16 %v887, %v886
      %v912 = vpack.c.bf16 %v889, %v888
      %v913 = vpack.c.bf16 %v891, %v890
      %v914 = vpack.c.bf16 %v893, %v892
      %v915 = vpack.c.bf16 %v895, %v894
      %v916 = vpack.c.bf16 %v897, %v896
      %v917 = vpack.c.bf16 %v899, %v898
      %v918 = vpack.c.bf16 %v901, %v900
      %v919 = vpack.c.bf16 %v903, %v902
      %v920 = vld [vmem:[%s3] sm:$0xf]
      %v921 = vld [vmem:[%s3 + $0x4] sm:$0xf]
      %v922 = vld [vmem:[%s3 + $0x8] sm:$0xf]
      %v923 = vld [vmem:[%s3 + $0xc] sm:$0xf]
      %v924 = vld [vmem:[%s3 + $0x10] sm:$0xf]
      %v925 = vld [vmem:[%s3 + $0x14] sm:$0xf]
      %v926 = vld [vmem:[%s3 + $0x18] sm:$0xf]
      %v927 = vld [vmem:[%s3 + $0x1c] sm:$0xf]
      %v928 = vld [vmem:[%s3 + $0x20] sm:$0xf]
      %v929 = vld [vmem:[%s3 + $0x24] sm:$0xf]
      %v930 = vld [vmem:[%s3 + $0x28] sm:$0xf]
      %v931 = vld [vmem:[%s3 + $0x2c] sm:$0xf]
      %v932 = vld [vmem:[%s3 + $0x30] sm:$0xf]
      %v933 = vld [vmem:[%s3 + $0x34] sm:$0xf]
      %v934 = vld [vmem:[%s3 + $0x38] sm:$0xf]
      %v935 = vld [vmem:[%s3 + $0x3c] sm:$0xf]
      %v936 = vld [vmem:[%s4] sm:$0x1]
      %v937 = vlaneseq
      %v938 = vshrl.u32 %v937, 7
      %v939 = vsub.s32 0, %v938
      %v940 = vrot.slane %v936, %v939
      %v957 = vunpack.c.l.b16 %v920
      %v958 = vunpack.c.l.b16 %v921
      %v959 = vunpack.c.l.b16 %v922
      %v960 = vunpack.c.l.b16 %v923
      %v961 = vunpack.c.l.b16 %v924
      %v962 = vunpack.c.l.b16 %v925
      %v963 = vunpack.c.l.b16 %v926
      %v964 = vunpack.c.l.b16 %v927
      %v965 = vunpack.c.l.b16 %v928
      %v966 = vunpack.c.l.b16 %v929
      %v967 = vunpack.c.l.b16 %v930
      %v968 = vunpack.c.l.b16 %v931
      %v969 = vunpack.c.l.b16 %v932
      %v970 = vunpack.c.l.b16 %v933
      %v971 = vunpack.c.l.b16 %v934
      %v972 = vunpack.c.l.b16 %v935
      %v973 = vpack.c.b16 %v958, %v957
      %v974 = vpack.c.b16 %v960, %v959
      %v975 = vpack.c.b16 %v962, %v961
      %v976 = vpack.c.b16 %v964, %v963
      %v977 = vpack.c.b16 %v966, %v965
      %v978 = vpack.c.b16 %v968, %v967
      %v979 = vpack.c.b16 %v970, %v969
      %v980 = vpack.c.b16 %v972, %v971
      %989 = vmatprep.subr.bf16.mxu0 0
      %990 = vmatpush1.bf16.msra.mxu0 %v973
      %991 = vmatprep.subr.bf16.mxu0 0
      %992 = vmatpush1.bf16.msra.mxu0 %v974
      %993 = vmatprep.subr.bf16.mxu0 0
      %994 = vmatpush1.bf16.msra.mxu0 %v975
      %995 = vmatprep.subr.bf16.mxu0 0
      %996 = vmatpush1.bf16.msra.mxu0 %v976
      %997 = vmatprep.subr.bf16.mxu0 0
      %998 = vmatpush1.bf16.msra.mxu0 %v977
      %999 = vmatprep.subr.bf16.mxu0 0
      %1000 = vmatpush1.bf16.msra.mxu0 %v978
      %1001 = vmatprep.subr.bf16.mxu0 0
      %1002 = vmatpush1.bf16.msra.mxu0 %v979
      %1003 = vmatprep.subr.bf16.mxu0 0
      %1004 = vmatpush1.bf16.msra.mxu0 %v980
      %1005 = vmatprep.subr.bf16.mxu0 0
      %1006 = vmatpush1.bf16.msra.mxu0 0
      %1007 = vmatprep.subr.bf16.mxu0 0
      %1008 = vmatpush1.bf16.msra.mxu0 0
      %1009 = vmatprep.subr.bf16.mxu0 0
      %1010 = vmatpush1.bf16.msra.mxu0 0
      %1011 = vmatprep.subr.bf16.mxu0 0
      %1012 = vmatpush1.bf16.msra.mxu0 0
      %1013 = vmatprep.subr.bf16.mxu0 0
      %1014 = vmatpush1.bf16.msra.mxu0 0
      %1015 = vmatprep.subr.bf16.mxu0 0
      %1016 = vmatpush1.bf16.msra.mxu0 0
      %1017 = vmatprep.subr.bf16.mxu0 0
      %1018 = vmatpush1.bf16.msra.mxu0 0
      %1019 = vmatprep.subr.bf16.mxu0 0
      %1020 = vmatpush1.bf16.msra.mxu0 0
      %1021 = vmatprep.mubr.bf16.mxu0 0
      %1022 = vmatmul.mubr.bf16.gmra.mrb[0].mxu0 %v904
      %v1023 = vpop.f32.mrb[0].mxu0
      %v1024 = vadd.f32 %v940, %v1023
      %v1025 = vpop.f32.mrb[0].mxu0
      %v1026 = vpop.f32.mrb[0].mxu0
      %v1027 = vadd.f32 %v940, %v1026
      %v1028 = vpop.f32.mrb[0].mxu0
      %1029 = vmatprep.mubr.bf16.mxu0 0
      %1030 = vmatmul.mubr.bf16.gmra.mrb[0].mxu0 %v905
      %v1031 = vpop.f32.mrb[0].mxu0
      %v1032 = vadd.f32 %v940, %v1031
      %v1033 = vpop.f32.mrb[0].mxu0
      %v1034 = vpop.f32.mrb[0].mxu0
      %v1035 = vadd.f32 %v940, %v1034
      %v1036 = vpop.f32.mrb[0].mxu0
      %1037 = vmatprep.mubr.bf16.mxu0 0
      %1038 = vmatmul.mubr.bf16.gmra.mrb[0].mxu0 %v906
      %v1039 = vpop.f32.mrb[0].mxu0
      %v1040 = vadd.f32 %v940, %v1039
      %v1041 = vpop.f32.mrb[0].mxu0
      %v1042 = vpop.f32.mrb[0].mxu0
      %v1043 = vadd.f32 %v940, %v1042
      %v1044 = vpop.f32.mrb[0].mxu0
      %1045 = vmatprep.mubr.bf16.mxu0 0
      %1046 = vmatmul.mubr.bf16.gmra.mrb[0].mxu0 %v907
      %v1047 = vpop.f32.mrb[0].mxu0
      %v1048 = vadd.f32 %v940, %v1047
      %v1049 = vpop.f32.mrb[0].mxu0
      %v1050 = vpop.f32.mrb[0].mxu0
      %v1051 = vadd.f32 %v940, %v1050
      %v1052 = vpop.f32.mrb[0].mxu0
      %1053 = vmatprep.mubr.bf16.mxu0 0
      %1054 = vmatmul.mubr.bf16.gmra.mrb[0].mxu0 %v908
      %v1055 = vpop.f32.mrb[0].mxu0
      %v1056 = vadd.f32 %v940, %v1055
      %v1057 = vpop.f32.mrb[0].mxu0
      %v1058 = vpop.f32.mrb[0].mxu0
      %v1059 = vadd.f32 %v940, %v1058
      %v1060 = vpop.f32.mrb[0].mxu0
      %1061 = vmatprep.mubr.bf16.mxu0 0
      %1062 = vmatmul.mubr.bf16.gmra.mrb[0].mxu0 %v909
      %v1063 = vpop.f32.mrb[0].mxu0
      %v1064 = vadd.f32 %v940, %v1063
      %v1065 = vpop.f32.mrb[0].mxu0
      %v1066 = vpop.f32.mrb[0].mxu0
      %v1067 = vadd.f32 %v940, %v1066
      %v1068 = vpop.f32.mrb[0].mxu0
      %1069 = vmatprep.mubr.bf16.mxu0 0
      %1070 = vmatmul.mubr.bf16.gmra.mrb[0].mxu0 %v910
      %v1071 = vpop.f32.mrb[0].mxu0
      %v1072 = vadd.f32 %v940, %v1071
      %v1073 = vpop.f32.mrb[0].mxu0
      %v1074 = vpop.f32.mrb[0].mxu0
      %v1075 = vadd.f32 %v940, %v1074
      %v1076 = vpop.f32.mrb[0].mxu0
      %1077 = vmatprep.mubr.bf16.mxu0 0
      %1078 = vmatmul.mubr.bf16.gmra.mrb[0].mxu0 %v911
      %v1079 = vpop.f32.mrb[0].mxu0
      %v1080 = vadd.f32 %v940, %v1079
      %v1081 = vpop.f32.mrb[0].mxu0
      %v1082 = vpop.f32.mrb[0].mxu0
      %v1083 = vadd.f32 %v940, %v1082
      %v1084 = vpop.f32.mrb[0].mxu0
      %1085 = vmatprep.mubr.bf16.mxu0 0
      %1086 = vmatmul.mubr.bf16.gmra.mrb[0].mxu0 %v912
      %v1087 = vpop.f32.mrb[0].mxu0
      %v1088 = vadd.f32 %v940, %v1087
      %v1089 = vpop.f32.mrb[0].mxu0
      %v1090 = vpop.f32.mrb[0].mxu0
      %v1091 = vadd.f32 %v940, %v1090
      %v1092 = vpop.f32.mrb[0].mxu0
      %1093 = vmatprep.mubr.bf16.mxu0 0
      %1094 = vmatmul.mubr.bf16.gmra.mrb[0].mxu0 %v913
      %v1095 = vpop.f32.mrb[0].mxu0
      %v1096 = vadd.f32 %v940, %v1095
      %v1097 = vpop.f32.mrb[0].mxu0
      %v1098 = vpop.f32.mrb[0].mxu0
      %v1099 = vadd.f32 %v940, %v1098
      %v1100 = vpop.f32.mrb[0].mxu0
      %1101 = vmatprep.mubr.bf16.mxu0 0
      %1102 = vmatmul.mubr.bf16.gmra.mrb[0].mxu0 %v914
      %v1103 = vpop.f32.mrb[0].mxu0
      %v1104 = vadd.f32 %v940, %v1103
      %v1105 = vpop.f32.mrb[0].mxu0
      %v1106 = vpop.f32.mrb[0].mxu0
      %v1107 = vadd.f32 %v940, %v1106
      %v1108 = vpop.f32.mrb[0].mxu0
      %1109 = vmatprep.mubr.bf16.mxu0 0
      %1110 = vmatmul.mubr.bf16.gmra.mrb[0].mxu0 %v915
      %v1111 = vpop.f32.mrb[0].mxu0
      %v1112 = vadd.f32 %v940, %v1111
      %v1113 = vpop.f32.mrb[0].mxu0
      %v1114 = vpop.f32.mrb[0].mxu0
      %v1115 = vadd.f32 %v940, %v1114
      %v1116 = vpop.f32.mrb[0].mxu0
      %1117 = vmatprep.mubr.bf16.mxu0 0
      %1118 = vmatmul.mubr.bf16.gmra.mrb[0].mxu0 %v916
      %v1119 = vpop.f32.mrb[0].mxu0
      %v1120 = vadd.f32 %v940, %v1119
      %v1121 = vpop.f32.mrb[0].mxu0
      %v1122 = vpop.f32.mrb[0].mxu0
      %v1123 = vadd.f32 %v940, %v1122
      %v1124 = vpop.f32.mrb[0].mxu0
      %1125 = vmatprep.mubr.bf16.mxu0 0
      %1126 = vmatmul.mubr.bf16.gmra.mrb[0].mxu0 %v917
      %v1127 = vpop.f32.mrb[0].mxu0
      %v1128 = vadd.f32 %v940, %v1127
      %v1129 = vpop.f32.mrb[0].mxu0
      %v1130 = vpop.f32.mrb[0].mxu0
      %v1131 = vadd.f32 %v940, %v1130
      %v1132 = vpop.f32.mrb[0].mxu0
      %1133 = vmatprep.mubr.bf16.mxu0 0
      %1134 = vmatmul.mubr.bf16.gmra.mrb[0].mxu0 %v918
      %v1135 = vpop.f32.mrb[0].mxu0
      %v1136 = vadd.f32 %v940, %v1135
      %v1137 = vpop.f32.mrb[0].mxu0
      %v1138 = vpop.f32.mrb[0].mxu0
      %v1139 = vadd.f32 %v940, %v1138
      %v1140 = vpop.f32.mrb[0].mxu0
      %1141 = vmatprep.mubr.bf16.mxu0 0
      %1142 = vmatmul.mubr.bf16.gmra.mrb[0].mxu0 %v919
      %v1143 = vpop.f32.mrb[0].mxu0
      %v1144 = vadd.f32 %v940, %v1143
      %v1145 = vpop.f32.mrb[0].mxu0
      %v1146 = vpop.f32.mrb[0].mxu0
      %v1147 = vadd.f32 %v940, %v1146
      %v1148 = vpop.f32.mrb[0].mxu0
      %1149 = vdwg.mxu0
      %v1150 = vmax.f32 %v1024, 0.0
      %v1151 = vmax.f32 %v1027, 0.0
      %v1152 = vmax.f32 %v1032, 0.0
      %v1153 = vmax.f32 %v1035, 0.0
      %v1154 = vmax.f32 %v1040, 0.0
      %v1155 = vmax.f32 %v1043, 0.0
      %v1156 = vmax.f32 %v1048, 0.0
      %v1157 = vmax.f32 %v1051, 0.0
      %v1158 = vmax.f32 %v1056, 0.0
      %v1159 = vmax.f32 %v1059, 0.0
      %v1160 = vmax.f32 %v1064, 0.0
      %v1161 = vmax.f32 %v1067, 0.0
      %v1162 = vmax.f32 %v1072, 0.0
      %v1163 = vmax.f32 %v1075, 0.0
      %v1164 = vmax.f32 %v1080, 0.0
      %v1165 = vmax.f32 %v1083, 0.0
      %v1166 = vmax.f32 %v1088, 0.0
      %v1167 = vmax.f32 %v1091, 0.0
      %v1168 = vmax.f32 %v1096, 0.0
      %v1169 = vmax.f32 %v1099, 0.0
      %v1170 = vmax.f32 %v1104, 0.0
      %v1171 = vmax.f32 %v1107, 0.0
      %v1172 = vmax.f32 %v1112, 0.0
      %v1173 = vmax.f32 %v1115, 0.0
      %v1174 = vmax.f32 %v1120, 0.0
      %v1175 = vmax.f32 %v1123, 0.0
      %v1176 = vmax.f32 %v1128, 0.0
      %v1177 = vmax.f32 %v1131, 0.0
      %v1178 = vmax.f32 %v1136, 0.0
      %v1179 = vmax.f32 %v1139, 0.0
      %v1180 = vmax.f32 %v1144, 0.0
      %v1181 = vmax.f32 %v1147, 0.0
      %v1182 = vpack.c.bf16 %v1151, %v1150
      %v1183 = vpack.c.bf16 %v1153, %v1152
      %v1184 = vpack.c.bf16 %v1155, %v1154
      %v1185 = vpack.c.bf16 %v1157, %v1156
      %v1186 = vpack.c.bf16 %v1159, %v1158
      %v1187 = vpack.c.bf16 %v1161, %v1160
      %v1188 = vpack.c.bf16 %v1163, %v1162
      %v1189 = vpack.c.bf16 %v1165, %v1164
      %v1190 = vpack.c.bf16 %v1167, %v1166
      %v1191 = vpack.c.bf16 %v1169, %v1168
      %v1192 = vpack.c.bf16 %v1171, %v1170
      %v1193 = vpack.c.bf16 %v1173, %v1172
      %v1194 = vpack.c.bf16 %v1175, %v1174
      %v1195 = vpack.c.bf16 %v1177, %v1176
      %v1196 = vpack.c.bf16 %v1179, %v1178
      %v1197 = vpack.c.bf16 %v1181, %v1180
      %s1198 = scalar_lea.vmem %s3, 64
      %v1199 = vld [vmem:[%s1198] sm:$0xf]
      %v1200 = vld [vmem:[%s1198 + $0x4] sm:$0xf]
      %v1201 = vld [vmem:[%s1198 + $0x8] sm:$0xf]
      %v1202 = vld [vmem:[%s1198 + $0xc] sm:$0xf]
      %v1203 = vld [vmem:[%s1198 + $0x10] sm:$0xf]
      %v1204 = vld [vmem:[%s1198 + $0x14] sm:$0xf]
      %v1205 = vld [vmem:[%s1198 + $0x18] sm:$0xf]
      %v1206 = vld [vmem:[%s1198 + $0x1c] sm:$0xf]
      %v1207 = vld [vmem:[%s1198 + $0x20] sm:$0xf]
      %v1208 = vld [vmem:[%s1198 + $0x24] sm:$0xf]
      %v1209 = vld [vmem:[%s1198 + $0x28] sm:$0xf]
      %v1210 = vld [vmem:[%s1198 + $0x2c] sm:$0xf]
      %v1211 = vld [vmem:[%s1198 + $0x30] sm:$0xf]
      %v1212 = vld [vmem:[%s1198 + $0x34] sm:$0xf]
      %v1213 = vld [vmem:[%s1198 + $0x38] sm:$0xf]
      %v1214 = vld [vmem:[%s1198 + $0x3c] sm:$0xf]
      %v1215 = vld [vmem:[%s4 + $0x1] sm:$0x1]
      %v1216 = vlaneseq
      %v1217 = vshrl.u32 %v1216, 7
      %v1218 = vsub.s32 0, %v1217
      %v1219 = vrot.slane %v1215, %v1218
      %v1236 = vunpack.c.l.b16 %v1199
      %v1237 = vunpack.c.l.b16 %v1200
      %v1238 = vunpack.c.l.b16 %v1201
      %v1239 = vunpack.c.l.b16 %v1202
      %v1240 = vunpack.c.l.b16 %v1203
      %v1241 = vunpack.c.l.b16 %v1204
      %v1242 = vunpack.c.l.b16 %v1205
      %v1243 = vunpack.c.l.b16 %v1206
      %v1244 = vunpack.c.l.b16 %v1207
      %v1245 = vunpack.c.l.b16 %v1208
      %v1246 = vunpack.c.l.b16 %v1209
      %v1247 = vunpack.c.l.b16 %v1210
      %v1248 = vunpack.c.l.b16 %v1211
      %v1249 = vunpack.c.l.b16 %v1212
      %v1250 = vunpack.c.l.b16 %v1213
      %v1251 = vunpack.c.l.b16 %v1214
      %v1252 = vpack.c.b16 %v1237, %v1236
      %v1253 = vpack.c.b16 %v1239, %v1238
      %v1254 = vpack.c.b16 %v1241, %v1240
      %v1255 = vpack.c.b16 %v1243, %v1242
      %v1256 = vpack.c.b16 %v1245, %v1244
      %v1257 = vpack.c.b16 %v1247, %v1246
      %v1258 = vpack.c.b16 %v1249, %v1248
      %v1259 = vpack.c.b16 %v1251, %v1250
      %1268 = vmatprep.subr.bf16.mxu0 0
      %1269 = vmatpush1.bf16.msra.mxu0 %v1252
      %1270 = vmatprep.subr.bf16.mxu0 0
      %1271 = vmatpush1.bf16.msra.mxu0 %v1253
      %1272 = vmatprep.subr.bf16.mxu0 0
      %1273 = vmatpush1.bf16.msra.mxu0 %v1254
      %1274 = vmatprep.subr.bf16.mxu0 0
      %1275 = vmatpush1.bf16.msra.mxu0 %v1255
      %1276 = vmatprep.subr.bf16.mxu0 0
      %1277 = vmatpush1.bf16.msra.mxu0 %v1256
      %1278 = vmatprep.subr.bf16.mxu0 0
      %1279 = vmatpush1.bf16.msra.mxu0 %v1257
      %1280 = vmatprep.subr.bf16.mxu0 0
      %1281 = vmatpush1.bf16.msra.mxu0 %v1258
      %1282 = vmatprep.subr.bf16.mxu0 0
      %1283 = vmatpush1.bf16.msra.mxu0 %v1259
      %1284 = vmatprep.subr.bf16.mxu0 0
      %1285 = vmatpush1.bf16.msra.mxu0 0
      %1286 = vmatprep.subr.bf16.mxu0 0
      %1287 = vmatpush1.bf16.msra.mxu0 0
      %1288 = vmatprep.subr.bf16.mxu0 0
      %1289 = vmatpush1.bf16.msra.mxu0 0
      %1290 = vmatprep.subr.bf16.mxu0 0
      %1291 = vmatpush1.bf16.msra.mxu0 0
      %1292 = vmatprep.subr.bf16.mxu0 0
      %1293 = vmatpush1.bf16.msra.mxu0 0
      %1294 = vmatprep.subr.bf16.mxu0 0
      %1295 = vmatpush1.bf16.msra.mxu0 0
      %1296 = vmatprep.subr.bf16.mxu0 0
      %1297 = vmatpush1.bf16.msra.mxu0 0
      %1298 = vmatprep.subr.bf16.mxu0 0
      %1299 = vmatpush1.bf16.msra.mxu0 0
      %1300 = vmatprep.mubr.bf16.mxu0 0
      %1301 = vmatmul.mubr.bf16.gmra.mrb[0].mxu0 %v1182
      %v1302 = vpop.f32.mrb[0].mxu0
      %v1303 = vadd.f32 %v1219, %v1302
      %v1304 = vpop.f32.mrb[0].mxu0
      %v1305 = vpop.f32.mrb[0].mxu0
      %v1306 = vadd.f32 %v1219, %v1305
      %v1307 = vpop.f32.mrb[0].mxu0
      %1308 = vmatprep.mubr.bf16.mxu0 0
      %1309 = vmatmul.mubr.bf16.gmra.mrb[0].mxu0 %v1183
      %v1310 = vpop.f32.mrb[0].mxu0
      %v1311 = vadd.f32 %v1219, %v1310
      %v1312 = vpop.f32.mrb[0].mxu0
      %v1313 = vpop.f32.mrb[0].mxu0
      %v1314 = vadd.f32 %v1219, %v1313
      %v1315 = vpop.f32.mrb[0].mxu0
      %1316 = vmatprep.mubr.bf16.mxu0 0
      %1317 = vmatmul.mubr.bf16.gmra.mrb[0].mxu0 %v1184
      %v1318 = vpop.f32.mrb[0].mxu0
      %v1319 = vadd.f32 %v1219, %v1318
      %v1320 = vpop.f32.mrb[0].mxu0
      %v1321 = vpop.f32.mrb[0].mxu0
      %v1322 = vadd.f32 %v1219, %v1321
      %v1323 = vpop.f32.mrb[0].mxu0
      %1324 = vmatprep.mubr.bf16.mxu0 0
      %1325 = vmatmul.mubr.bf16.gmra.mrb[0].mxu0 %v1185
      %v1326 = vpop.f32.mrb[0].mxu0
      %v1327 = vadd.f32 %v1219, %v1326
      %v1328 = vpop.f32.mrb[0].mxu0
      %v1329 = vpop.f32.mrb[0].mxu0
      %v1330 = vadd.f32 %v1219, %v1329
      %v1331 = vpop.f32.mrb[0].mxu0
      %1332 = vmatprep.mubr.bf16.mxu0 0
      %1333 = vmatmul.mubr.bf16.gmra.mrb[0].mxu0 %v1186
      %v1334 = vpop.f32.mrb[0].mxu0
      %v1335 = vadd.f32 %v1219, %v1334
      %v1336 = vpop.f32.mrb[0].mxu0
      %v1337 = vpop.f32.mrb[0].mxu0
      %v1338 = vadd.f32 %v1219, %v1337
      %v1339 = vpop.f32.mrb[0].mxu0
      %1340 = vmatprep.mubr.bf16.mxu0 0
      %1341 = vmatmul.mubr.bf16.gmra.mrb[0].mxu0 %v1187
      %v1342 = vpop.f32.mrb[0].mxu0
      %v1343 = vadd.f32 %v1219, %v1342
      %v1344 = vpop.f32.mrb[0].mxu0
      %v1345 = vpop.f32.mrb[0].mxu0
      %v1346 = vadd.f32 %v1219, %v1345
      %v1347 = vpop.f32.mrb[0].mxu0
      %1348 = vmatprep.mubr.bf16.mxu0 0
      %1349 = vmatmul.mubr.bf16.gmra.mrb[0].mxu0 %v1188
      %v1350 = vpop.f32.mrb[0].mxu0
      %v1351 = vadd.f32 %v1219, %v1350
      %v1352 = vpop.f32.mrb[0].mxu0
      %v1353 = vpop.f32.mrb[0].mxu0
      %v1354 = vadd.f32 %v1219, %v1353
      %v1355 = vpop.f32.mrb[0].mxu0
      %1356 = vmatprep.mubr.bf16.mxu0 0
      %1357 = vmatmul.mubr.bf16.gmra.mrb[0].mxu0 %v1189
      %v1358 = vpop.f32.mrb[0].mxu0
      %v1359 = vadd.f32 %v1219, %v1358
      %v1360 = vpop.f32.mrb[0].mxu0
      %v1361 = vpop.f32.mrb[0].mxu0
      %v1362 = vadd.f32 %v1219, %v1361
      %v1363 = vpop.f32.mrb[0].mxu0
      %1364 = vmatprep.mubr.bf16.mxu0 0
      %1365 = vmatmul.mubr.bf16.gmra.mrb[0].mxu0 %v1190
      %v1366 = vpop.f32.mrb[0].mxu0
      %v1367 = vadd.f32 %v1219, %v1366
      %v1368 = vpop.f32.mrb[0].mxu0
      %v1369 = vpop.f32.mrb[0].mxu0
      %v1370 = vadd.f32 %v1219, %v1369
      %v1371 = vpop.f32.mrb[0].mxu0
      %1372 = vmatprep.mubr.bf16.mxu0 0
      %1373 = vmatmul.mubr.bf16.gmra.mrb[0].mxu0 %v1191
      %v1374 = vpop.f32.mrb[0].mxu0
      %v1375 = vadd.f32 %v1219, %v1374
      %v1376 = vpop.f32.mrb[0].mxu0
      %v1377 = vpop.f32.mrb[0].mxu0
      %v1378 = vadd.f32 %v1219, %v1377
      %v1379 = vpop.f32.mrb[0].mxu0
      %1380 = vmatprep.mubr.bf16.mxu0 0
      %1381 = vmatmul.mubr.bf16.gmra.mrb[0].mxu0 %v1192
      %v1382 = vpop.f32.mrb[0].mxu0
      %v1383 = vadd.f32 %v1219, %v1382
      %v1384 = vpop.f32.mrb[0].mxu0
      %v1385 = vpop.f32.mrb[0].mxu0
      %v1386 = vadd.f32 %v1219, %v1385
      %v1387 = vpop.f32.mrb[0].mxu0
      %1388 = vmatprep.mubr.bf16.mxu0 0
      %1389 = vmatmul.mubr.bf16.gmra.mrb[0].mxu0 %v1193
      %v1390 = vpop.f32.mrb[0].mxu0
      %v1391 = vadd.f32 %v1219, %v1390
      %v1392 = vpop.f32.mrb[0].mxu0
      %v1393 = vpop.f32.mrb[0].mxu0
      %v1394 = vadd.f32 %v1219, %v1393
      %v1395 = vpop.f32.mrb[0].mxu0
      %1396 = vmatprep.mubr.bf16.mxu0 0
      %1397 = vmatmul.mubr.bf16.gmra.mrb[0].mxu0 %v1194
      %v1398 = vpop.f32.mrb[0].mxu0
      %v1399 = vadd.f32 %v1219, %v1398
      %v1400 = vpop.f32.mrb[0].mxu0
      %v1401 = vpop.f32.mrb[0].mxu0
      %v1402 = vadd.f32 %v1219, %v1401
      %v1403 = vpop.f32.mrb[0].mxu0
      %1404 = vmatprep.mubr.bf16.mxu0 0
      %1405 = vmatmul.mubr.bf16.gmra.mrb[0].mxu0 %v1195
      %v1406 = vpop.f32.mrb[0].mxu0
      %v1407 = vadd.f32 %v1219, %v1406
      %v1408 = vpop.f32.mrb[0].mxu0
      %v1409 = vpop.f32.mrb[0].mxu0
      %v1410 = vadd.f32 %v1219, %v1409
      %v1411 = vpop.f32.mrb[0].mxu0
      %1412 = vmatprep.mubr.bf16.mxu0 0
      %1413 = vmatmul.mubr.bf16.gmra.mrb[0].mxu0 %v1196
      %v1414 = vpop.f32.mrb[0].mxu0
      %v1415 = vadd.f32 %v1219, %v1414
      %v1416 = vpop.f32.mrb[0].mxu0
      %v1417 = vpop.f32.mrb[0].mxu0
      %v1418 = vadd.f32 %v1219, %v1417
      %v1419 = vpop.f32.mrb[0].mxu0
      %1420 = vmatprep.mubr.bf16.mxu0 0
      %1421 = vmatmul.mubr.bf16.gmra.mrb[0].mxu0 %v1197
      %v1422 = vpop.f32.mrb[0].mxu0
      %v1423 = vadd.f32 %v1219, %v1422
      %v1424 = vpop.f32.mrb[0].mxu0
      %v1425 = vpop.f32.mrb[0].mxu0
      %v1426 = vadd.f32 %v1219, %v1425
      %v1427 = vpop.f32.mrb[0].mxu0
      %1428 = vdwg.mxu0
      %v1429 = vadd.f32 %v1303, %v570
      %v1430 = vadd.f32 %v1306, %v573
      %v1431 = vadd.f32 %v1311, %v578
      %v1432 = vadd.f32 %v1314, %v581
      %v1433 = vadd.f32 %v1319, %v586
      %v1434 = vadd.f32 %v1322, %v589
      %v1435 = vadd.f32 %v1327, %v594
      %v1436 = vadd.f32 %v1330, %v597
      %v1437 = vadd.f32 %v1335, %v602
      %v1438 = vadd.f32 %v1338, %v605
      %v1439 = vadd.f32 %v1343, %v610
      %v1440 = vadd.f32 %v1346, %v613
      %v1441 = vadd.f32 %v1351, %v618
      %v1442 = vadd.f32 %v1354, %v621
      %v1443 = vadd.f32 %v1359, %v626
      %v1444 = vadd.f32 %v1362, %v629
      %v1445 = vadd.f32 %v1367, %v634
      %v1446 = vadd.f32 %v1370, %v637
      %v1447 = vadd.f32 %v1375, %v642
      %v1448 = vadd.f32 %v1378, %v645
      %v1449 = vadd.f32 %v1383, %v650
      %v1450 = vadd.f32 %v1386, %v653
      %v1451 = vadd.f32 %v1391, %v658
      %v1452 = vadd.f32 %v1394, %v661
      %v1453 = vadd.f32 %v1399, %v666
      %v1454 = vadd.f32 %v1402, %v669
      %v1455 = vadd.f32 %v1407, %v674
      %v1456 = vadd.f32 %v1410, %v677
      %v1457 = vadd.f32 %v1415, %v682
      %v1458 = vadd.f32 %v1418, %v685
      %v1459 = vadd.f32 %v1423, %v690
      %v1460 = vadd.f32 %v1426, %v693
      %v1461 = vmax.f32 %v1429, 0.0
      %v1462 = vmax.f32 %v1430, 0.0
      %v1463 = vmax.f32 %v1431, 0.0
      %v1464 = vmax.f32 %v1432, 0.0
      %v1465 = vmax.f32 %v1433, 0.0
      %v1466 = vmax.f32 %v1434, 0.0
      %v1467 = vmax.f32 %v1435, 0.0
      %v1468 = vmax.f32 %v1436, 0.0
      %v1469 = vmax.f32 %v1437, 0.0
      %v1470 = vmax.f32 %v1438, 0.0
      %v1471 = vmax.f32 %v1439, 0.0
      %v1472 = vmax.f32 %v1440, 0.0
      %v1473 = vmax.f32 %v1441, 0.0
      %v1474 = vmax.f32 %v1442, 0.0
      %v1475 = vmax.f32 %v1443, 0.0
      %v1476 = vmax.f32 %v1444, 0.0
      %v1477 = vmax.f32 %v1445, 0.0
      %v1478 = vmax.f32 %v1446, 0.0
      %v1479 = vmax.f32 %v1447, 0.0
      %v1480 = vmax.f32 %v1448, 0.0
      %v1481 = vmax.f32 %v1449, 0.0
      %v1482 = vmax.f32 %v1450, 0.0
      %v1483 = vmax.f32 %v1451, 0.0
      %v1484 = vmax.f32 %v1452, 0.0
      %v1485 = vmax.f32 %v1453, 0.0
      %v1486 = vmax.f32 %v1454, 0.0
      %v1487 = vmax.f32 %v1455, 0.0
      %v1488 = vmax.f32 %v1456, 0.0
      %v1489 = vmax.f32 %v1457, 0.0
      %v1490 = vmax.f32 %v1458, 0.0
      %v1491 = vmax.f32 %v1459, 0.0
      %v1492 = vmax.f32 %v1460, 0.0
      %v1493 = vpack.c.bf16 %v1462, %v1461
      %v1494 = vpack.c.bf16 %v1464, %v1463
      %v1495 = vpack.c.bf16 %v1466, %v1465
      %v1496 = vpack.c.bf16 %v1468, %v1467
      %v1497 = vpack.c.bf16 %v1470, %v1469
      %v1498 = vpack.c.bf16 %v1472, %v1471
      %v1499 = vpack.c.bf16 %v1474, %v1473
      %v1500 = vpack.c.bf16 %v1476, %v1475
      %v1501 = vpack.c.bf16 %v1478, %v1477
      %v1502 = vpack.c.bf16 %v1480, %v1479
      %v1503 = vpack.c.bf16 %v1482, %v1481
      %v1504 = vpack.c.bf16 %v1484, %v1483
      %v1505 = vpack.c.bf16 %v1486, %v1485
      %v1506 = vpack.c.bf16 %v1488, %v1487
      %v1507 = vpack.c.bf16 %v1490, %v1489
      %v1508 = vpack.c.bf16 %v1492, %v1491
      %v1509 = vld [vmem:[%s6] sm:$0xf]
      %v1510 = vld [vmem:[%s6 + $0x4] sm:$0xf]
      %v1511 = vld [vmem:[%s6 + $0x8] sm:$0xf]
      %v1512 = vld [vmem:[%s6 + $0xc] sm:$0xf]
      %v1513 = vld [vmem:[%s6 + $0x10] sm:$0xf]
      %v1514 = vld [vmem:[%s6 + $0x14] sm:$0xf]
      %v1515 = vld [vmem:[%s6 + $0x18] sm:$0xf]
      %v1516 = vld [vmem:[%s6 + $0x1c] sm:$0xf]
      %v1517 = vld [vmem:[%s6 + $0x20] sm:$0xf]
      %v1518 = vld [vmem:[%s6 + $0x24] sm:$0xf]
      %v1519 = vld [vmem:[%s6 + $0x28] sm:$0xf]
      %v1520 = vld [vmem:[%s6 + $0x2c] sm:$0xf]
      %v1521 = vld [vmem:[%s6 + $0x30] sm:$0xf]
      %v1522 = vld [vmem:[%s6 + $0x34] sm:$0xf]
      %v1523 = vld [vmem:[%s6 + $0x38] sm:$0xf]
      %v1524 = vld [vmem:[%s6 + $0x3c] sm:$0xf]
      %v1525 = vld [vmem:[%s7] sm:$0x1]
      %v1526 = vlaneseq
      %v1527 = vshrl.u32 %v1526, 7
      %v1528 = vsub.s32 0, %v1527
      %v1529 = vrot.slane %v1525, %v1528
      %v1546 = vunpack.c.l.b16 %v1509
      %v1547 = vunpack.c.l.b16 %v1510
      %v1548 = vunpack.c.l.b16 %v1511
      %v1549 = vunpack.c.l.b16 %v1512
      %v1550 = vunpack.c.l.b16 %v1513
      %v1551 = vunpack.c.l.b16 %v1514
      %v1552 = vunpack.c.l.b16 %v1515
      %v1553 = vunpack.c.l.b16 %v1516
      %v1554 = vunpack.c.l.b16 %v1517
      %v1555 = vunpack.c.l.b16 %v1518
      %v1556 = vunpack.c.l.b16 %v1519
      %v1557 = vunpack.c.l.b16 %v1520
      %v1558 = vunpack.c.l.b16 %v1521
      %v1559 = vunpack.c.l.b16 %v1522
      %v1560 = vunpack.c.l.b16 %v1523
      %v1561 = vunpack.c.l.b16 %v1524
      %v1562 = vpack.c.b16 %v1547, %v1546
      %v1563 = vpack.c.b16 %v1549, %v1548
      %v1564 = vpack.c.b16 %v1551, %v1550
      %v1565 = vpack.c.b16 %v1553, %v1552
      %v1566 = vpack.c.b16 %v1555, %v1554
      %v1567 = vpack.c.b16 %v1557, %v1556
      %v1568 = vpack.c.b16 %v1559, %v1558
      %v1569 = vpack.c.b16 %v1561, %v1560
      %1578 = vmatprep.subr.bf16.mxu0 0
      %1579 = vmatpush1.bf16.msra.mxu0 %v1562
      %1580 = vmatprep.subr.bf16.mxu0 0
      %1581 = vmatpush1.bf16.msra.mxu0 %v1563
      %1582 = vmatprep.subr.bf16.mxu0 0
      %1583 = vmatpush1.bf16.msra.mxu0 %v1564
      %1584 = vmatprep.subr.bf16.mxu0 0
      %1585 = vmatpush1.bf16.msra.mxu0 %v1565
      %1586 = vmatprep.subr.bf16.mxu0 0
      %1587 = vmatpush1.bf16.msra.mxu0 %v1566
      %1588 = vmatprep.subr.bf16.mxu0 0
      %1589 = vmatpush1.bf16.msra.mxu0 %v1567
      %1590 = vmatprep.subr.bf16.mxu0 0
      %1591 = vmatpush1.bf16.msra.mxu0 %v1568
      %1592 = vmatprep.subr.bf16.mxu0 0
      %1593 = vmatpush1.bf16.msra.mxu0 %v1569
      %1594 = vmatprep.subr.bf16.mxu0 0
      %1595 = vmatpush1.bf16.msra.mxu0 0
      %1596 = vmatprep.subr.bf16.mxu0 0
      %1597 = vmatpush1.bf16.msra.mxu0 0
      %1598 = vmatprep.subr.bf16.mxu0 0
      %1599 = vmatpush1.bf16.msra.mxu0 0
      %1600 = vmatprep.subr.bf16.mxu0 0
      %1601 = vmatpush1.bf16.msra.mxu0 0
      %1602 = vmatprep.subr.bf16.mxu0 0
      %1603 = vmatpush1.bf16.msra.mxu0 0
      %1604 = vmatprep.subr.bf16.mxu0 0
      %1605 = vmatpush1.bf16.msra.mxu0 0
      %1606 = vmatprep.subr.bf16.mxu0 0
      %1607 = vmatpush1.bf16.msra.mxu0 0
      %1608 = vmatprep.subr.bf16.mxu0 0
      %1609 = vmatpush1.bf16.msra.mxu0 0
      %1610 = vmatprep.mubr.bf16.mxu0 0
      %1611 = vmatmul.mubr.bf16.gmra.mrb[0].mxu0 %v1493
      %v1612 = vpop.f32.mrb[0].mxu0
      %v1613 = vadd.f32 %v1529, %v1612
      %v1614 = vpop.f32.mrb[0].mxu0
      %v1615 = vpop.f32.mrb[0].mxu0
      %v1616 = vadd.f32 %v1529, %v1615
      %v1617 = vpop.f32.mrb[0].mxu0
      %1618 = vmatprep.mubr.bf16.mxu0 0
      %1619 = vmatmul.mubr.bf16.gmra.mrb[0].mxu0 %v1494
      %v1620 = vpop.f32.mrb[0].mxu0
      %v1621 = vadd.f32 %v1529, %v1620
      %v1622 = vpop.f32.mrb[0].mxu0
      %v1623 = vpop.f32.mrb[0].mxu0
      %v1624 = vadd.f32 %v1529, %v1623
      %v1625 = vpop.f32.mrb[0].mxu0
      %1626 = vmatprep.mubr.bf16.mxu0 0
      %1627 = vmatmul.mubr.bf16.gmra.mrb[0].mxu0 %v1495
      %v1628 = vpop.f32.mrb[0].mxu0
      %v1629 = vadd.f32 %v1529, %v1628
      %v1630 = vpop.f32.mrb[0].mxu0
      %v1631 = vpop.f32.mrb[0].mxu0
      %v1632 = vadd.f32 %v1529, %v1631
      %v1633 = vpop.f32.mrb[0].mxu0
      %1634 = vmatprep.mubr.bf16.mxu0 0
      %1635 = vmatmul.mubr.bf16.gmra.mrb[0].mxu0 %v1496
      %v1636 = vpop.f32.mrb[0].mxu0
      %v1637 = vadd.f32 %v1529, %v1636
      %v1638 = vpop.f32.mrb[0].mxu0
      %v1639 = vpop.f32.mrb[0].mxu0
      %v1640 = vadd.f32 %v1529, %v1639
      %v1641 = vpop.f32.mrb[0].mxu0
      %1642 = vmatprep.mubr.bf16.mxu0 0
      %1643 = vmatmul.mubr.bf16.gmra.mrb[0].mxu0 %v1497
      %v1644 = vpop.f32.mrb[0].mxu0
      %v1645 = vadd.f32 %v1529, %v1644
      %v1646 = vpop.f32.mrb[0].mxu0
      %v1647 = vpop.f32.mrb[0].mxu0
      %v1648 = vadd.f32 %v1529, %v1647
      %v1649 = vpop.f32.mrb[0].mxu0
      %1650 = vmatprep.mubr.bf16.mxu0 0
      %1651 = vmatmul.mubr.bf16.gmra.mrb[0].mxu0 %v1498
      %v1652 = vpop.f32.mrb[0].mxu0
      %v1653 = vadd.f32 %v1529, %v1652
      %v1654 = vpop.f32.mrb[0].mxu0
      %v1655 = vpop.f32.mrb[0].mxu0
      %v1656 = vadd.f32 %v1529, %v1655
      %v1657 = vpop.f32.mrb[0].mxu0
      %1658 = vmatprep.mubr.bf16.mxu0 0
      %1659 = vmatmul.mubr.bf16.gmra.mrb[0].mxu0 %v1499
      %v1660 = vpop.f32.mrb[0].mxu0
      %v1661 = vadd.f32 %v1529, %v1660
      %v1662 = vpop.f32.mrb[0].mxu0
      %v1663 = vpop.f32.mrb[0].mxu0
      %v1664 = vadd.f32 %v1529, %v1663
      %v1665 = vpop.f32.mrb[0].mxu0
      %1666 = vmatprep.mubr.bf16.mxu0 0
      %1667 = vmatmul.mubr.bf16.gmra.mrb[0].mxu0 %v1500
      %v1668 = vpop.f32.mrb[0].mxu0
      %v1669 = vadd.f32 %v1529, %v1668
      %v1670 = vpop.f32.mrb[0].mxu0
      %v1671 = vpop.f32.mrb[0].mxu0
      %v1672 = vadd.f32 %v1529, %v1671
      %v1673 = vpop.f32.mrb[0].mxu0
      %1674 = vmatprep.mubr.bf16.mxu0 0
      %1675 = vmatmul.mubr.bf16.gmra.mrb[0].mxu0 %v1501
      %v1676 = vpop.f32.mrb[0].mxu0
      %v1677 = vadd.f32 %v1529, %v1676
      %v1678 = vpop.f32.mrb[0].mxu0
      %v1679 = vpop.f32.mrb[0].mxu0
      %v1680 = vadd.f32 %v1529, %v1679
      %v1681 = vpop.f32.mrb[0].mxu0
      %1682 = vmatprep.mubr.bf16.mxu0 0
      %1683 = vmatmul.mubr.bf16.gmra.mrb[0].mxu0 %v1502
      %v1684 = vpop.f32.mrb[0].mxu0
      %v1685 = vadd.f32 %v1529, %v1684
      %v1686 = vpop.f32.mrb[0].mxu0
      %v1687 = vpop.f32.mrb[0].mxu0
      %v1688 = vadd.f32 %v1529, %v1687
      %v1689 = vpop.f32.mrb[0].mxu0
      %1690 = vmatprep.mubr.bf16.mxu0 0
      %1691 = vmatmul.mubr.bf16.gmra.mrb[0].mxu0 %v1503
      %v1692 = vpop.f32.mrb[0].mxu0
      %v1693 = vadd.f32 %v1529, %v1692
      %v1694 = vpop.f32.mrb[0].mxu0
      %v1695 = vpop.f32.mrb[0].mxu0
      %v1696 = vadd.f32 %v1529, %v1695
      %v1697 = vpop.f32.mrb[0].mxu0
      %1698 = vmatprep.mubr.bf16.mxu0 0
      %1699 = vmatmul.mubr.bf16.gmra.mrb[0].mxu0 %v1504
      %v1700 = vpop.f32.mrb[0].mxu0
      %v1701 = vadd.f32 %v1529, %v1700
      %v1702 = vpop.f32.mrb[0].mxu0
      %v1703 = vpop.f32.mrb[0].mxu0
      %v1704 = vadd.f32 %v1529, %v1703
      %v1705 = vpop.f32.mrb[0].mxu0
      %1706 = vmatprep.mubr.bf16.mxu0 0
      %1707 = vmatmul.mubr.bf16.gmra.mrb[0].mxu0 %v1505
      %v1708 = vpop.f32.mrb[0].mxu0
      %v1709 = vadd.f32 %v1529, %v1708
      %v1710 = vpop.f32.mrb[0].mxu0
      %v1711 = vpop.f32.mrb[0].mxu0
      %v1712 = vadd.f32 %v1529, %v1711
      %v1713 = vpop.f32.mrb[0].mxu0
      %1714 = vmatprep.mubr.bf16.mxu0 0
      %1715 = vmatmul.mubr.bf16.gmra.mrb[0].mxu0 %v1506
      %v1716 = vpop.f32.mrb[0].mxu0
      %v1717 = vadd.f32 %v1529, %v1716
      %v1718 = vpop.f32.mrb[0].mxu0
      %v1719 = vpop.f32.mrb[0].mxu0
      %v1720 = vadd.f32 %v1529, %v1719
      %v1721 = vpop.f32.mrb[0].mxu0
      %1722 = vmatprep.mubr.bf16.mxu0 0
      %1723 = vmatmul.mubr.bf16.gmra.mrb[0].mxu0 %v1507
      %v1724 = vpop.f32.mrb[0].mxu0
      %v1725 = vadd.f32 %v1529, %v1724
      %v1726 = vpop.f32.mrb[0].mxu0
      %v1727 = vpop.f32.mrb[0].mxu0
      %v1728 = vadd.f32 %v1529, %v1727
      %v1729 = vpop.f32.mrb[0].mxu0
      %1730 = vmatprep.mubr.bf16.mxu0 0
      %1731 = vmatmul.mubr.bf16.gmra.mrb[0].mxu0 %v1508
      %v1732 = vpop.f32.mrb[0].mxu0
      %v1733 = vadd.f32 %v1529, %v1732
      %v1734 = vpop.f32.mrb[0].mxu0
      %v1735 = vpop.f32.mrb[0].mxu0
      %v1736 = vadd.f32 %v1529, %v1735
      %v1737 = vpop.f32.mrb[0].mxu0
      %1738 = vdwg.mxu0
      %v1739 = vmax.f32 %v1613, 0.0
      %v1740 = vmax.f32 %v1616, 0.0
      %v1741 = vmax.f32 %v1621, 0.0
      %v1742 = vmax.f32 %v1624, 0.0
      %v1743 = vmax.f32 %v1629, 0.0
      %v1744 = vmax.f32 %v1632, 0.0
      %v1745 = vmax.f32 %v1637, 0.0
      %v1746 = vmax.f32 %v1640, 0.0
      %v1747 = vmax.f32 %v1645, 0.0
      %v1748 = vmax.f32 %v1648, 0.0
      %v1749 = vmax.f32 %v1653, 0.0
      %v1750 = vmax.f32 %v1656, 0.0
      %v1751 = vmax.f32 %v1661, 0.0
      %v1752 = vmax.f32 %v1664, 0.0
      %v1753 = vmax.f32 %v1669, 0.0
      %v1754 = vmax.f32 %v1672, 0.0
      %v1755 = vmax.f32 %v1677, 0.0
      %v1756 = vmax.f32 %v1680, 0.0
      %v1757 = vmax.f32 %v1685, 0.0
      %v1758 = vmax.f32 %v1688, 0.0
      %v1759 = vmax.f32 %v1693, 0.0
      %v1760 = vmax.f32 %v1696, 0.0
      %v1761 = vmax.f32 %v1701, 0.0
      %v1762 = vmax.f32 %v1704, 0.0
      %v1763 = vmax.f32 %v1709, 0.0
      %v1764 = vmax.f32 %v1712, 0.0
      %v1765 = vmax.f32 %v1717, 0.0
      %v1766 = vmax.f32 %v1720, 0.0
      %v1767 = vmax.f32 %v1725, 0.0
      %v1768 = vmax.f32 %v1728, 0.0
      %v1769 = vmax.f32 %v1733, 0.0
      %v1770 = vmax.f32 %v1736, 0.0
      %v1771 = vpack.c.bf16 %v1740, %v1739
      %v1772 = vpack.c.bf16 %v1742, %v1741
      %v1773 = vpack.c.bf16 %v1744, %v1743
      %v1774 = vpack.c.bf16 %v1746, %v1745
      %v1775 = vpack.c.bf16 %v1748, %v1747
      %v1776 = vpack.c.bf16 %v1750, %v1749
      %v1777 = vpack.c.bf16 %v1752, %v1751
      %v1778 = vpack.c.bf16 %v1754, %v1753
      %v1779 = vpack.c.bf16 %v1756, %v1755
      %v1780 = vpack.c.bf16 %v1758, %v1757
      %v1781 = vpack.c.bf16 %v1760, %v1759
      %v1782 = vpack.c.bf16 %v1762, %v1761
      %v1783 = vpack.c.bf16 %v1764, %v1763
      %v1784 = vpack.c.bf16 %v1766, %v1765
      %v1785 = vpack.c.bf16 %v1768, %v1767
      %v1786 = vpack.c.bf16 %v1770, %v1769
      %s1787 = scalar_lea.vmem %s6, 64
      %v1788 = vld [vmem:[%s1787] sm:$0xf]
      %v1789 = vld [vmem:[%s1787 + $0x4] sm:$0xf]
      %v1790 = vld [vmem:[%s1787 + $0x8] sm:$0xf]
      %v1791 = vld [vmem:[%s1787 + $0xc] sm:$0xf]
      %v1792 = vld [vmem:[%s1787 + $0x10] sm:$0xf]
      %v1793 = vld [vmem:[%s1787 + $0x14] sm:$0xf]
      %v1794 = vld [vmem:[%s1787 + $0x18] sm:$0xf]
      %v1795 = vld [vmem:[%s1787 + $0x1c] sm:$0xf]
      %v1796 = vld [vmem:[%s1787 + $0x20] sm:$0xf]
      %v1797 = vld [vmem:[%s1787 + $0x24] sm:$0xf]
      %v1798 = vld [vmem:[%s1787 + $0x28] sm:$0xf]
      %v1799 = vld [vmem:[%s1787 + $0x2c] sm:$0xf]
      %v1800 = vld [vmem:[%s1787 + $0x30] sm:$0xf]
      %v1801 = vld [vmem:[%s1787 + $0x34] sm:$0xf]
      %v1802 = vld [vmem:[%s1787 + $0x38] sm:$0xf]
      %v1803 = vld [vmem:[%s1787 + $0x3c] sm:$0xf]
      %v1804 = vld [vmem:[%s7 + $0x1] sm:$0x1]
      %v1805 = vlaneseq
      %v1806 = vshrl.u32 %v1805, 7
      %v1807 = vsub.s32 0, %v1806
      %v1808 = vrot.slane %v1804, %v1807
      %v1825 = vunpack.c.l.b16 %v1788
      %v1826 = vunpack.c.l.b16 %v1789
      %v1827 = vunpack.c.l.b16 %v1790
      %v1828 = vunpack.c.l.b16 %v1791
      %v1829 = vunpack.c.l.b16 %v1792
      %v1830 = vunpack.c.l.b16 %v1793
      %v1831 = vunpack.c.l.b16 %v1794
      %v1832 = vunpack.c.l.b16 %v1795
      %v1833 = vunpack.c.l.b16 %v1796
      %v1834 = vunpack.c.l.b16 %v1797
      %v1835 = vunpack.c.l.b16 %v1798
      %v1836 = vunpack.c.l.b16 %v1799
      %v1837 = vunpack.c.l.b16 %v1800
      %v1838 = vunpack.c.l.b16 %v1801
      %v1839 = vunpack.c.l.b16 %v1802
      %v1840 = vunpack.c.l.b16 %v1803
      %v1841 = vpack.c.b16 %v1826, %v1825
      %v1842 = vpack.c.b16 %v1828, %v1827
      %v1843 = vpack.c.b16 %v1830, %v1829
      %v1844 = vpack.c.b16 %v1832, %v1831
      %v1845 = vpack.c.b16 %v1834, %v1833
      %v1846 = vpack.c.b16 %v1836, %v1835
      %v1847 = vpack.c.b16 %v1838, %v1837
      %v1848 = vpack.c.b16 %v1840, %v1839
      %1857 = vmatprep.subr.bf16.mxu0 0
      %1858 = vmatpush1.bf16.msra.mxu0 %v1841
      %1859 = vmatprep.subr.bf16.mxu0 0
      %1860 = vmatpush1.bf16.msra.mxu0 %v1842
      %1861 = vmatprep.subr.bf16.mxu0 0
      %1862 = vmatpush1.bf16.msra.mxu0 %v1843
      %1863 = vmatprep.subr.bf16.mxu0 0
      %1864 = vmatpush1.bf16.msra.mxu0 %v1844
      %1865 = vmatprep.subr.bf16.mxu0 0
      %1866 = vmatpush1.bf16.msra.mxu0 %v1845
      %1867 = vmatprep.subr.bf16.mxu0 0
      %1868 = vmatpush1.bf16.msra.mxu0 %v1846
      %1869 = vmatprep.subr.bf16.mxu0 0
      %1870 = vmatpush1.bf16.msra.mxu0 %v1847
      %1871 = vmatprep.subr.bf16.mxu0 0
      %1872 = vmatpush1.bf16.msra.mxu0 %v1848
      %1873 = vmatprep.subr.bf16.mxu0 0
      %1874 = vmatpush1.bf16.msra.mxu0 0
      %1875 = vmatprep.subr.bf16.mxu0 0
      %1876 = vmatpush1.bf16.msra.mxu0 0
      %1877 = vmatprep.subr.bf16.mxu0 0
      %1878 = vmatpush1.bf16.msra.mxu0 0
      %1879 = vmatprep.subr.bf16.mxu0 0
      %1880 = vmatpush1.bf16.msra.mxu0 0
      %1881 = vmatprep.subr.bf16.mxu0 0
      %1882 = vmatpush1.bf16.msra.mxu0 0
      %1883 = vmatprep.subr.bf16.mxu0 0
      %1884 = vmatpush1.bf16.msra.mxu0 0
      %1885 = vmatprep.subr.bf16.mxu0 0
      %1886 = vmatpush1.bf16.msra.mxu0 0
      %1887 = vmatprep.subr.bf16.mxu0 0
      %1888 = vmatpush1.bf16.msra.mxu0 0
      %1889 = vmatprep.mubr.bf16.mxu0 0
      %1890 = vmatmul.mubr.bf16.gmra.mrb[0].mxu0 %v1771
      %v1891 = vpop.f32.mrb[0].mxu0
      %v1892 = vadd.f32 %v1808, %v1891
      %v1893 = vpop.f32.mrb[0].mxu0
      %v1894 = vpop.f32.mrb[0].mxu0
      %v1895 = vadd.f32 %v1808, %v1894
      %v1896 = vpop.f32.mrb[0].mxu0
      %1897 = vmatprep.mubr.bf16.mxu0 0
      %1898 = vmatmul.mubr.bf16.gmra.mrb[0].mxu0 %v1772
      %v1899 = vpop.f32.mrb[0].mxu0
      %v1900 = vadd.f32 %v1808, %v1899
      %v1901 = vpop.f32.mrb[0].mxu0
      %v1902 = vpop.f32.mrb[0].mxu0
      %v1903 = vadd.f32 %v1808, %v1902
      %v1904 = vpop.f32.mrb[0].mxu0
      %1905 = vmatprep.mubr.bf16.mxu0 0
      %1906 = vmatmul.mubr.bf16.gmra.mrb[0].mxu0 %v1773
      %v1907 = vpop.f32.mrb[0].mxu0
      %v1908 = vadd.f32 %v1808, %v1907
      %v1909 = vpop.f32.mrb[0].mxu0
      %v1910 = vpop.f32.mrb[0].mxu0
      %v1911 = vadd.f32 %v1808, %v1910
      %v1912 = vpop.f32.mrb[0].mxu0
      %1913 = vmatprep.mubr.bf16.mxu0 0
      %1914 = vmatmul.mubr.bf16.gmra.mrb[0].mxu0 %v1774
      %v1915 = vpop.f32.mrb[0].mxu0
      %v1916 = vadd.f32 %v1808, %v1915
      %v1917 = vpop.f32.mrb[0].mxu0
      %v1918 = vpop.f32.mrb[0].mxu0
      %v1919 = vadd.f32 %v1808, %v1918
      %v1920 = vpop.f32.mrb[0].mxu0
      %1921 = vmatprep.mubr.bf16.mxu0 0
      %1922 = vmatmul.mubr.bf16.gmra.mrb[0].mxu0 %v1775
      %v1923 = vpop.f32.mrb[0].mxu0
      %v1924 = vadd.f32 %v1808, %v1923
      %v1925 = vpop.f32.mrb[0].mxu0
      %v1926 = vpop.f32.mrb[0].mxu0
      %v1927 = vadd.f32 %v1808, %v1926
      %v1928 = vpop.f32.mrb[0].mxu0
      %1929 = vmatprep.mubr.bf16.mxu0 0
      %1930 = vmatmul.mubr.bf16.gmra.mrb[0].mxu0 %v1776
      %v1931 = vpop.f32.mrb[0].mxu0
      %v1932 = vadd.f32 %v1808, %v1931
      %v1933 = vpop.f32.mrb[0].mxu0
      %v1934 = vpop.f32.mrb[0].mxu0
      %v1935 = vadd.f32 %v1808, %v1934
      %v1936 = vpop.f32.mrb[0].mxu0
      %1937 = vmatprep.mubr.bf16.mxu0 0
      %1938 = vmatmul.mubr.bf16.gmra.mrb[0].mxu0 %v1777
      %v1939 = vpop.f32.mrb[0].mxu0
      %v1940 = vadd.f32 %v1808, %v1939
      %v1941 = vpop.f32.mrb[0].mxu0
      %v1942 = vpop.f32.mrb[0].mxu0
      %v1943 = vadd.f32 %v1808, %v1942
      %v1944 = vpop.f32.mrb[0].mxu0
      %1945 = vmatprep.mubr.bf16.mxu0 0
      %1946 = vmatmul.mubr.bf16.gmra.mrb[0].mxu0 %v1778
      %v1947 = vpop.f32.mrb[0].mxu0
      %v1948 = vadd.f32 %v1808, %v1947
      %v1949 = vpop.f32.mrb[0].mxu0
      %v1950 = vpop.f32.mrb[0].mxu0
      %v1951 = vadd.f32 %v1808, %v1950
      %v1952 = vpop.f32.mrb[0].mxu0
      %1953 = vmatprep.mubr.bf16.mxu0 0
      %1954 = vmatmul.mubr.bf16.gmra.mrb[0].mxu0 %v1779
      %v1955 = vpop.f32.mrb[0].mxu0
      %v1956 = vadd.f32 %v1808, %v1955
      %v1957 = vpop.f32.mrb[0].mxu0
      %v1958 = vpop.f32.mrb[0].mxu0
      %v1959 = vadd.f32 %v1808, %v1958
      %v1960 = vpop.f32.mrb[0].mxu0
      %1961 = vmatprep.mubr.bf16.mxu0 0
      %1962 = vmatmul.mubr.bf16.gmra.mrb[0].mxu0 %v1780
      %v1963 = vpop.f32.mrb[0].mxu0
      %v1964 = vadd.f32 %v1808, %v1963
      %v1965 = vpop.f32.mrb[0].mxu0
      %v1966 = vpop.f32.mrb[0].mxu0
      %v1967 = vadd.f32 %v1808, %v1966
      %v1968 = vpop.f32.mrb[0].mxu0
      %1969 = vmatprep.mubr.bf16.mxu0 0
      %1970 = vmatmul.mubr.bf16.gmra.mrb[0].mxu0 %v1781
      %v1971 = vpop.f32.mrb[0].mxu0
      %v1972 = vadd.f32 %v1808, %v1971
      %v1973 = vpop.f32.mrb[0].mxu0
      %v1974 = vpop.f32.mrb[0].mxu0
      %v1975 = vadd.f32 %v1808, %v1974
      %v1976 = vpop.f32.mrb[0].mxu0
      %1977 = vmatprep.mubr.bf16.mxu0 0
      %1978 = vmatmul.mubr.bf16.gmra.mrb[0].mxu0 %v1782
      %v1979 = vpop.f32.mrb[0].mxu0
      %v1980 = vadd.f32 %v1808, %v1979
      %v1981 = vpop.f32.mrb[0].mxu0
      %v1982 = vpop.f32.mrb[0].mxu0
      %v1983 = vadd.f32 %v1808, %v1982
      %v1984 = vpop.f32.mrb[0].mxu0
      %1985 = vmatprep.mubr.bf16.mxu0 0
      %1986 = vmatmul.mubr.bf16.gmra.mrb[0].mxu0 %v1783
      %v1987 = vpop.f32.mrb[0].mxu0
      %v1988 = vadd.f32 %v1808, %v1987
      %v1989 = vpop.f32.mrb[0].mxu0
      %v1990 = vpop.f32.mrb[0].mxu0
      %v1991 = vadd.f32 %v1808, %v1990
      %v1992 = vpop.f32.mrb[0].mxu0
      %1993 = vmatprep.mubr.bf16.mxu0 0
      %1994 = vmatmul.mubr.bf16.gmra.mrb[0].mxu0 %v1784
      %v1995 = vpop.f32.mrb[0].mxu0
      %v1996 = vadd.f32 %v1808, %v1995
      %v1997 = vpop.f32.mrb[0].mxu0
      %v1998 = vpop.f32.mrb[0].mxu0
      %v1999 = vadd.f32 %v1808, %v1998
      %v2000 = vpop.f32.mrb[0].mxu0
      %2001 = vmatprep.mubr.bf16.mxu0 0
      %2002 = vmatmul.mubr.bf16.gmra.mrb[0].mxu0 %v1785
      %v2003 = vpop.f32.mrb[0].mxu0
      %v2004 = vadd.f32 %v1808, %v2003
      %v2005 = vpop.f32.mrb[0].mxu0
      %v2006 = vpop.f32.mrb[0].mxu0
      %v2007 = vadd.f32 %v1808, %v2006
      %v2008 = vpop.f32.mrb[0].mxu0
      %2009 = vmatprep.mubr.bf16.mxu0 0
      %2010 = vmatmul.mubr.bf16.gmra.mrb[0].mxu0 %v1786
      %v2011 = vpop.f32.mrb[0].mxu0
      %v2012 = vadd.f32 %v1808, %v2011
      %v2013 = vpop.f32.mrb[0].mxu0
      %v2014 = vpop.f32.mrb[0].mxu0
      %v2015 = vadd.f32 %v1808, %v2014
      %v2016 = vpop.f32.mrb[0].mxu0
      %2017 = vdwg.mxu0
      %v2018 = vmax.f32 %v1892, 0.0
      %v2019 = vmax.f32 %v1895, 0.0
      %v2020 = vmax.f32 %v1900, 0.0
      %v2021 = vmax.f32 %v1903, 0.0
      %v2022 = vmax.f32 %v1908, 0.0
      %v2023 = vmax.f32 %v1911, 0.0
      %v2024 = vmax.f32 %v1916, 0.0
      %v2025 = vmax.f32 %v1919, 0.0
      %v2026 = vmax.f32 %v1924, 0.0
      %v2027 = vmax.f32 %v1927, 0.0
      %v2028 = vmax.f32 %v1932, 0.0
      %v2029 = vmax.f32 %v1935, 0.0
      %v2030 = vmax.f32 %v1940, 0.0
      %v2031 = vmax.f32 %v1943, 0.0
      %v2032 = vmax.f32 %v1948, 0.0
      %v2033 = vmax.f32 %v1951, 0.0
      %v2034 = vmax.f32 %v1956, 0.0
      %v2035 = vmax.f32 %v1959, 0.0
      %v2036 = vmax.f32 %v1964, 0.0
      %v2037 = vmax.f32 %v1967, 0.0
      %v2038 = vmax.f32 %v1972, 0.0
      %v2039 = vmax.f32 %v1975, 0.0
      %v2040 = vmax.f32 %v1980, 0.0
      %v2041 = vmax.f32 %v1983, 0.0
      %v2042 = vmax.f32 %v1988, 0.0
      %v2043 = vmax.f32 %v1991, 0.0
      %v2044 = vmax.f32 %v1996, 0.0
      %v2045 = vmax.f32 %v1999, 0.0
      %v2046 = vmax.f32 %v2004, 0.0
      %v2047 = vmax.f32 %v2007, 0.0
      %v2048 = vmax.f32 %v2012, 0.0
      %v2049 = vmax.f32 %v2015, 0.0
      %v2050 = vpack.c.bf16 %v2019, %v2018
      %v2051 = vpack.c.bf16 %v2021, %v2020
      %v2052 = vpack.c.bf16 %v2023, %v2022
      %v2053 = vpack.c.bf16 %v2025, %v2024
      %v2054 = vpack.c.bf16 %v2027, %v2026
      %v2055 = vpack.c.bf16 %v2029, %v2028
      %v2056 = vpack.c.bf16 %v2031, %v2030
      %v2057 = vpack.c.bf16 %v2033, %v2032
      %v2058 = vpack.c.bf16 %v2035, %v2034
      %v2059 = vpack.c.bf16 %v2037, %v2036
      %v2060 = vpack.c.bf16 %v2039, %v2038
      %v2061 = vpack.c.bf16 %v2041, %v2040
      %v2062 = vpack.c.bf16 %v2043, %v2042
      %v2063 = vpack.c.bf16 %v2045, %v2044
      %v2064 = vpack.c.bf16 %v2047, %v2046
      %v2065 = vpack.c.bf16 %v2049, %v2048
      %s2066 = scalar_lea.vmem %s6, 128
      %v2067 = vld [vmem:[%s2066] sm:$0xf]
      %v2068 = vld [vmem:[%s2066 + $0x4] sm:$0xf]
      %v2069 = vld [vmem:[%s2066 + $0x8] sm:$0xf]
      %v2070 = vld [vmem:[%s2066 + $0xc] sm:$0xf]
      %v2071 = vld [vmem:[%s2066 + $0x10] sm:$0xf]
      %v2072 = vld [vmem:[%s2066 + $0x14] sm:$0xf]
      %v2073 = vld [vmem:[%s2066 + $0x18] sm:$0xf]
      %v2074 = vld [vmem:[%s2066 + $0x1c] sm:$0xf]
      %v2075 = vld [vmem:[%s2066 + $0x20] sm:$0xf]
      %v2076 = vld [vmem:[%s2066 + $0x24] sm:$0xf]
      %v2077 = vld [vmem:[%s2066 + $0x28] sm:$0xf]
      %v2078 = vld [vmem:[%s2066 + $0x2c] sm:$0xf]
      %v2079 = vld [vmem:[%s2066 + $0x30] sm:$0xf]
      %v2080 = vld [vmem:[%s2066 + $0x34] sm:$0xf]
      %v2081 = vld [vmem:[%s2066 + $0x38] sm:$0xf]
      %v2082 = vld [vmem:[%s2066 + $0x3c] sm:$0xf]
      %v2083 = vld [vmem:[%s7 + $0x2] sm:$0x1]
      %v2084 = vlaneseq
      %v2085 = vshrl.u32 %v2084, 7
      %v2086 = vsub.s32 0, %v2085
      %v2087 = vrot.slane %v2083, %v2086
      %v2104 = vunpack.c.l.b16 %v2067
      %v2105 = vunpack.c.l.b16 %v2068
      %v2106 = vunpack.c.l.b16 %v2069
      %v2107 = vunpack.c.l.b16 %v2070
      %v2108 = vunpack.c.l.b16 %v2071
      %v2109 = vunpack.c.l.b16 %v2072
      %v2110 = vunpack.c.l.b16 %v2073
      %v2111 = vunpack.c.l.b16 %v2074
      %v2112 = vunpack.c.l.b16 %v2075
      %v2113 = vunpack.c.l.b16 %v2076
      %v2114 = vunpack.c.l.b16 %v2077
      %v2115 = vunpack.c.l.b16 %v2078
      %v2116 = vunpack.c.l.b16 %v2079
      %v2117 = vunpack.c.l.b16 %v2080
      %v2118 = vunpack.c.l.b16 %v2081
      %v2119 = vunpack.c.l.b16 %v2082
      %v2120 = vpack.c.b16 %v2105, %v2104
      %v2121 = vpack.c.b16 %v2107, %v2106
      %v2122 = vpack.c.b16 %v2109, %v2108
      %v2123 = vpack.c.b16 %v2111, %v2110
      %v2124 = vpack.c.b16 %v2113, %v2112
      %v2125 = vpack.c.b16 %v2115, %v2114
      %v2126 = vpack.c.b16 %v2117, %v2116
      %v2127 = vpack.c.b16 %v2119, %v2118
      %2136 = vmatprep.subr.bf16.mxu0 0
      %2137 = vmatpush1.bf16.msra.mxu0 %v2120
      %2138 = vmatprep.subr.bf16.mxu0 0
      %2139 = vmatpush1.bf16.msra.mxu0 %v2121
      %2140 = vmatprep.subr.bf16.mxu0 0
      %2141 = vmatpush1.bf16.msra.mxu0 %v2122
      %2142 = vmatprep.subr.bf16.mxu0 0
      %2143 = vmatpush1.bf16.msra.mxu0 %v2123
      %2144 = vmatprep.subr.bf16.mxu0 0
      %2145 = vmatpush1.bf16.msra.mxu0 %v2124
      %2146 = vmatprep.subr.bf16.mxu0 0
      %2147 = vmatpush1.bf16.msra.mxu0 %v2125
      %2148 = vmatprep.subr.bf16.mxu0 0
      %2149 = vmatpush1.bf16.msra.mxu0 %v2126
      %2150 = vmatprep.subr.bf16.mxu0 0
      %2151 = vmatpush1.bf16.msra.mxu0 %v2127
      %2152 = vmatprep.subr.bf16.mxu0 0
      %2153 = vmatpush1.bf16.msra.mxu0 0
      %2154 = vmatprep.subr.bf16.mxu0 0
      %2155 = vmatpush1.bf16.msra.mxu0 0
      %2156 = vmatprep.subr.bf16.mxu0 0
      %2157 = vmatpush1.bf16.msra.mxu0 0
      %2158 = vmatprep.subr.bf16.mxu0 0
      %2159 = vmatpush1.bf16.msra.mxu0 0
      %2160 = vmatprep.subr.bf16.mxu0 0
      %2161 = vmatpush1.bf16.msra.mxu0 0
      %2162 = vmatprep.subr.bf16.mxu0 0
      %2163 = vmatpush1.bf16.msra.mxu0 0
      %2164 = vmatprep.subr.bf16.mxu0 0
      %2165 = vmatpush1.bf16.msra.mxu0 0
      %2166 = vmatprep.subr.bf16.mxu0 0
      %2167 = vmatpush1.bf16.msra.mxu0 0
      %2168 = vmatprep.mubr.bf16.mxu0 0
      %2169 = vmatmul.mubr.bf16.gmra.mrb[0].mxu0 %v2050
      %v2170 = vpop.f32.mrb[0].mxu0
      %v2171 = vadd.f32 %v2087, %v2170
      %v2172 = vpop.f32.mrb[0].mxu0
      %v2173 = vpop.f32.mrb[0].mxu0
      %v2174 = vadd.f32 %v2087, %v2173
      %v2175 = vpop.f32.mrb[0].mxu0
      %2176 = vmatprep.mubr.bf16.mxu0 0
      %2177 = vmatmul.mubr.bf16.gmra.mrb[0].mxu0 %v2051
      %v2178 = vpop.f32.mrb[0].mxu0
      %v2179 = vadd.f32 %v2087, %v2178
      %v2180 = vpop.f32.mrb[0].mxu0
      %v2181 = vpop.f32.mrb[0].mxu0
      %v2182 = vadd.f32 %v2087, %v2181
      %v2183 = vpop.f32.mrb[0].mxu0
      %2184 = vmatprep.mubr.bf16.mxu0 0
      %2185 = vmatmul.mubr.bf16.gmra.mrb[0].mxu0 %v2052
      %v2186 = vpop.f32.mrb[0].mxu0
      %v2187 = vadd.f32 %v2087, %v2186
      %v2188 = vpop.f32.mrb[0].mxu0
      %v2189 = vpop.f32.mrb[0].mxu0
      %v2190 = vadd.f32 %v2087, %v2189
      %v2191 = vpop.f32.mrb[0].mxu0
      %2192 = vmatprep.mubr.bf16.mxu0 0
      %2193 = vmatmul.mubr.bf16.gmra.mrb[0].mxu0 %v2053
      %v2194 = vpop.f32.mrb[0].mxu0
      %v2195 = vadd.f32 %v2087, %v2194
      %v2196 = vpop.f32.mrb[0].mxu0
      %v2197 = vpop.f32.mrb[0].mxu0
      %v2198 = vadd.f32 %v2087, %v2197
      %v2199 = vpop.f32.mrb[0].mxu0
      %2200 = vmatprep.mubr.bf16.mxu0 0
      %2201 = vmatmul.mubr.bf16.gmra.mrb[0].mxu0 %v2054
      %v2202 = vpop.f32.mrb[0].mxu0
      %v2203 = vadd.f32 %v2087, %v2202
      %v2204 = vpop.f32.mrb[0].mxu0
      %v2205 = vpop.f32.mrb[0].mxu0
      %v2206 = vadd.f32 %v2087, %v2205
      %v2207 = vpop.f32.mrb[0].mxu0
      %2208 = vmatprep.mubr.bf16.mxu0 0
      %2209 = vmatmul.mubr.bf16.gmra.mrb[0].mxu0 %v2055
      %v2210 = vpop.f32.mrb[0].mxu0
      %v2211 = vadd.f32 %v2087, %v2210
      %v2212 = vpop.f32.mrb[0].mxu0
      %v2213 = vpop.f32.mrb[0].mxu0
      %v2214 = vadd.f32 %v2087, %v2213
      %v2215 = vpop.f32.mrb[0].mxu0
      %2216 = vmatprep.mubr.bf16.mxu0 0
      %2217 = vmatmul.mubr.bf16.gmra.mrb[0].mxu0 %v2056
      %v2218 = vpop.f32.mrb[0].mxu0
      %v2219 = vadd.f32 %v2087, %v2218
      %v2220 = vpop.f32.mrb[0].mxu0
      %v2221 = vpop.f32.mrb[0].mxu0
      %v2222 = vadd.f32 %v2087, %v2221
      %v2223 = vpop.f32.mrb[0].mxu0
      %2224 = vmatprep.mubr.bf16.mxu0 0
      %2225 = vmatmul.mubr.bf16.gmra.mrb[0].mxu0 %v2057
      %v2226 = vpop.f32.mrb[0].mxu0
      %v2227 = vadd.f32 %v2087, %v2226
      %v2228 = vpop.f32.mrb[0].mxu0
      %v2229 = vpop.f32.mrb[0].mxu0
      %v2230 = vadd.f32 %v2087, %v2229
      %v2231 = vpop.f32.mrb[0].mxu0
      %2232 = vmatprep.mubr.bf16.mxu0 0
      %2233 = vmatmul.mubr.bf16.gmra.mrb[0].mxu0 %v2058
      %v2234 = vpop.f32.mrb[0].mxu0
      %v2235 = vadd.f32 %v2087, %v2234
      %v2236 = vpop.f32.mrb[0].mxu0
      %v2237 = vpop.f32.mrb[0].mxu0
      %v2238 = vadd.f32 %v2087, %v2237
      %v2239 = vpop.f32.mrb[0].mxu0
      %2240 = vmatprep.mubr.bf16.mxu0 0
      %2241 = vmatmul.mubr.bf16.gmra.mrb[0].mxu0 %v2059
      %v2242 = vpop.f32.mrb[0].mxu0
      %v2243 = vadd.f32 %v2087, %v2242
      %v2244 = vpop.f32.mrb[0].mxu0
      %v2245 = vpop.f32.mrb[0].mxu0
      %v2246 = vadd.f32 %v2087, %v2245
      %v2247 = vpop.f32.mrb[0].mxu0
      %2248 = vmatprep.mubr.bf16.mxu0 0
      %2249 = vmatmul.mubr.bf16.gmra.mrb[0].mxu0 %v2060
      %v2250 = vpop.f32.mrb[0].mxu0
      %v2251 = vadd.f32 %v2087, %v2250
      %v2252 = vpop.f32.mrb[0].mxu0
      %v2253 = vpop.f32.mrb[0].mxu0
      %v2254 = vadd.f32 %v2087, %v2253
      %v2255 = vpop.f32.mrb[0].mxu0
      %2256 = vmatprep.mubr.bf16.mxu0 0
      %2257 = vmatmul.mubr.bf16.gmra.mrb[0].mxu0 %v2061
      %v2258 = vpop.f32.mrb[0].mxu0
      %v2259 = vadd.f32 %v2087, %v2258
      %v2260 = vpop.f32.mrb[0].mxu0
      %v2261 = vpop.f32.mrb[0].mxu0
      %v2262 = vadd.f32 %v2087, %v2261
      %v2263 = vpop.f32.mrb[0].mxu0
      %2264 = vmatprep.mubr.bf16.mxu0 0
      %2265 = vmatmul.mubr.bf16.gmra.mrb[0].mxu0 %v2062
      %v2266 = vpop.f32.mrb[0].mxu0
      %v2267 = vadd.f32 %v2087, %v2266
      %v2268 = vpop.f32.mrb[0].mxu0
      %v2269 = vpop.f32.mrb[0].mxu0
      %v2270 = vadd.f32 %v2087, %v2269
      %v2271 = vpop.f32.mrb[0].mxu0
      %2272 = vmatprep.mubr.bf16.mxu0 0
      %2273 = vmatmul.mubr.bf16.gmra.mrb[0].mxu0 %v2063
      %v2274 = vpop.f32.mrb[0].mxu0
      %v2275 = vadd.f32 %v2087, %v2274
      %v2276 = vpop.f32.mrb[0].mxu0
      %v2277 = vpop.f32.mrb[0].mxu0
      %v2278 = vadd.f32 %v2087, %v2277
      %v2279 = vpop.f32.mrb[0].mxu0
      %2280 = vmatprep.mubr.bf16.mxu0 0
      %2281 = vmatmul.mubr.bf16.gmra.mrb[0].mxu0 %v2064
      %v2282 = vpop.f32.mrb[0].mxu0
      %v2283 = vadd.f32 %v2087, %v2282
      %v2284 = vpop.f32.mrb[0].mxu0
      %v2285 = vpop.f32.mrb[0].mxu0
      %v2286 = vadd.f32 %v2087, %v2285
      %v2287 = vpop.f32.mrb[0].mxu0
      %2288 = vmatprep.mubr.bf16.mxu0 0
      %2289 = vmatmul.mubr.bf16.gmra.mrb[0].mxu0 %v2065
      %v2290 = vpop.f32.mrb[0].mxu0
      %v2291 = vadd.f32 %v2087, %v2290
      %v2292 = vpop.f32.mrb[0].mxu0
      %v2293 = vpop.f32.mrb[0].mxu0
      %v2294 = vadd.f32 %v2087, %v2293
      %v2295 = vpop.f32.mrb[0].mxu0
      %2296 = vdwg.mxu0
      %v2297 = vadd.f32 %v2171, %v1461
      %v2298 = vadd.f32 %v2174, %v1462
      %v2299 = vadd.f32 %v2179, %v1463
      %v2300 = vadd.f32 %v2182, %v1464
      %v2301 = vadd.f32 %v2187, %v1465
      %v2302 = vadd.f32 %v2190, %v1466
      %v2303 = vadd.f32 %v2195, %v1467
      %v2304 = vadd.f32 %v2198, %v1468
      %v2305 = vadd.f32 %v2203, %v1469
      %v2306 = vadd.f32 %v2206, %v1470
      %v2307 = vadd.f32 %v2211, %v1471
      %v2308 = vadd.f32 %v2214, %v1472
      %v2309 = vadd.f32 %v2219, %v1473
      %v2310 = vadd.f32 %v2222, %v1474
      %v2311 = vadd.f32 %v2227, %v1475
      %v2312 = vadd.f32 %v2230, %v1476
      %v2313 = vadd.f32 %v2235, %v1477
      %v2314 = vadd.f32 %v2238, %v1478
      %v2315 = vadd.f32 %v2243, %v1479
      %v2316 = vadd.f32 %v2246, %v1480
      %v2317 = vadd.f32 %v2251, %v1481
      %v2318 = vadd.f32 %v2254, %v1482
      %v2319 = vadd.f32 %v2259, %v1483
      %v2320 = vadd.f32 %v2262, %v1484
      %v2321 = vadd.f32 %v2267, %v1485
      %v2322 = vadd.f32 %v2270, %v1486
      %v2323 = vadd.f32 %v2275, %v1487
      %v2324 = vadd.f32 %v2278, %v1488
      %v2325 = vadd.f32 %v2283, %v1489
      %v2326 = vadd.f32 %v2286, %v1490
      %v2327 = vadd.f32 %v2291, %v1491
      %v2328 = vadd.f32 %v2294, %v1492
      %v2329 = vmax.f32 %v2297, 0.0
      %v2330 = vmax.f32 %v2298, 0.0
      %v2331 = vmax.f32 %v2299, 0.0
      %v2332 = vmax.f32 %v2300, 0.0
      %v2333 = vmax.f32 %v2301, 0.0
      %v2334 = vmax.f32 %v2302, 0.0
      %v2335 = vmax.f32 %v2303, 0.0
      %v2336 = vmax.f32 %v2304, 0.0
      %v2337 = vmax.f32 %v2305, 0.0
      %v2338 = vmax.f32 %v2306, 0.0
      %v2339 = vmax.f32 %v2307, 0.0
      %v2340 = vmax.f32 %v2308, 0.0
      %v2341 = vmax.f32 %v2309, 0.0
      %v2342 = vmax.f32 %v2310, 0.0
      %v2343 = vmax.f32 %v2311, 0.0
      %v2344 = vmax.f32 %v2312, 0.0
      %v2345 = vmax.f32 %v2313, 0.0
      %v2346 = vmax.f32 %v2314, 0.0
      %v2347 = vmax.f32 %v2315, 0.0
      %v2348 = vmax.f32 %v2316, 0.0
      %v2349 = vmax.f32 %v2317, 0.0
      %v2350 = vmax.f32 %v2318, 0.0
      %v2351 = vmax.f32 %v2319, 0.0
      %v2352 = vmax.f32 %v2320, 0.0
      %v2353 = vmax.f32 %v2321, 0.0
      %v2354 = vmax.f32 %v2322, 0.0
      %v2355 = vmax.f32 %v2323, 0.0
      %v2356 = vmax.f32 %v2324, 0.0
      %v2357 = vmax.f32 %v2325, 0.0
      %v2358 = vmax.f32 %v2326, 0.0
      %v2359 = vmax.f32 %v2327, 0.0
      %v2360 = vmax.f32 %v2328, 0.0
      %v2361 = vpack.c.bf16 %v2330, %v2329
      %v2362 = vpack.c.bf16 %v2332, %v2331
      %v2363 = vpack.c.bf16 %v2334, %v2333
      %v2364 = vpack.c.bf16 %v2336, %v2335
      %v2365 = vpack.c.bf16 %v2338, %v2337
      %v2366 = vpack.c.bf16 %v2340, %v2339
      %v2367 = vpack.c.bf16 %v2342, %v2341
      %v2368 = vpack.c.bf16 %v2344, %v2343
      %v2369 = vpack.c.bf16 %v2346, %v2345
      %v2370 = vpack.c.bf16 %v2348, %v2347
      %v2371 = vpack.c.bf16 %v2350, %v2349
      %v2372 = vpack.c.bf16 %v2352, %v2351
      %v2373 = vpack.c.bf16 %v2354, %v2353
      %v2374 = vpack.c.bf16 %v2356, %v2355
      %v2375 = vpack.c.bf16 %v2358, %v2357
      %v2376 = vpack.c.bf16 %v2360, %v2359
      %s2377 = scalar_lea.vmem %s6, 192
      %v2378 = vld [vmem:[%s2377] sm:$0xf]
      %v2379 = vld [vmem:[%s2377 + $0x4] sm:$0xf]
      %v2380 = vld [vmem:[%s2377 + $0x8] sm:$0xf]
      %v2381 = vld [vmem:[%s2377 + $0xc] sm:$0xf]
      %v2382 = vld [vmem:[%s2377 + $0x10] sm:$0xf]
      %v2383 = vld [vmem:[%s2377 + $0x14] sm:$0xf]
      %v2384 = vld [vmem:[%s2377 + $0x18] sm:$0xf]
      %v2385 = vld [vmem:[%s2377 + $0x1c] sm:$0xf]
      %v2386 = vld [vmem:[%s2377 + $0x20] sm:$0xf]
      %v2387 = vld [vmem:[%s2377 + $0x24] sm:$0xf]
      %v2388 = vld [vmem:[%s2377 + $0x28] sm:$0xf]
      %v2389 = vld [vmem:[%s2377 + $0x2c] sm:$0xf]
      %v2390 = vld [vmem:[%s2377 + $0x30] sm:$0xf]
      %v2391 = vld [vmem:[%s2377 + $0x34] sm:$0xf]
      %v2392 = vld [vmem:[%s2377 + $0x38] sm:$0xf]
      %v2393 = vld [vmem:[%s2377 + $0x3c] sm:$0xf]
      %v2394 = vld [vmem:[%s7 + $0x3] sm:$0x1]
      %v2395 = vlaneseq
      %v2396 = vshrl.u32 %v2395, 7
      %v2397 = vsub.s32 0, %v2396
      %v2398 = vrot.slane %v2394, %v2397
      %v2415 = vunpack.c.l.b16 %v2378
      %v2416 = vunpack.c.l.b16 %v2379
      %v2417 = vunpack.c.l.b16 %v2380
      %v2418 = vunpack.c.l.b16 %v2381
      %v2419 = vunpack.c.l.b16 %v2382
      %v2420 = vunpack.c.l.b16 %v2383
      %v2421 = vunpack.c.l.b16 %v2384
      %v2422 = vunpack.c.l.b16 %v2385
      %v2423 = vunpack.c.l.b16 %v2386
      %v2424 = vunpack.c.l.b16 %v2387
      %v2425 = vunpack.c.l.b16 %v2388
      %v2426 = vunpack.c.l.b16 %v2389
      %v2427 = vunpack.c.l.b16 %v2390
      %v2428 = vunpack.c.l.b16 %v2391
      %v2429 = vunpack.c.l.b16 %v2392
      %v2430 = vunpack.c.l.b16 %v2393
      %v2431 = vpack.c.b16 %v2416, %v2415
      %v2432 = vpack.c.b16 %v2418, %v2417
      %v2433 = vpack.c.b16 %v2420, %v2419
      %v2434 = vpack.c.b16 %v2422, %v2421
      %v2435 = vpack.c.b16 %v2424, %v2423
      %v2436 = vpack.c.b16 %v2426, %v2425
      %v2437 = vpack.c.b16 %v2428, %v2427
      %v2438 = vpack.c.b16 %v2430, %v2429
      %2447 = vmatprep.subr.bf16.mxu0 0
      %2448 = vmatpush1.bf16.msra.mxu0 %v2431
      %2449 = vmatprep.subr.bf16.mxu0 0
      %2450 = vmatpush1.bf16.msra.mxu0 %v2432
      %2451 = vmatprep.subr.bf16.mxu0 0
      %2452 = vmatpush1.bf16.msra.mxu0 %v2433
      %2453 = vmatprep.subr.bf16.mxu0 0
      %2454 = vmatpush1.bf16.msra.mxu0 %v2434
      %2455 = vmatprep.subr.bf16.mxu0 0
      %2456 = vmatpush1.bf16.msra.mxu0 %v2435
      %2457 = vmatprep.subr.bf16.mxu0 0
      %2458 = vmatpush1.bf16.msra.mxu0 %v2436
      %2459 = vmatprep.subr.bf16.mxu0 0
      %2460 = vmatpush1.bf16.msra.mxu0 %v2437
      %2461 = vmatprep.subr.bf16.mxu0 0
      %2462 = vmatpush1.bf16.msra.mxu0 %v2438
      %2463 = vmatprep.subr.bf16.mxu0 0
      %2464 = vmatpush1.bf16.msra.mxu0 0
      %2465 = vmatprep.subr.bf16.mxu0 0
      %2466 = vmatpush1.bf16.msra.mxu0 0
      %2467 = vmatprep.subr.bf16.mxu0 0
      %2468 = vmatpush1.bf16.msra.mxu0 0
      %2469 = vmatprep.subr.bf16.mxu0 0
      %2470 = vmatpush1.bf16.msra.mxu0 0
      %2471 = vmatprep.subr.bf16.mxu0 0
      %2472 = vmatpush1.bf16.msra.mxu0 0
      %2473 = vmatprep.subr.bf16.mxu0 0
      %2474 = vmatpush1.bf16.msra.mxu0 0
      %2475 = vmatprep.subr.bf16.mxu0 0
      %2476 = vmatpush1.bf16.msra.mxu0 0
      %2477 = vmatprep.subr.bf16.mxu0 0
      %2478 = vmatpush1.bf16.msra.mxu0 0
      %2479 = vmatprep.mubr.bf16.mxu0 0
      %2480 = vmatmul.mubr.bf16.gmra.mrb[0].mxu0 %v2361
      %v2481 = vpop.f32.mrb[0].mxu0
      %v2482 = vadd.f32 %v2398, %v2481
      %v2483 = vpop.f32.mrb[0].mxu0
      %v2484 = vpop.f32.mrb[0].mxu0
      %v2485 = vadd.f32 %v2398, %v2484
      %v2486 = vpop.f32.mrb[0].mxu0
      %2487 = vmatprep.mubr.bf16.mxu0 0
      %2488 = vmatmul.mubr.bf16.gmra.mrb[0].mxu0 %v2362
      %v2489 = vpop.f32.mrb[0].mxu0
      %v2490 = vadd.f32 %v2398, %v2489
      %v2491 = vpop.f32.mrb[0].mxu0
      %v2492 = vpop.f32.mrb[0].mxu0
      %v2493 = vadd.f32 %v2398, %v2492
      %v2494 = vpop.f32.mrb[0].mxu0
      %2495 = vmatprep.mubr.bf16.mxu0 0
      %2496 = vmatmul.mubr.bf16.gmra.mrb[0].mxu0 %v2363
      %v2497 = vpop.f32.mrb[0].mxu0
      %v2498 = vadd.f32 %v2398, %v2497
      %v2499 = vpop.f32.mrb[0].mxu0
      %v2500 = vpop.f32.mrb[0].mxu0
      %v2501 = vadd.f32 %v2398, %v2500
      %v2502 = vpop.f32.mrb[0].mxu0
      %2503 = vmatprep.mubr.bf16.mxu0 0
      %2504 = vmatmul.mubr.bf16.gmra.mrb[0].mxu0 %v2364
      %v2505 = vpop.f32.mrb[0].mxu0
      %v2506 = vadd.f32 %v2398, %v2505
      %v2507 = vpop.f32.mrb[0].mxu0
      %v2508 = vpop.f32.mrb[0].mxu0
      %v2509 = vadd.f32 %v2398, %v2508
      %v2510 = vpop.f32.mrb[0].mxu0
      %2511 = vmatprep.mubr.bf16.mxu0 0
      %2512 = vmatmul.mubr.bf16.gmra.mrb[0].mxu0 %v2365
      %v2513 = vpop.f32.mrb[0].mxu0
      %v2514 = vadd.f32 %v2398, %v2513
      %v2515 = vpop.f32.mrb[0].mxu0
      %v2516 = vpop.f32.mrb[0].mxu0
      %v2517 = vadd.f32 %v2398, %v2516
      %v2518 = vpop.f32.mrb[0].mxu0
      %2519 = vmatprep.mubr.bf16.mxu0 0
      %2520 = vmatmul.mubr.bf16.gmra.mrb[0].mxu0 %v2366
      %v2521 = vpop.f32.mrb[0].mxu0
      %v2522 = vadd.f32 %v2398, %v2521
      %v2523 = vpop.f32.mrb[0].mxu0
      %v2524 = vpop.f32.mrb[0].mxu0
      %v2525 = vadd.f32 %v2398, %v2524
      %v2526 = vpop.f32.mrb[0].mxu0
      %2527 = vmatprep.mubr.bf16.mxu0 0
      %2528 = vmatmul.mubr.bf16.gmra.mrb[0].mxu0 %v2367
      %v2529 = vpop.f32.mrb[0].mxu0
      %v2530 = vadd.f32 %v2398, %v2529
      %v2531 = vpop.f32.mrb[0].mxu0
      %v2532 = vpop.f32.mrb[0].mxu0
      %v2533 = vadd.f32 %v2398, %v2532
      %v2534 = vpop.f32.mrb[0].mxu0
      %2535 = vmatprep.mubr.bf16.mxu0 0
      %2536 = vmatmul.mubr.bf16.gmra.mrb[0].mxu0 %v2368
      %v2537 = vpop.f32.mrb[0].mxu0
      %v2538 = vadd.f32 %v2398, %v2537
      %v2539 = vpop.f32.mrb[0].mxu0
      %v2540 = vpop.f32.mrb[0].mxu0
      %v2541 = vadd.f32 %v2398, %v2540
      %v2542 = vpop.f32.mrb[0].mxu0
      %2543 = vmatprep.mubr.bf16.mxu0 0
      %2544 = vmatmul.mubr.bf16.gmra.mrb[0].mxu0 %v2369
      %v2545 = vpop.f32.mrb[0].mxu0
      %v2546 = vadd.f32 %v2398, %v2545
      %v2547 = vpop.f32.mrb[0].mxu0
      %v2548 = vpop.f32.mrb[0].mxu0
      %v2549 = vadd.f32 %v2398, %v2548
      %v2550 = vpop.f32.mrb[0].mxu0
      %2551 = vmatprep.mubr.bf16.mxu0 0
      %2552 = vmatmul.mubr.bf16.gmra.mrb[0].mxu0 %v2370
      %v2553 = vpop.f32.mrb[0].mxu0
      %v2554 = vadd.f32 %v2398, %v2553
      %v2555 = vpop.f32.mrb[0].mxu0
      %v2556 = vpop.f32.mrb[0].mxu0
      %v2557 = vadd.f32 %v2398, %v2556
      %v2558 = vpop.f32.mrb[0].mxu0
      %2559 = vmatprep.mubr.bf16.mxu0 0
      %2560 = vmatmul.mubr.bf16.gmra.mrb[0].mxu0 %v2371
      %v2561 = vpop.f32.mrb[0].mxu0
      %v2562 = vadd.f32 %v2398, %v2561
      %v2563 = vpop.f32.mrb[0].mxu0
      %v2564 = vpop.f32.mrb[0].mxu0
      %v2565 = vadd.f32 %v2398, %v2564
      %v2566 = vpop.f32.mrb[0].mxu0
      %2567 = vmatprep.mubr.bf16.mxu0 0
      %2568 = vmatmul.mubr.bf16.gmra.mrb[0].mxu0 %v2372
      %v2569 = vpop.f32.mrb[0].mxu0
      %v2570 = vadd.f32 %v2398, %v2569
      %v2571 = vpop.f32.mrb[0].mxu0
      %v2572 = vpop.f32.mrb[0].mxu0
      %v2573 = vadd.f32 %v2398, %v2572
      %v2574 = vpop.f32.mrb[0].mxu0
      %2575 = vmatprep.mubr.bf16.mxu0 0
      %2576 = vmatmul.mubr.bf16.gmra.mrb[0].mxu0 %v2373
      %v2577 = vpop.f32.mrb[0].mxu0
      %v2578 = vadd.f32 %v2398, %v2577
      %v2579 = vpop.f32.mrb[0].mxu0
      %v2580 = vpop.f32.mrb[0].mxu0
      %v2581 = vadd.f32 %v2398, %v2580
      %v2582 = vpop.f32.mrb[0].mxu0
      %2583 = vmatprep.mubr.bf16.mxu0 0
      %2584 = vmatmul.mubr.bf16.gmra.mrb[0].mxu0 %v2374
      %v2585 = vpop.f32.mrb[0].mxu0
      %v2586 = vadd.f32 %v2398, %v2585
      %v2587 = vpop.f32.mrb[0].mxu0
      %v2588 = vpop.f32.mrb[0].mxu0
      %v2589 = vadd.f32 %v2398, %v2588
      %v2590 = vpop.f32.mrb[0].mxu0
      %2591 = vmatprep.mubr.bf16.mxu0 0
      %2592 = vmatmul.mubr.bf16.gmra.mrb[0].mxu0 %v2375
      %v2593 = vpop.f32.mrb[0].mxu0
      %v2594 = vadd.f32 %v2398, %v2593
      %v2595 = vpop.f32.mrb[0].mxu0
      %v2596 = vpop.f32.mrb[0].mxu0
      %v2597 = vadd.f32 %v2398, %v2596
      %v2598 = vpop.f32.mrb[0].mxu0
      %2599 = vmatprep.mubr.bf16.mxu0 0
      %2600 = vmatmul.mubr.bf16.gmra.mrb[0].mxu0 %v2376
      %v2601 = vpop.f32.mrb[0].mxu0
      %v2602 = vadd.f32 %v2398, %v2601
      %v2603 = vpop.f32.mrb[0].mxu0
      %v2604 = vpop.f32.mrb[0].mxu0
      %v2605 = vadd.f32 %v2398, %v2604
      %v2606 = vpop.f32.mrb[0].mxu0
      %2607 = vdwg.mxu0
      %v2608 = vmax.f32 %v2482, 0.0
      %v2609 = vmax.f32 %v2485, 0.0
      %v2610 = vmax.f32 %v2490, 0.0
      %v2611 = vmax.f32 %v2493, 0.0
      %v2612 = vmax.f32 %v2498, 0.0
      %v2613 = vmax.f32 %v2501, 0.0
      %v2614 = vmax.f32 %v2506, 0.0
      %v2615 = vmax.f32 %v2509, 0.0
      %v2616 = vmax.f32 %v2514, 0.0
      %v2617 = vmax.f32 %v2517, 0.0
      %v2618 = vmax.f32 %v2522, 0.0
      %v2619 = vmax.f32 %v2525, 0.0
      %v2620 = vmax.f32 %v2530, 0.0
      %v2621 = vmax.f32 %v2533, 0.0
      %v2622 = vmax.f32 %v2538, 0.0
      %v2623 = vmax.f32 %v2541, 0.0
      %v2624 = vmax.f32 %v2546, 0.0
      %v2625 = vmax.f32 %v2549, 0.0
      %v2626 = vmax.f32 %v2554, 0.0
      %v2627 = vmax.f32 %v2557, 0.0
      %v2628 = vmax.f32 %v2562, 0.0
      %v2629 = vmax.f32 %v2565, 0.0
      %v2630 = vmax.f32 %v2570, 0.0
      %v2631 = vmax.f32 %v2573, 0.0
      %v2632 = vmax.f32 %v2578, 0.0
      %v2633 = vmax.f32 %v2581, 0.0
      %v2634 = vmax.f32 %v2586, 0.0
      %v2635 = vmax.f32 %v2589, 0.0
      %v2636 = vmax.f32 %v2594, 0.0
      %v2637 = vmax.f32 %v2597, 0.0
      %v2638 = vmax.f32 %v2602, 0.0
      %v2639 = vmax.f32 %v2605, 0.0
      %v2640 = vpack.c.bf16 %v2609, %v2608
      %v2641 = vpack.c.bf16 %v2611, %v2610
      %v2642 = vpack.c.bf16 %v2613, %v2612
      %v2643 = vpack.c.bf16 %v2615, %v2614
      %v2644 = vpack.c.bf16 %v2617, %v2616
      %v2645 = vpack.c.bf16 %v2619, %v2618
      %v2646 = vpack.c.bf16 %v2621, %v2620
      %v2647 = vpack.c.bf16 %v2623, %v2622
      %v2648 = vpack.c.bf16 %v2625, %v2624
      %v2649 = vpack.c.bf16 %v2627, %v2626
      %v2650 = vpack.c.bf16 %v2629, %v2628
      %v2651 = vpack.c.bf16 %v2631, %v2630
      %v2652 = vpack.c.bf16 %v2633, %v2632
      %v2653 = vpack.c.bf16 %v2635, %v2634
      %v2654 = vpack.c.bf16 %v2637, %v2636
      %v2655 = vpack.c.bf16 %v2639, %v2638
      %s2656 = scalar_lea.vmem %s6, 256
      %v2657 = vld [vmem:[%s2656] sm:$0xf]
      %v2658 = vld [vmem:[%s2656 + $0x4] sm:$0xf]
      %v2659 = vld [vmem:[%s2656 + $0x8] sm:$0xf]
      %v2660 = vld [vmem:[%s2656 + $0xc] sm:$0xf]
      %v2661 = vld [vmem:[%s2656 + $0x10] sm:$0xf]
      %v2662 = vld [vmem:[%s2656 + $0x14] sm:$0xf]
      %v2663 = vld [vmem:[%s2656 + $0x18] sm:$0xf]
      %v2664 = vld [vmem:[%s2656 + $0x1c] sm:$0xf]
      %v2665 = vld [vmem:[%s2656 + $0x20] sm:$0xf]
      %v2666 = vld [vmem:[%s2656 + $0x24] sm:$0xf]
      %v2667 = vld [vmem:[%s2656 + $0x28] sm:$0xf]
      %v2668 = vld [vmem:[%s2656 + $0x2c] sm:$0xf]
      %v2669 = vld [vmem:[%s2656 + $0x30] sm:$0xf]
      %v2670 = vld [vmem:[%s2656 + $0x34] sm:$0xf]
      %v2671 = vld [vmem:[%s2656 + $0x38] sm:$0xf]
      %v2672 = vld [vmem:[%s2656 + $0x3c] sm:$0xf]
      %v2673 = vld [vmem:[%s7 + $0x4] sm:$0x1]
      %v2674 = vlaneseq
      %v2675 = vshrl.u32 %v2674, 7
      %v2676 = vsub.s32 0, %v2675
      %v2677 = vrot.slane %v2673, %v2676
      %v2694 = vunpack.c.l.b16 %v2657
      %v2695 = vunpack.c.l.b16 %v2658
      %v2696 = vunpack.c.l.b16 %v2659
      %v2697 = vunpack.c.l.b16 %v2660
      %v2698 = vunpack.c.l.b16 %v2661
      %v2699 = vunpack.c.l.b16 %v2662
      %v2700 = vunpack.c.l.b16 %v2663
      %v2701 = vunpack.c.l.b16 %v2664
      %v2702 = vunpack.c.l.b16 %v2665
      %v2703 = vunpack.c.l.b16 %v2666
      %v2704 = vunpack.c.l.b16 %v2667
      %v2705 = vunpack.c.l.b16 %v2668
      %v2706 = vunpack.c.l.b16 %v2669
      %v2707 = vunpack.c.l.b16 %v2670
      %v2708 = vunpack.c.l.b16 %v2671
      %v2709 = vunpack.c.l.b16 %v2672
      %v2710 = vpack.c.b16 %v2695, %v2694
      %v2711 = vpack.c.b16 %v2697, %v2696
      %v2712 = vpack.c.b16 %v2699, %v2698
      %v2713 = vpack.c.b16 %v2701, %v2700
      %v2714 = vpack.c.b16 %v2703, %v2702
      %v2715 = vpack.c.b16 %v2705, %v2704
      %v2716 = vpack.c.b16 %v2707, %v2706
      %v2717 = vpack.c.b16 %v2709, %v2708
      %2726 = vmatprep.subr.bf16.mxu0 0
      %2727 = vmatpush1.bf16.msra.mxu0 %v2710
      %2728 = vmatprep.subr.bf16.mxu0 0
      %2729 = vmatpush1.bf16.msra.mxu0 %v2711
      %2730 = vmatprep.subr.bf16.mxu0 0
      %2731 = vmatpush1.bf16.msra.mxu0 %v2712
      %2732 = vmatprep.subr.bf16.mxu0 0
      %2733 = vmatpush1.bf16.msra.mxu0 %v2713
      %2734 = vmatprep.subr.bf16.mxu0 0
      %2735 = vmatpush1.bf16.msra.mxu0 %v2714
      %2736 = vmatprep.subr.bf16.mxu0 0
      %2737 = vmatpush1.bf16.msra.mxu0 %v2715
      %2738 = vmatprep.subr.bf16.mxu0 0
      %2739 = vmatpush1.bf16.msra.mxu0 %v2716
      %2740 = vmatprep.subr.bf16.mxu0 0
      %2741 = vmatpush1.bf16.msra.mxu0 %v2717
      %2742 = vmatprep.subr.bf16.mxu0 0
      %2743 = vmatpush1.bf16.msra.mxu0 0
      %2744 = vmatprep.subr.bf16.mxu0 0
      %2745 = vmatpush1.bf16.msra.mxu0 0
      %2746 = vmatprep.subr.bf16.mxu0 0
      %2747 = vmatpush1.bf16.msra.mxu0 0
      %2748 = vmatprep.subr.bf16.mxu0 0
      %2749 = vmatpush1.bf16.msra.mxu0 0
      %2750 = vmatprep.subr.bf16.mxu0 0
      %2751 = vmatpush1.bf16.msra.mxu0 0
      %2752 = vmatprep.subr.bf16.mxu0 0
      %2753 = vmatpush1.bf16.msra.mxu0 0
      %2754 = vmatprep.subr.bf16.mxu0 0
      %2755 = vmatpush1.bf16.msra.mxu0 0
      %2756 = vmatprep.subr.bf16.mxu0 0
      %2757 = vmatpush1.bf16.msra.mxu0 0
      %2758 = vmatprep.mubr.bf16.mxu0 0
      %2759 = vmatmul.mubr.bf16.gmra.mrb[0].mxu0 %v2640
      %v2760 = vpop.f32.mrb[0].mxu0
      %v2761 = vadd.f32 %v2677, %v2760
      %v2762 = vpop.f32.mrb[0].mxu0
      %v2763 = vpop.f32.mrb[0].mxu0
      %v2764 = vadd.f32 %v2677, %v2763
      %v2765 = vpop.f32.mrb[0].mxu0
      %2766 = vmatprep.mubr.bf16.mxu0 0
      %2767 = vmatmul.mubr.bf16.gmra.mrb[0].mxu0 %v2641
      %v2768 = vpop.f32.mrb[0].mxu0
      %v2769 = vadd.f32 %v2677, %v2768
      %v2770 = vpop.f32.mrb[0].mxu0
      %v2771 = vpop.f32.mrb[0].mxu0
      %v2772 = vadd.f32 %v2677, %v2771
      %v2773 = vpop.f32.mrb[0].mxu0
      %2774 = vmatprep.mubr.bf16.mxu0 0
      %2775 = vmatmul.mubr.bf16.gmra.mrb[0].mxu0 %v2642
      %v2776 = vpop.f32.mrb[0].mxu0
      %v2777 = vadd.f32 %v2677, %v2776
      %v2778 = vpop.f32.mrb[0].mxu0
      %v2779 = vpop.f32.mrb[0].mxu0
      %v2780 = vadd.f32 %v2677, %v2779
      %v2781 = vpop.f32.mrb[0].mxu0
      %2782 = vmatprep.mubr.bf16.mxu0 0
      %2783 = vmatmul.mubr.bf16.gmra.mrb[0].mxu0 %v2643
      %v2784 = vpop.f32.mrb[0].mxu0
      %v2785 = vadd.f32 %v2677, %v2784
      %v2786 = vpop.f32.mrb[0].mxu0
      %v2787 = vpop.f32.mrb[0].mxu0
      %v2788 = vadd.f32 %v2677, %v2787
      %v2789 = vpop.f32.mrb[0].mxu0
      %2790 = vmatprep.mubr.bf16.mxu0 0
      %2791 = vmatmul.mubr.bf16.gmra.mrb[0].mxu0 %v2644
      %v2792 = vpop.f32.mrb[0].mxu0
      %v2793 = vadd.f32 %v2677, %v2792
      %v2794 = vpop.f32.mrb[0].mxu0
      %v2795 = vpop.f32.mrb[0].mxu0
      %v2796 = vadd.f32 %v2677, %v2795
      %v2797 = vpop.f32.mrb[0].mxu0
      %2798 = vmatprep.mubr.bf16.mxu0 0
      %2799 = vmatmul.mubr.bf16.gmra.mrb[0].mxu0 %v2645
      %v2800 = vpop.f32.mrb[0].mxu0
      %v2801 = vadd.f32 %v2677, %v2800
      %v2802 = vpop.f32.mrb[0].mxu0
      %v2803 = vpop.f32.mrb[0].mxu0
      %v2804 = vadd.f32 %v2677, %v2803
      %v2805 = vpop.f32.mrb[0].mxu0
      %2806 = vmatprep.mubr.bf16.mxu0 0
      %2807 = vmatmul.mubr.bf16.gmra.mrb[0].mxu0 %v2646
      %v2808 = vpop.f32.mrb[0].mxu0
      %v2809 = vadd.f32 %v2677, %v2808
      %v2810 = vpop.f32.mrb[0].mxu0
      %v2811 = vpop.f32.mrb[0].mxu0
      %v2812 = vadd.f32 %v2677, %v2811
      %v2813 = vpop.f32.mrb[0].mxu0
      %2814 = vmatprep.mubr.bf16.mxu0 0
      %2815 = vmatmul.mubr.bf16.gmra.mrb[0].mxu0 %v2647
      %v2816 = vpop.f32.mrb[0].mxu0
      %v2817 = vadd.f32 %v2677, %v2816
      %v2818 = vpop.f32.mrb[0].mxu0
      %v2819 = vpop.f32.mrb[0].mxu0
      %v2820 = vadd.f32 %v2677, %v2819
      %v2821 = vpop.f32.mrb[0].mxu0
      %2822 = vmatprep.mubr.bf16.mxu0 0
      %2823 = vmatmul.mubr.bf16.gmra.mrb[0].mxu0 %v2648
      %v2824 = vpop.f32.mrb[0].mxu0
      %v2825 = vadd.f32 %v2677, %v2824
      %v2826 = vpop.f32.mrb[0].mxu0
      %v2827 = vpop.f32.mrb[0].mxu0
      %v2828 = vadd.f32 %v2677, %v2827
      %v2829 = vpop.f32.mrb[0].mxu0
      %2830 = vmatprep.mubr.bf16.mxu0 0
      %2831 = vmatmul.mubr.bf16.gmra.mrb[0].mxu0 %v2649
      %v2832 = vpop.f32.mrb[0].mxu0
      %v2833 = vadd.f32 %v2677, %v2832
      %v2834 = vpop.f32.mrb[0].mxu0
      %v2835 = vpop.f32.mrb[0].mxu0
      %v2836 = vadd.f32 %v2677, %v2835
      %v2837 = vpop.f32.mrb[0].mxu0
      %2838 = vmatprep.mubr.bf16.mxu0 0
      %2839 = vmatmul.mubr.bf16.gmra.mrb[0].mxu0 %v2650
      %v2840 = vpop.f32.mrb[0].mxu0
      %v2841 = vadd.f32 %v2677, %v2840
      %v2842 = vpop.f32.mrb[0].mxu0
      %v2843 = vpop.f32.mrb[0].mxu0
      %v2844 = vadd.f32 %v2677, %v2843
      %v2845 = vpop.f32.mrb[0].mxu0
      %2846 = vmatprep.mubr.bf16.mxu0 0
      %2847 = vmatmul.mubr.bf16.gmra.mrb[0].mxu0 %v2651
      %v2848 = vpop.f32.mrb[0].mxu0
      %v2849 = vadd.f32 %v2677, %v2848
      %v2850 = vpop.f32.mrb[0].mxu0
      %v2851 = vpop.f32.mrb[0].mxu0
      %v2852 = vadd.f32 %v2677, %v2851
      %v2853 = vpop.f32.mrb[0].mxu0
      %2854 = vmatprep.mubr.bf16.mxu0 0
      %2855 = vmatmul.mubr.bf16.gmra.mrb[0].mxu0 %v2652
      %v2856 = vpop.f32.mrb[0].mxu0
      %v2857 = vadd.f32 %v2677, %v2856
      %v2858 = vpop.f32.mrb[0].mxu0
      %v2859 = vpop.f32.mrb[0].mxu0
      %v2860 = vadd.f32 %v2677, %v2859
      %v2861 = vpop.f32.mrb[0].mxu0
      %2862 = vmatprep.mubr.bf16.mxu0 0
      %2863 = vmatmul.mubr.bf16.gmra.mrb[0].mxu0 %v2653
      %v2864 = vpop.f32.mrb[0].mxu0
      %v2865 = vadd.f32 %v2677, %v2864
      %v2866 = vpop.f32.mrb[0].mxu0
      %v2867 = vpop.f32.mrb[0].mxu0
      %v2868 = vadd.f32 %v2677, %v2867
      %v2869 = vpop.f32.mrb[0].mxu0
      %2870 = vmatprep.mubr.bf16.mxu0 0
      %2871 = vmatmul.mubr.bf16.gmra.mrb[0].mxu0 %v2654
      %v2872 = vpop.f32.mrb[0].mxu0
      %v2873 = vadd.f32 %v2677, %v2872
      %v2874 = vpop.f32.mrb[0].mxu0
      %v2875 = vpop.f32.mrb[0].mxu0
      %v2876 = vadd.f32 %v2677, %v2875
      %v2877 = vpop.f32.mrb[0].mxu0
      %2878 = vmatprep.mubr.bf16.mxu0 0
      %2879 = vmatmul.mubr.bf16.gmra.mrb[0].mxu0 %v2655
      %v2880 = vpop.f32.mrb[0].mxu0
      %v2881 = vadd.f32 %v2677, %v2880
      %v2882 = vpop.f32.mrb[0].mxu0
      %v2883 = vpop.f32.mrb[0].mxu0
      %v2884 = vadd.f32 %v2677, %v2883
      %v2885 = vpop.f32.mrb[0].mxu0
      %2886 = vdwg.mxu0
      %v2887 = vmax.f32 %v2761, 0.0
      %v2888 = vmax.f32 %v2764, 0.0
      %v2889 = vmax.f32 %v2769, 0.0
      %v2890 = vmax.f32 %v2772, 0.0
      %v2891 = vmax.f32 %v2777, 0.0
      %v2892 = vmax.f32 %v2780, 0.0
      %v2893 = vmax.f32 %v2785, 0.0
      %v2894 = vmax.f32 %v2788, 0.0
      %v2895 = vmax.f32 %v2793, 0.0
      %v2896 = vmax.f32 %v2796, 0.0
      %v2897 = vmax.f32 %v2801, 0.0
      %v2898 = vmax.f32 %v2804, 0.0
      %v2899 = vmax.f32 %v2809, 0.0
      %v2900 = vmax.f32 %v2812, 0.0
      %v2901 = vmax.f32 %v2817, 0.0
      %v2902 = vmax.f32 %v2820, 0.0
      %v2903 = vmax.f32 %v2825, 0.0
      %v2904 = vmax.f32 %v2828, 0.0
      %v2905 = vmax.f32 %v2833, 0.0
      %v2906 = vmax.f32 %v2836, 0.0
      %v2907 = vmax.f32 %v2841, 0.0
      %v2908 = vmax.f32 %v2844, 0.0
      %v2909 = vmax.f32 %v2849, 0.0
      %v2910 = vmax.f32 %v2852, 0.0
      %v2911 = vmax.f32 %v2857, 0.0
      %v2912 = vmax.f32 %v2860, 0.0
      %v2913 = vmax.f32 %v2865, 0.0
      %v2914 = vmax.f32 %v2868, 0.0
      %v2915 = vmax.f32 %v2873, 0.0
      %v2916 = vmax.f32 %v2876, 0.0
      %v2917 = vmax.f32 %v2881, 0.0
      %v2918 = vmax.f32 %v2884, 0.0
      %v2919 = vpack.c.bf16 %v2888, %v2887
      %v2920 = vpack.c.bf16 %v2890, %v2889
      %v2921 = vpack.c.bf16 %v2892, %v2891
      %v2922 = vpack.c.bf16 %v2894, %v2893
      %v2923 = vpack.c.bf16 %v2896, %v2895
      %v2924 = vpack.c.bf16 %v2898, %v2897
      %v2925 = vpack.c.bf16 %v2900, %v2899
      %v2926 = vpack.c.bf16 %v2902, %v2901
      %v2927 = vpack.c.bf16 %v2904, %v2903
      %v2928 = vpack.c.bf16 %v2906, %v2905
      %v2929 = vpack.c.bf16 %v2908, %v2907
      %v2930 = vpack.c.bf16 %v2910, %v2909
      %v2931 = vpack.c.bf16 %v2912, %v2911
      %v2932 = vpack.c.bf16 %v2914, %v2913
      %v2933 = vpack.c.bf16 %v2916, %v2915
      %v2934 = vpack.c.bf16 %v2918, %v2917
      %s2935 = scalar_lea.vmem %s6, 320
      %v2936 = vld [vmem:[%s2935] sm:$0xf]
      %v2937 = vld [vmem:[%s2935 + $0x4] sm:$0xf]
      %v2938 = vld [vmem:[%s2935 + $0x8] sm:$0xf]
      %v2939 = vld [vmem:[%s2935 + $0xc] sm:$0xf]
      %v2940 = vld [vmem:[%s2935 + $0x10] sm:$0xf]
      %v2941 = vld [vmem:[%s2935 + $0x14] sm:$0xf]
      %v2942 = vld [vmem:[%s2935 + $0x18] sm:$0xf]
      %v2943 = vld [vmem:[%s2935 + $0x1c] sm:$0xf]
      %v2944 = vld [vmem:[%s2935 + $0x20] sm:$0xf]
      %v2945 = vld [vmem:[%s2935 + $0x24] sm:$0xf]
      %v2946 = vld [vmem:[%s2935 + $0x28] sm:$0xf]
      %v2947 = vld [vmem:[%s2935 + $0x2c] sm:$0xf]
      %v2948 = vld [vmem:[%s2935 + $0x30] sm:$0xf]
      %v2949 = vld [vmem:[%s2935 + $0x34] sm:$0xf]
      %v2950 = vld [vmem:[%s2935 + $0x38] sm:$0xf]
      %v2951 = vld [vmem:[%s2935 + $0x3c] sm:$0xf]
      %v2952 = vld [vmem:[%s7 + $0x5] sm:$0x1]
      %v2953 = vlaneseq
      %v2954 = vshrl.u32 %v2953, 7
      %v2955 = vsub.s32 0, %v2954
      %v2956 = vrot.slane %v2952, %v2955
      %v2973 = vunpack.c.l.b16 %v2936
      %v2974 = vunpack.c.l.b16 %v2937
      %v2975 = vunpack.c.l.b16 %v2938
      %v2976 = vunpack.c.l.b16 %v2939
      %v2977 = vunpack.c.l.b16 %v2940
      %v2978 = vunpack.c.l.b16 %v2941
      %v2979 = vunpack.c.l.b16 %v2942
      %v2980 = vunpack.c.l.b16 %v2943
      %v2981 = vunpack.c.l.b16 %v2944
      %v2982 = vunpack.c.l.b16 %v2945
      %v2983 = vunpack.c.l.b16 %v2946
      %v2984 = vunpack.c.l.b16 %v2947
      %v2985 = vunpack.c.l.b16 %v2948
      %v2986 = vunpack.c.l.b16 %v2949
      %v2987 = vunpack.c.l.b16 %v2950
      %v2988 = vunpack.c.l.b16 %v2951
      %v2989 = vpack.c.b16 %v2974, %v2973
      %v2990 = vpack.c.b16 %v2976, %v2975
      %v2991 = vpack.c.b16 %v2978, %v2977
      %v2992 = vpack.c.b16 %v2980, %v2979
      %v2993 = vpack.c.b16 %v2982, %v2981
      %v2994 = vpack.c.b16 %v2984, %v2983
      %v2995 = vpack.c.b16 %v2986, %v2985
      %v2996 = vpack.c.b16 %v2988, %v2987
      %3005 = vmatprep.subr.bf16.mxu0 0
      %3006 = vmatpush1.bf16.msra.mxu0 %v2989
      %3007 = vmatprep.subr.bf16.mxu0 0
      %3008 = vmatpush1.bf16.msra.mxu0 %v2990
      %3009 = vmatprep.subr.bf16.mxu0 0
      %3010 = vmatpush1.bf16.msra.mxu0 %v2991
      %3011 = vmatprep.subr.bf16.mxu0 0
      %3012 = vmatpush1.bf16.msra.mxu0 %v2992
      %3013 = vmatprep.subr.bf16.mxu0 0
      %3014 = vmatpush1.bf16.msra.mxu0 %v2993
      %3015 = vmatprep.subr.bf16.mxu0 0
      %3016 = vmatpush1.bf16.msra.mxu0 %v2994
      %3017 = vmatprep.subr.bf16.mxu0 0
      %3018 = vmatpush1.bf16.msra.mxu0 %v2995
      %3019 = vmatprep.subr.bf16.mxu0 0
      %3020 = vmatpush1.bf16.msra.mxu0 %v2996
      %3021 = vmatprep.subr.bf16.mxu0 0
      %3022 = vmatpush1.bf16.msra.mxu0 0
      %3023 = vmatprep.subr.bf16.mxu0 0
      %3024 = vmatpush1.bf16.msra.mxu0 0
      %3025 = vmatprep.subr.bf16.mxu0 0
      %3026 = vmatpush1.bf16.msra.mxu0 0
      %3027 = vmatprep.subr.bf16.mxu0 0
      %3028 = vmatpush1.bf16.msra.mxu0 0
      %3029 = vmatprep.subr.bf16.mxu0 0
      %3030 = vmatpush1.bf16.msra.mxu0 0
      %3031 = vmatprep.subr.bf16.mxu0 0
      %3032 = vmatpush1.bf16.msra.mxu0 0
      %3033 = vmatprep.subr.bf16.mxu0 0
      %3034 = vmatpush1.bf16.msra.mxu0 0
      %3035 = vmatprep.subr.bf16.mxu0 0
      %3036 = vmatpush1.bf16.msra.mxu0 0
      %3037 = vmatprep.mubr.bf16.mxu0 0
      %3038 = vmatmul.mubr.bf16.gmra.mrb[0].mxu0 %v2919
      %v3039 = vpop.f32.mrb[0].mxu0
      %v3040 = vadd.f32 %v2956, %v3039
      %v3041 = vpop.f32.mrb[0].mxu0
      %v3042 = vpop.f32.mrb[0].mxu0
      %v3043 = vadd.f32 %v2956, %v3042
      %v3044 = vpop.f32.mrb[0].mxu0
      %3045 = vmatprep.mubr.bf16.mxu0 0
      %3046 = vmatmul.mubr.bf16.gmra.mrb[0].mxu0 %v2920
      %v3047 = vpop.f32.mrb[0].mxu0
      %v3048 = vadd.f32 %v2956, %v3047
      %v3049 = vpop.f32.mrb[0].mxu0
      %v3050 = vpop.f32.mrb[0].mxu0
      %v3051 = vadd.f32 %v2956, %v3050
      %v3052 = vpop.f32.mrb[0].mxu0
      %3053 = vmatprep.mubr.bf16.mxu0 0
      %3054 = vmatmul.mubr.bf16.gmra.mrb[0].mxu0 %v2921
      %v3055 = vpop.f32.mrb[0].mxu0
      %v3056 = vadd.f32 %v2956, %v3055
      %v3057 = vpop.f32.mrb[0].mxu0
      %v3058 = vpop.f32.mrb[0].mxu0
      %v3059 = vadd.f32 %v2956, %v3058
      %v3060 = vpop.f32.mrb[0].mxu0
      %3061 = vmatprep.mubr.bf16.mxu0 0
      %3062 = vmatmul.mubr.bf16.gmra.mrb[0].mxu0 %v2922
      %v3063 = vpop.f32.mrb[0].mxu0
      %v3064 = vadd.f32 %v2956, %v3063
      %v3065 = vpop.f32.mrb[0].mxu0
      %v3066 = vpop.f32.mrb[0].mxu0
      %v3067 = vadd.f32 %v2956, %v3066
      %v3068 = vpop.f32.mrb[0].mxu0
      %3069 = vmatprep.mubr.bf16.mxu0 0
      %3070 = vmatmul.mubr.bf16.gmra.mrb[0].mxu0 %v2923
      %v3071 = vpop.f32.mrb[0].mxu0
      %v3072 = vadd.f32 %v2956, %v3071
      %v3073 = vpop.f32.mrb[0].mxu0
      %v3074 = vpop.f32.mrb[0].mxu0
      %v3075 = vadd.f32 %v2956, %v3074
      %v3076 = vpop.f32.mrb[0].mxu0
      %3077 = vmatprep.mubr.bf16.mxu0 0
      %3078 = vmatmul.mubr.bf16.gmra.mrb[0].mxu0 %v2924
      %v3079 = vpop.f32.mrb[0].mxu0
      %v3080 = vadd.f32 %v2956, %v3079
      %v3081 = vpop.f32.mrb[0].mxu0
      %v3082 = vpop.f32.mrb[0].mxu0
      %v3083 = vadd.f32 %v2956, %v3082
      %v3084 = vpop.f32.mrb[0].mxu0
      %3085 = vmatprep.mubr.bf16.mxu0 0
      %3086 = vmatmul.mubr.bf16.gmra.mrb[0].mxu0 %v2925
      %v3087 = vpop.f32.mrb[0].mxu0
      %v3088 = vadd.f32 %v2956, %v3087
      %v3089 = vpop.f32.mrb[0].mxu0
      %v3090 = vpop.f32.mrb[0].mxu0
      %v3091 = vadd.f32 %v2956, %v3090
      %v3092 = vpop.f32.mrb[0].mxu0
      %3093 = vmatprep.mubr.bf16.mxu0 0
      %3094 = vmatmul.mubr.bf16.gmra.mrb[0].mxu0 %v2926
      %v3095 = vpop.f32.mrb[0].mxu0
      %v3096 = vadd.f32 %v2956, %v3095
      %v3097 = vpop.f32.mrb[0].mxu0
      %v3098 = vpop.f32.mrb[0].mxu0
      %v3099 = vadd.f32 %v2956, %v3098
      %v3100 = vpop.f32.mrb[0].mxu0
      %3101 = vmatprep.mubr.bf16.mxu0 0
      %3102 = vmatmul.mubr.bf16.gmra.mrb[0].mxu0 %v2927
      %v3103 = vpop.f32.mrb[0].mxu0
      %v3104 = vadd.f32 %v2956, %v3103
      %v3105 = vpop.f32.mrb[0].mxu0
      %v3106 = vpop.f32.mrb[0].mxu0
      %v3107 = vadd.f32 %v2956, %v3106
      %v3108 = vpop.f32.mrb[0].mxu0
      %3109 = vmatprep.mubr.bf16.mxu0 0
      %3110 = vmatmul.mubr.bf16.gmra.mrb[0].mxu0 %v2928
      %v3111 = vpop.f32.mrb[0].mxu0
      %v3112 = vadd.f32 %v2956, %v3111
      %v3113 = vpop.f32.mrb[0].mxu0
      %v3114 = vpop.f32.mrb[0].mxu0
      %v3115 = vadd.f32 %v2956, %v3114
      %v3116 = vpop.f32.mrb[0].mxu0
      %3117 = vmatprep.mubr.bf16.mxu0 0
      %3118 = vmatmul.mubr.bf16.gmra.mrb[0].mxu0 %v2929
      %v3119 = vpop.f32.mrb[0].mxu0
      %v3120 = vadd.f32 %v2956, %v3119
      %v3121 = vpop.f32.mrb[0].mxu0
      %v3122 = vpop.f32.mrb[0].mxu0
      %v3123 = vadd.f32 %v2956, %v3122
      %v3124 = vpop.f32.mrb[0].mxu0
      %3125 = vmatprep.mubr.bf16.mxu0 0
      %3126 = vmatmul.mubr.bf16.gmra.mrb[0].mxu0 %v2930
      %v3127 = vpop.f32.mrb[0].mxu0
      %v3128 = vadd.f32 %v2956, %v3127
      %v3129 = vpop.f32.mrb[0].mxu0
      %v3130 = vpop.f32.mrb[0].mxu0
      %v3131 = vadd.f32 %v2956, %v3130
      %v3132 = vpop.f32.mrb[0].mxu0
      %3133 = vmatprep.mubr.bf16.mxu0 0
      %3134 = vmatmul.mubr.bf16.gmra.mrb[0].mxu0 %v2931
      %v3135 = vpop.f32.mrb[0].mxu0
      %v3136 = vadd.f32 %v2956, %v3135
      %v3137 = vpop.f32.mrb[0].mxu0
      %v3138 = vpop.f32.mrb[0].mxu0
      %v3139 = vadd.f32 %v2956, %v3138
      %v3140 = vpop.f32.mrb[0].mxu0
      %3141 = vmatprep.mubr.bf16.mxu0 0
      %3142 = vmatmul.mubr.bf16.gmra.mrb[0].mxu0 %v2932
      %v3143 = vpop.f32.mrb[0].mxu0
      %v3144 = vadd.f32 %v2956, %v3143
      %v3145 = vpop.f32.mrb[0].mxu0
      %v3146 = vpop.f32.mrb[0].mxu0
      %v3147 = vadd.f32 %v2956, %v3146
      %v3148 = vpop.f32.mrb[0].mxu0
      %3149 = vmatprep.mubr.bf16.mxu0 0
      %3150 = vmatmul.mubr.bf16.gmra.mrb[0].mxu0 %v2933
      %v3151 = vpop.f32.mrb[0].mxu0
      %v3152 = vadd.f32 %v2956, %v3151
      %v3153 = vpop.f32.mrb[0].mxu0
      %v3154 = vpop.f32.mrb[0].mxu0
      %v3155 = vadd.f32 %v2956, %v3154
      %v3156 = vpop.f32.mrb[0].mxu0
      %3157 = vmatprep.mubr.bf16.mxu0 0
      %3158 = vmatmul.mubr.bf16.gmra.mrb[0].mxu0 %v2934
      %v3159 = vpop.f32.mrb[0].mxu0
      %v3160 = vadd.f32 %v2956, %v3159
      %v3161 = vpop.f32.mrb[0].mxu0
      %v3162 = vpop.f32.mrb[0].mxu0
      %v3163 = vadd.f32 %v2956, %v3162
      %v3164 = vpop.f32.mrb[0].mxu0
      %3165 = vdwg.mxu0
      %v3166 = vadd.f32 %v3040, %v2329
      %v3167 = vadd.f32 %v3043, %v2330
      %v3168 = vadd.f32 %v3048, %v2331
      %v3169 = vadd.f32 %v3051, %v2332
      %v3170 = vadd.f32 %v3056, %v2333
      %v3171 = vadd.f32 %v3059, %v2334
      %v3172 = vadd.f32 %v3064, %v2335
      %v3173 = vadd.f32 %v3067, %v2336
      %v3174 = vadd.f32 %v3072, %v2337
      %v3175 = vadd.f32 %v3075, %v2338
      %v3176 = vadd.f32 %v3080, %v2339
      %v3177 = vadd.f32 %v3083, %v2340
      %v3178 = vadd.f32 %v3088, %v2341
      %v3179 = vadd.f32 %v3091, %v2342
      %v3180 = vadd.f32 %v3096, %v2343
      %v3181 = vadd.f32 %v3099, %v2344
      %v3182 = vadd.f32 %v3104, %v2345
      %v3183 = vadd.f32 %v3107, %v2346
      %v3184 = vadd.f32 %v3112, %v2347
      %v3185 = vadd.f32 %v3115, %v2348
      %v3186 = vadd.f32 %v3120, %v2349
      %v3187 = vadd.f32 %v3123, %v2350
      %v3188 = vadd.f32 %v3128, %v2351
      %v3189 = vadd.f32 %v3131, %v2352
      %v3190 = vadd.f32 %v3136, %v2353
      %v3191 = vadd.f32 %v3139, %v2354
      %v3192 = vadd.f32 %v3144, %v2355
      %v3193 = vadd.f32 %v3147, %v2356
      %v3194 = vadd.f32 %v3152, %v2357
      %v3195 = vadd.f32 %v3155, %v2358
      %v3196 = vadd.f32 %v3160, %v2359
      %v3197 = vadd.f32 %v3163, %v2360
      %v3198 = vmax.f32 %v3166, 0.0
      %v3199 = vmax.f32 %v3167, 0.0
      %v3200 = vmax.f32 %v3168, 0.0
      %v3201 = vmax.f32 %v3169, 0.0
      %v3202 = vmax.f32 %v3170, 0.0
      %v3203 = vmax.f32 %v3171, 0.0
      %v3204 = vmax.f32 %v3172, 0.0
      %v3205 = vmax.f32 %v3173, 0.0
      %v3206 = vmax.f32 %v3174, 0.0
      %v3207 = vmax.f32 %v3175, 0.0
      %v3208 = vmax.f32 %v3176, 0.0
      %v3209 = vmax.f32 %v3177, 0.0
      %v3210 = vmax.f32 %v3178, 0.0
      %v3211 = vmax.f32 %v3179, 0.0
      %v3212 = vmax.f32 %v3180, 0.0
      %v3213 = vmax.f32 %v3181, 0.0
      %v3214 = vmax.f32 %v3182, 0.0
      %v3215 = vmax.f32 %v3183, 0.0
      %v3216 = vmax.f32 %v3184, 0.0
      %v3217 = vmax.f32 %v3185, 0.0
      %v3218 = vmax.f32 %v3186, 0.0
      %v3219 = vmax.f32 %v3187, 0.0
      %v3220 = vmax.f32 %v3188, 0.0
      %v3221 = vmax.f32 %v3189, 0.0
      %v3222 = vmax.f32 %v3190, 0.0
      %v3223 = vmax.f32 %v3191, 0.0
      %v3224 = vmax.f32 %v3192, 0.0
      %v3225 = vmax.f32 %v3193, 0.0
      %v3226 = vmax.f32 %v3194, 0.0
      %v3227 = vmax.f32 %v3195, 0.0
      %v3228 = vmax.f32 %v3196, 0.0
      %v3229 = vmax.f32 %v3197, 0.0
      %v3230 = vld [vmem:[%s8] sm:$0x1]
      %v3232 = vlaneseq
      %v3233 = vshrl.u32 %v3232, 7
      %v3234 = vsub.s32 0, %v3233
      %v3235 = vrot.slane %v3230, %v3234
      %v3237 = vmul.f32 %v3198, %v3235
      %v3238 = vmul.f32 %v3199, %v3235
      %v3239 = vmul.f32 %v3200, %v3235
      %v3240 = vmul.f32 %v3201, %v3235
      %v3241 = vmul.f32 %v3202, %v3235
      %v3242 = vmul.f32 %v3203, %v3235
      %v3243 = vmul.f32 %v3204, %v3235
      %v3244 = vmul.f32 %v3205, %v3235
      %v3245 = vmul.f32 %v3206, %v3235
      %v3246 = vmul.f32 %v3207, %v3235
      %v3247 = vmul.f32 %v3208, %v3235
      %v3248 = vmul.f32 %v3209, %v3235
      %v3249 = vmul.f32 %v3210, %v3235
      %v3250 = vmul.f32 %v3211, %v3235
      %v3251 = vmul.f32 %v3212, %v3235
      %v3252 = vmul.f32 %v3213, %v3235
      %v3253 = vmul.f32 %v3214, %v3235
      %v3254 = vmul.f32 %v3215, %v3235
      %v3255 = vmul.f32 %v3216, %v3235
      %v3256 = vmul.f32 %v3217, %v3235
      %v3257 = vmul.f32 %v3218, %v3235
      %v3258 = vmul.f32 %v3219, %v3235
      %v3259 = vmul.f32 %v3220, %v3235
      %v3260 = vmul.f32 %v3221, %v3235
      %v3261 = vmul.f32 %v3222, %v3235
      %v3262 = vmul.f32 %v3223, %v3235
      %v3263 = vmul.f32 %v3224, %v3235
      %v3264 = vmul.f32 %v3225, %v3235
      %v3265 = vmul.f32 %v3226, %v3235
      %v3266 = vmul.f32 %v3227, %v3235
      %v3267 = vmul.f32 %v3228, %v3235
      %v3268 = vmul.f32 %v3229, %v3235
      %3269 = vadd.xlane.f32.xlu0 %v3237
      %v3270 = vpop.xlane.xlu0 %3269
      %3271 = vadd.xlane.f32.xlu0 %v3238
      %v3272 = vpop.xlane.xlu0 %3271
      %3273 = vadd.xlane.f32.xlu0 %v3239
      %v3274 = vpop.xlane.xlu0 %3273
      %3275 = vadd.xlane.f32.xlu0 %v3240
      %v3276 = vpop.xlane.xlu0 %3275
      %3277 = vadd.xlane.f32.xlu0 %v3241
      %v3278 = vpop.xlane.xlu0 %3277
      %3279 = vadd.xlane.f32.xlu0 %v3242
      %v3280 = vpop.xlane.xlu0 %3279
      %3281 = vadd.xlane.f32.xlu0 %v3243
      %v3282 = vpop.xlane.xlu0 %3281
      %3283 = vadd.xlane.f32.xlu0 %v3244
      %v3284 = vpop.xlane.xlu0 %3283
      %3285 = vadd.xlane.f32.xlu0 %v3245
      %v3286 = vpop.xlane.xlu0 %3285
      %3287 = vadd.xlane.f32.xlu0 %v3246
      %v3288 = vpop.xlane.xlu0 %3287
      %3289 = vadd.xlane.f32.xlu0 %v3247
      %v3290 = vpop.xlane.xlu0 %3289
      %3291 = vadd.xlane.f32.xlu0 %v3248
      %v3292 = vpop.xlane.xlu0 %3291
      %3293 = vadd.xlane.f32.xlu0 %v3249
      %v3294 = vpop.xlane.xlu0 %3293
      %3295 = vadd.xlane.f32.xlu0 %v3250
      %v3296 = vpop.xlane.xlu0 %3295
      %3297 = vadd.xlane.f32.xlu0 %v3251
      %v3298 = vpop.xlane.xlu0 %3297
      %3299 = vadd.xlane.f32.xlu0 %v3252
      %v3300 = vpop.xlane.xlu0 %3299
      %3301 = vadd.xlane.f32.xlu0 %v3253
      %v3302 = vpop.xlane.xlu0 %3301
      %3303 = vadd.xlane.f32.xlu0 %v3254
      %v3304 = vpop.xlane.xlu0 %3303
      %3305 = vadd.xlane.f32.xlu0 %v3255
      %v3306 = vpop.xlane.xlu0 %3305
      %3307 = vadd.xlane.f32.xlu0 %v3256
      %v3308 = vpop.xlane.xlu0 %3307
      %3309 = vadd.xlane.f32.xlu0 %v3257
      %v3310 = vpop.xlane.xlu0 %3309
      %3311 = vadd.xlane.f32.xlu0 %v3258
      %v3312 = vpop.xlane.xlu0 %3311
      %3313 = vadd.xlane.f32.xlu0 %v3259
      %v3314 = vpop.xlane.xlu0 %3313
      %3315 = vadd.xlane.f32.xlu0 %v3260
      %v3316 = vpop.xlane.xlu0 %3315
      %3317 = vadd.xlane.f32.xlu0 %v3261
      %v3318 = vpop.xlane.xlu0 %3317
      %3319 = vadd.xlane.f32.xlu0 %v3262
      %v3320 = vpop.xlane.xlu0 %3319
      %3321 = vadd.xlane.f32.xlu0 %v3263
      %v3322 = vpop.xlane.xlu0 %3321
      %3323 = vadd.xlane.f32.xlu0 %v3264
      %v3324 = vpop.xlane.xlu0 %3323
      %3325 = vadd.xlane.f32.xlu0 %v3265
      %v3326 = vpop.xlane.xlu0 %3325
      %3327 = vadd.xlane.f32.xlu0 %v3266
      %v3328 = vpop.xlane.xlu0 %3327
      %3329 = vadd.xlane.f32.xlu0 %v3267
      %v3330 = vpop.xlane.xlu0 %3329
      %3331 = vadd.xlane.f32.xlu0 %v3268
      %v3332 = vpop.xlane.xlu0 %3331
      %v3333 = vld [vmem:[#allocation2] sm:$0x1]
      %v3335 = vlaneseq
      %v3336 = vshrl.u32 %v3335, 7
      %v3337 = vsub.s32 0, %v3336
      %v3338 = vrot.slane %v3333, %v3337
      %v3340 = vadd.f32 %v3270, %v3338
      %v3341 = vadd.f32 %v3272, %v3338
      %v3342 = vadd.f32 %v3274, %v3338
      %v3343 = vadd.f32 %v3276, %v3338
      %v3344 = vadd.f32 %v3278, %v3338
      %v3345 = vadd.f32 %v3280, %v3338
      %v3346 = vadd.f32 %v3282, %v3338
      %v3347 = vadd.f32 %v3284, %v3338
      %v3348 = vadd.f32 %v3286, %v3338
      %v3349 = vadd.f32 %v3288, %v3338
      %v3350 = vadd.f32 %v3290, %v3338
      %v3351 = vadd.f32 %v3292, %v3338
      %v3352 = vadd.f32 %v3294, %v3338
      %v3353 = vadd.f32 %v3296, %v3338
      %v3354 = vadd.f32 %v3298, %v3338
      %v3355 = vadd.f32 %v3300, %v3338
      %v3356 = vadd.f32 %v3302, %v3338
      %v3357 = vadd.f32 %v3304, %v3338
      %v3358 = vadd.f32 %v3306, %v3338
      %v3359 = vadd.f32 %v3308, %v3338
      %v3360 = vadd.f32 %v3310, %v3338
      %v3361 = vadd.f32 %v3312, %v3338
      %v3362 = vadd.f32 %v3314, %v3338
      %v3363 = vadd.f32 %v3316, %v3338
      %v3364 = vadd.f32 %v3318, %v3338
      %v3365 = vadd.f32 %v3320, %v3338
      %v3366 = vadd.f32 %v3322, %v3338
      %v3367 = vadd.f32 %v3324, %v3338
      %v3368 = vadd.f32 %v3326, %v3338
      %v3369 = vadd.f32 %v3328, %v3338
      %v3370 = vadd.f32 %v3330, %v3338
      %v3371 = vadd.f32 %v3332, %v3338
      %vm3372 = vcmask 7168
      %3373 = vst.msk [vmem:[%s363] sm:$0xff] %vm3372, %v3340
      %3374 = vst.msk [vmem:[%s363 + $0x8] sm:$0xff] %vm3372, %v3341
      %3375 = vst.msk [vmem:[%s363 + $0x10] sm:$0xff] %vm3372, %v3342
      %3376 = vst.msk [vmem:[%s363 + $0x18] sm:$0xff] %vm3372, %v3343
      %3377 = vst.msk [vmem:[%s363 + $0x20] sm:$0xff] %vm3372, %v3344
      %3378 = vst.msk [vmem:[%s363 + $0x28] sm:$0xff] %vm3372, %v3345
      %3379 = vst.msk [vmem:[%s363 + $0x30] sm:$0xff] %vm3372, %v3346
      %3380 = vst.msk [vmem:[%s363 + $0x38] sm:$0xff] %vm3372, %v3347
      %3381 = vst.msk [vmem:[%s363 + $0x40] sm:$0xff] %vm3372, %v3348
      %3382 = vst.msk [vmem:[%s363 + $0x48] sm:$0xff] %vm3372, %v3349
      %3383 = vst.msk [vmem:[%s363 + $0x50] sm:$0xff] %vm3372, %v3350
      %3384 = vst.msk [vmem:[%s363 + $0x58] sm:$0xff] %vm3372, %v3351
      %3385 = vst.msk [vmem:[%s363 + $0x60] sm:$0xff] %vm3372, %v3352
      %3386 = vst.msk [vmem:[%s363 + $0x68] sm:$0xff] %vm3372, %v3353
      %3387 = vst.msk [vmem:[%s363 + $0x70] sm:$0xff] %vm3372, %v3354
      %3388 = vst.msk [vmem:[%s363 + $0x78] sm:$0xff] %vm3372, %v3355
      %3389 = vst.msk [vmem:[%s363 + $0x80] sm:$0xff] %vm3372, %v3356
      %3390 = vst.msk [vmem:[%s363 + $0x88] sm:$0xff] %vm3372, %v3357
      %3391 = vst.msk [vmem:[%s363 + $0x90] sm:$0xff] %vm3372, %v3358
      %3392 = vst.msk [vmem:[%s363 + $0x98] sm:$0xff] %vm3372, %v3359
      %3393 = vst.msk [vmem:[%s363 + $0xa0] sm:$0xff] %vm3372, %v3360
      %3394 = vst.msk [vmem:[%s363 + $0xa8] sm:$0xff] %vm3372, %v3361
      %3395 = vst.msk [vmem:[%s363 + $0xb0] sm:$0xff] %vm3372, %v3362
      %3396 = vst.msk [vmem:[%s363 + $0xb8] sm:$0xff] %vm3372, %v3363
      %3397 = vst.msk [vmem:[%s363 + $0xc0] sm:$0xff] %vm3372, %v3364
      %3398 = vst.msk [vmem:[%s363 + $0xc8] sm:$0xff] %vm3372, %v3365
      %3399 = vst.msk [vmem:[%s363 + $0xd0] sm:$0xff] %vm3372, %v3366
      %3400 = vst.msk [vmem:[%s363 + $0xd8] sm:$0xff] %vm3372, %v3367
      %3401 = vst.msk [vmem:[%s363 + $0xe0] sm:$0xff] %vm3372, %v3368
      %3402 = vst.msk [vmem:[%s363 + $0xe8] sm:$0xff] %vm3372, %v3369
      %3403 = vst.msk [vmem:[%s363 + $0xf0] sm:$0xff] %vm3372, %v3370
      %3404 = vst.msk [vmem:[%s363 + $0xf8] sm:$0xff] %vm3372, %v3371
      %s3405 = smul.u32 32, %s23
      %p3406 = scmp.lt.s32.totalorder %s3405, 127
      %s3407 = scalar_select %p3406, %s3405, 127
      %s3408 = smul.addr %s3407, 8
      %s3409 = scalar_lea.vmem %s10, %s3408
      // Predicated region
      $region61: #{tpu_custom_call.1} parent=59 // pred_check
        %p3410 = pneg %p256
      $region62: #{tpu_custom_call.1} parent=59 // pred_check_branch
        %3412 = sbr.rel (%p3410) target = $region64
      $region63: #{tpu_custom_call.1} parent=59 // pred_region
        %s3413 = smul.u32 32, %s23
      $region64: #{tpu_custom_call.1} parent=59 // pred_fallthru
        _
    $region60: #{tpu_custom_call.1} parent=5 // pred_fallthru
      _
    %p3414 = scmp.le.s32.totalorder 2, %s18
    // Predicated region
    $region65: #{tpu_custom_call.1} parent=5 // pred_check
      %p3415 = pneg %p3414
    $region66: #{tpu_custom_call.1} parent=5 // pred_check_branch
      %3417 = sbr.rel (%p3415) target = $region68
    $region67: #{tpu_custom_call.1} parent=5 // pred_region
      %s3418 = ssub.s32 %s18, 2
      // Predicated region
      $region69: #{tpu_custom_call.1} parent=67 // pred_check
        %p3419 = pneg %p262
      $region70: #{tpu_custom_call.1} parent=67 // pred_check_branch
        %3421 = sbr.rel (%p3419) target = $region72
      $region71: #{tpu_custom_call.1} parent=67 // pred_region
        %s3422 = smul.u32 32, %s24
        %p3423 = scmp.lt.s32.totalorder %s3422, 127
        %s3424 = scalar_select %p3423, %s3422, 127
        %s3425 = smul.addr %s3424, 8
        %s3426 = scalar_lea.vmem %s10, %s3425
      $region72: #{tpu_custom_call.1} parent=67 // pred_fallthru
        _
    $region68: #{tpu_custom_call.1} parent=5 // pred_fallthru
      _
  $region6: #{tpu_custom_call.1} parent=0 // loop_footer
    %s22 = sadd.s32 1, %s18
  $region7: #{tpu_custom_call.1} parent=0 // loop_footer_branch
    %17 = sbr.rel target = $region3
  $region8: #{tpu_custom_call.1} parent=0 // loop_exit
    _

</llo_original>
